<compile_context>
chip_gen: v7x
topology: tpu7x:2x2x1
jax: 0.10.0
libtpu: 0.0.40
codegen_flags: <defaults>
</compile_context>

<pallas_src>
from functools import partial

import numpy as np

import jax
import jax.numpy as jnp
from jax.experimental import pallas as pl
from jax.experimental.pallas import tpu as pltpu

FILTER_NUM = 100
KERNEL_LST = (3, 4, 5)
LANE = 128


def _round_up(n, m):
  return ((n + m - 1) // m) * m


# -----------------------------------------------------------------------------
# Fused kernel: one grid step == one TextCNN sub-model.
# -----------------------------------------------------------------------------
def _fused_textcnn_kernel(x_ref, emb_ref, w3_ref, w4_ref, w5_ref,
                          b_ref, fcw_ref, fcb_ref, out_ref):
  ids = x_ref[0]                                   # (B, S) int32
  b_sz, seq = ids.shape
  vp = emb_ref.shape[1]                            # padded vocab  (mult of 128)

  # Embedding lookup as a one-hot matmul on the MXU (gather-free).
  pos = jax.lax.broadcasted_iota(jnp.int32, (b_sz, seq, vp), 2)
  onehot = (pos == ids[:, :, None]).astype(jnp.float32)             # (B, S, VP)
  emb = jnp.einsum('bsv,ve->bse', onehot, emb_ref[0],
                   preferred_element_type=jnp.float32)              # (B, S, EP)

  bias = b_ref[0]                                   # (3, FP)

  feats = []
  for idx, (k, w_ref) in enumerate(((3, w3_ref), (4, w4_ref), (5, w5_ref))):
    t = seq - k + 1
    # im2col slab: lane-aligned concat because EP % 128 == 0.
    win = jnp.concatenate([emb[:, j:j + t, :] for j in range(k)], axis=-1)
    conv = jnp.einsum('btk,kf->btf', win, w_ref[0],
                      preferred_element_type=jnp.float32)           # (B, T, FP)
    conv = jnp.maximum(conv + bias[idx][None, None, :], 0.0)        # + bias, ReLU
    feats.append(jnp.max(conv, axis=1))                             # MaxPool -> (B, FP)

  feat = jnp.concatenate(feats, axis=-1)            # (B, 3*FP) lane-aligned concat
  # TODO(synk): nn.Dropout is identity in eval mode; training-mode dropout RNG not implemented.
  # Single fused FC matmul (K = 3*FP = 384) into a lane-dense (B, NLP) output.
  out_ref[0] = jnp.dot(feat, fcw_ref[0],
                       preferred_element_type=jnp.float32) + fcb_ref[0]


def _per_model_spec(arr):
  """BlockSpec selecting model `m` along the leading (stacked-model) axis."""
  ndim = arr.ndim

  def idx(m):
    return (m,) + (0,) * (ndim - 1)

  return pl.BlockSpec((1,) + tuple(arr.shape[1:]), idx)


@partial(jax.jit, static_argnames=('num_labels',))
def ensemble_forward(x1, x2, x3, packed, *, num_labels):
  x_all = jnp.stack([x1, x2, x3], axis=0).astype(jnp.int32)         # (3, B, S)
  b = x1.shape[0]
  nlp = packed['fcb'].shape[-1]                                     # padded labels

  args = (x_all, packed['emb'], packed['w3'], packed['w4'], packed['w5'],
          packed['b'], packed['fcw'], packed['fcb'])

  logits_padded = pl.pallas_call(
      _fused_textcnn_kernel,
      out_shape=jax.ShapeDtypeStruct((3, b, nlp), jnp.float32),
      grid_spec=pltpu.PrefetchScalarGridSpec(
          num_scalar_prefetch=0,
          grid=(3,),                               # one step per sub-model
          in_specs=[_per_model_spec(a) for a in args],
          out_specs=pl.BlockSpec((1, b, nlp), lambda m: (m, 0, 0)),
      ),
      compiler_params=pltpu.CompilerParams(
          dimension_semantics=("parallel",)),
  )(*args)

  logits = logits_padded[:, :, :num_labels]                         # drop lane padding
  out1, out2, out3 = logits[0], logits[1], logits[2]
  # softmax over the 3-element ensemble weight + weighted sum: parameter glue.
  w_sm = jax.nn.softmax(packed['weight'], axis=-1)                  # (3,)
  pred_final = jnp.einsum('m,mbn->bn', w_sm, logits)
  return out1, out2, out3, pred_final


# -----------------------------------------------------------------------------
# Parameter init (natural / PyTorch-equivalent layout) + packing for the kernel.
# -----------------------------------------------------------------------------
def init_textcnn_params(key, vocab_size, emb_dim, num_labels):
  keys = jax.random.split(key, 9)
  p = {'emb': 0.1 * jax.random.normal(keys[0], (vocab_size, emb_dim), jnp.float32)}
  for i, k in enumerate(KERNEL_LST):
    # PyTorch Conv2d weight (F, 1, k, E) pre-transposed to (k, E, F)
    p[f'w{k}'] = 0.1 * jax.random.normal(keys[1 + 2 * i],
                                         (k, emb_dim, FILTER_NUM), jnp.float32)
    p[f'b{k}'] = 0.01 * jax.random.normal(keys[2 + 2 * i],
                                          (FILTER_NUM,), jnp.float32)
  p['fcw'] = 0.1 * jax.random.normal(
      keys[7], (FILTER_NUM * len(KERNEL_LST), num_labels), jnp.float32)
  p['fcb'] = 0.01 * jax.random.normal(keys[8], (num_labels,), jnp.float32)
  return p


def pack_ensemble_params(params, num_labels):
  """Zero-pad vocab/emb/filters/labels to 128 and stack the 3 models on axis 0."""
  models = [params['m1'], params['m2'], params['m3']]
  vp = _round_up(max(m['emb'].shape[0] for m in models), LANE)
  ep = _round_up(max(m['emb'].shape[1] for m in models), LANE)
  fp = _round_up(FILTER_NUM, LANE)
  nlp = _round_up(num_labels, LANE)

  emb_all, b_all, fcw_all, fcb_all = [], [], [], []
  w_all = {k: [] for k in KERNEL_LST}
  for m in models:
    v, e = m['emb'].shape
    emb_all.append(jnp.zeros((vp, ep), jnp.float32).at[:v, :e].set(m['emb']))
    bias_rows = []
    fcw_pad = jnp.zeros((len(KERNEL_LST) * fp, nlp), jnp.float32)
    for i, k in enumerate(KERNEL_LST):
      w_pad = jnp.zeros((k, ep, fp), jnp.float32)
      w_pad = w_pad.at[:, :e, :FILTER_NUM].set(m[f'w{k}'])
      w_all[k].append(w_pad.reshape(k * ep, fp))                    # im2col layout
      bias_rows.append(jnp.zeros((fp,), jnp.float32).at[:FILTER_NUM].set(m[f'b{k}']))
      blk = m['fcw'][i * FILTER_NUM:(i + 1) * FILTER_NUM]           # (F, NL)
      fcw_pad = fcw_pad.at[i * fp:i * fp + FILTER_NUM, :num_labels].set(blk)
    b_all.append(jnp.stack(bias_rows))                              # (3, FP)
    fcw_all.append(fcw_pad)                                         # (3*FP, NLP)
    fcb_all.append(jnp.zeros((1, nlp), jnp.float32).at[0, :num_labels].set(m['fcb']))

  return {
      'emb': jnp.stack(emb_all),          # (3, VP, EP)
      'w3': jnp.stack(w_all[3]),          # (3, 3*EP, FP)
      'w4': jnp.stack(w_all[4]),          # (3, 4*EP, FP)
      'w5': jnp.stack(w_all[5]),          # (3, 5*EP, FP)
      'b': jnp.stack(b_all),              # (3, 3, FP)
      'fcw': jnp.stack(fcw_all),          # (3, 3*FP, NLP)
      'fcb': jnp.stack(fcb_all),          # (3, 1, NLP)
      'weight': params['weight'],         # (3,)
  }


# -----------------------------------------------------------------------------
# Pure-JAX reference (mirrors the PyTorch forward) for a correctness check.
# -----------------------------------------------------------------------------
def _textcnn_reference(x_ids, p, *, seq_len):
  emb = jnp.take(p['emb'], x_ids, axis=0).astype(jnp.float32)       # (B, S, E)
  feats = []
  for k in KERNEL_LST:
    t = seq_len - k + 1
    acc = None
    for j in range(k):
      part = jnp.einsum('bte,ef->btf', emb[:, j:j + t, :], p[f'w{k}'][j],
                        precision=jax.lax.Precision.HIGHEST)
      acc = part if acc is None else acc + part
    acc = jnp.maximum(acc + p[f'b{k}'][None, None, :], 0.0)
    feats.append(jnp.max(acc, axis=1))
  feat = jnp.concatenate(feats, axis=1)
  return jnp.dot(feat, p['fcw'], precision=jax.lax.Precision.HIGHEST) + p['fcb'][None, :]


if __name__ == '__main__':
  B = 2
  SENTENCE_LIMIT_SIZE = 16
  NUM_LABELS = 4
  vocab_sizes = (50, 60, 70)
  emb_dims = (16, 24, 32)

  root = jax.random.PRNGKey(0)
  k1, k2, k3, kx1, kx2, kx3 = jax.random.split(root, 6)

  params = {
      'm1': init_textcnn_params(k1, vocab_sizes[0], emb_dims[0], NUM_LABELS),
      'm2': init_textcnn_params(k2, vocab_sizes[1], emb_dims[1], NUM_LABELS),
      'm3': init_textcnn_params(k3, vocab_sizes[2], emb_dims[2], NUM_LABELS),
      'weight': jnp.array([1.0 / 3, 1.0 / 3, 1.0 / 3], jnp.float32),
  }
  packed = pack_ensemble_params(params, NUM_LABELS)

  x1 = jax.random.randint(kx1, (B, SENTENCE_LIMIT_SIZE), 0, vocab_sizes[0], jnp.int32)
  x2 = jax.random.randint(kx2, (B, SENTENCE_LIMIT_SIZE), 0, vocab_sizes[1], jnp.int32)
  x3 = jax.random.randint(kx3, (B, SENTENCE_LIMIT_SIZE), 0, vocab_sizes[2], jnp.int32)

  out1, out2, out3, pred_final = ensemble_forward(x1, x2, x3, packed,
                                                  num_labels=NUM_LABELS)
  jax.block_until_ready((out1, out2, out3, pred_final))

  assert out1.shape == (B, NUM_LABELS)
  assert out2.shape == (B, NUM_LABELS)
  assert out3.shape == (B, NUM_LABELS)
  assert pred_final.shape == (B, NUM_LABELS)

  # Numerical check against the pure-JAX reference of the PyTorch forward.
  ref1 = _textcnn_reference(x1, params['m1'], seq_len=SENTENCE_LIMIT_SIZE)
  ref2 = _textcnn_reference(x2, params['m2'], seq_len=SENTENCE_LIMIT_SIZE)
  ref3 = _textcnn_reference(x3, params['m3'], seq_len=SENTENCE_LIMIT_SIZE)
  w_sm = jax.nn.softmax(params['weight'], axis=-1)
  ref_pred = w_sm[0] * ref1 + w_sm[1] * ref2 + w_sm[2] * ref3
  np.testing.assert_allclose(np.asarray(out1), np.asarray(ref1), rtol=2e-2, atol=2e-2)
  np.testing.assert_allclose(np.asarray(out2), np.asarray(ref2), rtol=2e-2, atol=2e-2)
  np.testing.assert_allclose(np.asarray(out3), np.asarray(ref3), rtol=2e-2, atol=2e-2)
  np.testing.assert_allclose(np.asarray(pred_final), np.asarray(ref_pred), rtol=2e-2, atol=2e-2)

  print("KERNEL_OK")
</pallas_src>

<mosaic_0001>
module attributes {stable_mosaic.version = 11 : i64} {
  func.func @_fused_textcnn_kernel(%arg0: i32, %arg1: memref<1x2x16xi32, #tpu.memory_space<vmem>>, %arg2: memref<1x128x128xf32, #tpu.memory_space<vmem>>, %arg3: memref<1x384x128xf32, #tpu.memory_space<vmem>>, %arg4: memref<1x512x128xf32, #tpu.memory_space<vmem>>, %arg5: memref<1x640x128xf32, #tpu.memory_space<vmem>>, %arg6: memref<1x3x128xf32, #tpu.memory_space<vmem>>, %arg7: memref<1x384x128xf32, #tpu.memory_space<vmem>>, %arg8: memref<1x1x128xf32, #tpu.memory_space<vmem>>, %arg9: memref<1x2x128xf32, #tpu.memory_space<vmem>>) attributes {dimension_semantics = [#tpu.dimension_semantics<parallel>], iteration_bounds = array<i64: 3>, scalar_prefetch = 0 : i64, scratch_operands = 0 : i64, tpu.core_type = #tpu.core_type<tc>, window_params = [{transform_indices = @transform_0, window_bounds = array<i64: 1, 2, 16>}, {transform_indices = @transform_1, window_bounds = array<i64: 1, 128, 128>}, {transform_indices = @transform_2, window_bounds = array<i64: 1, 384, 128>}, {transform_indices = @transform_3, window_bounds = array<i64: 1, 512, 128>}, {transform_indices = @transform_4, window_bounds = array<i64: 1, 640, 128>}, {transform_indices = @transform_5, window_bounds = array<i64: 1, 3, 128>}, {transform_indices = @transform_6, window_bounds = array<i64: 1, 384, 128>}, {transform_indices = @transform_7, window_bounds = array<i64: 1, 1, 128>}, {transform_indices = @transform_8, window_bounds = array<i64: 1, 2, 128>}]} {
    %c0 = arith.constant 0 : index
    %c0_0 = arith.constant 0 : index
    %c0_1 = arith.constant 0 : index
    %0 = vector.load %arg1[%c0, %c0_0, %c0_1] : memref<1x2x16xi32, #tpu.memory_space<vmem>>, vector<1x2x16xi32>
    %1 = vector.shape_cast %0 : vector<1x2x16xi32> to vector<2x16xi32>
    %2 = tpu.iota {dimensions = array<i32: 2>} : vector<2x16x128xi32>
    %3 = vector.shape_cast %1 : vector<2x16xi32> to vector<2x16x1xi32>
    %4 = vector.broadcast %3 : vector<2x16x1xi32> to vector<2x16x128xi32>
    %5 = arith.cmpi eq, %2, %4 : vector<2x16x128xi32>
    %6 = arith.extui %5 : vector<2x16x128xi1> to vector<2x16x128xi32>
    %7 = arith.sitofp %6 : vector<2x16x128xi32> to vector<2x16x128xf32>
    %c0_2 = arith.constant 0 : index
    %c0_3 = arith.constant 0 : index
    %c0_4 = arith.constant 0 : index
    %8 = vector.load %arg2[%c0_2, %c0_3, %c0_4] : memref<1x128x128xf32, #tpu.memory_space<vmem>>, vector<1x128x128xf32>
    %9 = vector.shape_cast %8 : vector<1x128x128xf32> to vector<128x128xf32>
    "tpu.trace_start"() <{level = 10 : i32, message = "bsv,ve->bse"}> : () -> ()
    %cst = arith.constant dense<0.000000e+00> : vector<2x16x128xf32>
    %10 = tpu.matmul %7, %9, %cst {dimension_numbers = #tpu.dot_dimension_numbers<[2], [0], [0, 1], [1], [0, 0, 0, 1, 1, 1], [], []>} : vector<2x16x128xf32>, vector<128x128xf32>, vector<2x16x128xf32> -> vector<2x16x128xf32>
    "tpu.trace_stop"() : () -> ()
    %c0_5 = arith.constant 0 : index
    %c0_6 = arith.constant 0 : index
    %c0_7 = arith.constant 0 : index
    %11 = vector.load %arg6[%c0_5, %c0_6, %c0_7] : memref<1x3x128xf32, #tpu.memory_space<vmem>>, vector<1x3x128xf32>
    %12 = vector.shape_cast %11 : vector<1x3x128xf32> to vector<3x128xf32>
    %13 = vector.extract_strided_slice %10 {offsets = [0, 0, 0], sizes = [2, 14, 128], strides = [1, 1, 1]} : vector<2x16x128xf32> to vector<2x14x128xf32>
    %14 = vector.extract_strided_slice %10 {offsets = [0, 1, 0], sizes = [2, 14, 128], strides = [1, 1, 1]} : vector<2x16x128xf32> to vector<2x14x128xf32>
    %15 = vector.extract_strided_slice %10 {offsets = [0, 2, 0], sizes = [2, 14, 128], strides = [1, 1, 1]} : vector<2x16x128xf32> to vector<2x14x128xf32>
    %16 = tpu.concatenate %13, %14, %15 in 2 : vector<2x14x128xf32>, vector<2x14x128xf32>, vector<2x14x128xf32> -> vector<2x14x384xf32>
    %c0_8 = arith.constant 0 : index
    %c0_9 = arith.constant 0 : index
    %c0_10 = arith.constant 0 : index
    %17 = vector.load %arg3[%c0_8, %c0_9, %c0_10] : memref<1x384x128xf32, #tpu.memory_space<vmem>>, vector<1x384x128xf32>
    %18 = vector.shape_cast %17 : vector<1x384x128xf32> to vector<384x128xf32>
    "tpu.trace_start"() <{level = 10 : i32, message = "btk,kf->btf"}> : () -> ()
    %cst_11 = arith.constant dense<0.000000e+00> : vector<2x14x128xf32>
    %19 = tpu.matmul %16, %18, %cst_11 {dimension_numbers = #tpu.dot_dimension_numbers<[2], [0], [0, 1], [1], [0, 0, 0, 1, 1, 1], [], []>} : vector<2x14x384xf32>, vector<384x128xf32>, vector<2x14x128xf32> -> vector<2x14x128xf32>
    "tpu.trace_stop"() : () -> ()
    %20 = vector.extract_strided_slice %12 {offsets = [0, 0], sizes = [1, 128], strides = [1, 1]} : vector<3x128xf32> to vector<1x128xf32>
    %21 = vector.shape_cast %20 : vector<1x128xf32> to vector<128xf32>
    %22 = vector.shape_cast %21 : vector<128xf32> to vector<1x1x128xf32>
    %23 = vector.broadcast %22 : vector<1x1x128xf32> to vector<2x14x128xf32>
    %24 = arith.addf %19, %23 : vector<2x14x128xf32>
    %cst_12 = arith.constant 0.000000e+00 : f32
    %25 = vector.broadcast %cst_12 : f32 to vector<2x14x128xf32>
    %26 = arith.maximumf %24, %25 : vector<2x14x128xf32>
    %cst_13 = arith.constant dense<0xFF800000> : vector<2x128xf32>
    %27 = vector.multi_reduction <maximumf>, %26, %cst_13 [1] : vector<2x14x128xf32> to vector<2x128xf32>
    %28 = vector.extract_strided_slice %10 {offsets = [0, 0, 0], sizes = [2, 13, 128], strides = [1, 1, 1]} : vector<2x16x128xf32> to vector<2x13x128xf32>
    %29 = vector.extract_strided_slice %10 {offsets = [0, 1, 0], sizes = [2, 13, 128], strides = [1, 1, 1]} : vector<2x16x128xf32> to vector<2x13x128xf32>
    %30 = vector.extract_strided_slice %10 {offsets = [0, 2, 0], sizes = [2, 13, 128], strides = [1, 1, 1]} : vector<2x16x128xf32> to vector<2x13x128xf32>
    %31 = vector.extract_strided_slice %10 {offsets = [0, 3, 0], sizes = [2, 13, 128], strides = [1, 1, 1]} : vector<2x16x128xf32> to vector<2x13x128xf32>
    %32 = tpu.concatenate %28, %29, %30, %31 in 2 : vector<2x13x128xf32>, vector<2x13x128xf32>, vector<2x13x128xf32>, vector<2x13x128xf32> -> vector<2x13x512xf32>
    %c0_14 = arith.constant 0 : index
    %c0_15 = arith.constant 0 : index
    %c0_16 = arith.constant 0 : index
    %33 = vector.load %arg4[%c0_14, %c0_15, %c0_16] : memref<1x512x128xf32, #tpu.memory_space<vmem>>, vector<1x512x128xf32>
    %34 = vector.shape_cast %33 : vector<1x512x128xf32> to vector<512x128xf32>
    "tpu.trace_start"() <{level = 10 : i32, message = "btk,kf->btf"}> : () -> ()
    %cst_17 = arith.constant dense<0.000000e+00> : vector<2x13x128xf32>
    %35 = tpu.matmul %32, %34, %cst_17 {dimension_numbers = #tpu.dot_dimension_numbers<[2], [0], [0, 1], [1], [0, 0, 0, 1, 1, 1], [], []>} : vector<2x13x512xf32>, vector<512x128xf32>, vector<2x13x128xf32> -> vector<2x13x128xf32>
    "tpu.trace_stop"() : () -> ()
    %36 = vector.extract_strided_slice %12 {offsets = [1, 0], sizes = [1, 128], strides = [1, 1]} : vector<3x128xf32> to vector<1x128xf32>
    %37 = vector.shape_cast %36 : vector<1x128xf32> to vector<128xf32>
    %38 = vector.shape_cast %37 : vector<128xf32> to vector<1x1x128xf32>
    %39 = vector.broadcast %38 : vector<1x1x128xf32> to vector<2x13x128xf32>
    %40 = arith.addf %35, %39 : vector<2x13x128xf32>
    %cst_18 = arith.constant 0.000000e+00 : f32
    %41 = vector.broadcast %cst_18 : f32 to vector<2x13x128xf32>
    %42 = arith.maximumf %40, %41 : vector<2x13x128xf32>
    %cst_19 = arith.constant dense<0xFF800000> : vector<2x128xf32>
    %43 = vector.multi_reduction <maximumf>, %42, %cst_19 [1] : vector<2x13x128xf32> to vector<2x128xf32>
    %44 = vector.extract_strided_slice %10 {offsets = [0, 0, 0], sizes = [2, 12, 128], strides = [1, 1, 1]} : vector<2x16x128xf32> to vector<2x12x128xf32>
    %45 = vector.extract_strided_slice %10 {offsets = [0, 1, 0], sizes = [2, 12, 128], strides = [1, 1, 1]} : vector<2x16x128xf32> to vector<2x12x128xf32>
    %46 = vector.extract_strided_slice %10 {offsets = [0, 2, 0], sizes = [2, 12, 128], strides = [1, 1, 1]} : vector<2x16x128xf32> to vector<2x12x128xf32>
    %47 = vector.extract_strided_slice %10 {offsets = [0, 3, 0], sizes = [2, 12, 128], strides = [1, 1, 1]} : vector<2x16x128xf32> to vector<2x12x128xf32>
    %48 = vector.extract_strided_slice %10 {offsets = [0, 4, 0], sizes = [2, 12, 128], strides = [1, 1, 1]} : vector<2x16x128xf32> to vector<2x12x128xf32>
    %49 = tpu.concatenate %44, %45, %46, %47, %48 in 2 : vector<2x12x128xf32>, vector<2x12x128xf32>, vector<2x12x128xf32>, vector<2x12x128xf32>, vector<2x12x128xf32> -> vector<2x12x640xf32>
    %c0_20 = arith.constant 0 : index
    %c0_21 = arith.constant 0 : index
    %c0_22 = arith.constant 0 : index
    %50 = vector.load %arg5[%c0_20, %c0_21, %c0_22] : memref<1x640x128xf32, #tpu.memory_space<vmem>>, vector<1x640x128xf32>
    %51 = vector.shape_cast %50 : vector<1x640x128xf32> to vector<640x128xf32>
    "tpu.trace_start"() <{level = 10 : i32, message = "btk,kf->btf"}> : () -> ()
    %cst_23 = arith.constant dense<0.000000e+00> : vector<2x12x128xf32>
    %52 = tpu.matmul %49, %51, %cst_23 {dimension_numbers = #tpu.dot_dimension_numbers<[2], [0], [0, 1], [1], [0, 0, 0, 1, 1, 1], [], []>} : vector<2x12x640xf32>, vector<640x128xf32>, vector<2x12x128xf32> -> vector<2x12x128xf32>
    "tpu.trace_stop"() : () -> ()
    %53 = vector.extract_strided_slice %12 {offsets = [2, 0], sizes = [1, 128], strides = [1, 1]} : vector<3x128xf32> to vector<1x128xf32>
    %54 = vector.shape_cast %53 : vector<1x128xf32> to vector<128xf32>
    %55 = vector.shape_cast %54 : vector<128xf32> to vector<1x1x128xf32>
    %56 = vector.broadcast %55 : vector<1x1x128xf32> to vector<2x12x128xf32>
    %57 = arith.addf %52, %56 : vector<2x12x128xf32>
    %cst_24 = arith.constant 0.000000e+00 : f32
    %58 = vector.broadcast %cst_24 : f32 to vector<2x12x128xf32>
    %59 = arith.maximumf %57, %58 : vector<2x12x128xf32>
    %cst_25 = arith.constant dense<0xFF800000> : vector<2x128xf32>
    %60 = vector.multi_reduction <maximumf>, %59, %cst_25 [1] : vector<2x12x128xf32> to vector<2x128xf32>
    %61 = tpu.concatenate %27, %43, %60 in 1 : vector<2x128xf32>, vector<2x128xf32>, vector<2x128xf32> -> vector<2x384xf32>
    %c0_26 = arith.constant 0 : index
    %c0_27 = arith.constant 0 : index
    %c0_28 = arith.constant 0 : index
    %62 = vector.load %arg7[%c0_26, %c0_27, %c0_28] : memref<1x384x128xf32, #tpu.memory_space<vmem>>, vector<1x384x128xf32>
    %63 = vector.shape_cast %62 : vector<1x384x128xf32> to vector<384x128xf32>
    %cst_29 = arith.constant dense<0.000000e+00> : vector<2x128xf32>
    %64 = tpu.matmul %61, %63, %cst_29 {dimension_numbers = #tpu.dot_dimension_numbers<[1], [0], [0], [1], [0, 0, 1, 1], [], []>} : vector<2x384xf32>, vector<384x128xf32>, vector<2x128xf32> -> vector<2x128xf32>
    %c0_30 = arith.constant 0 : index
    %c0_31 = arith.constant 0 : index
    %c0_32 = arith.constant 0 : index
    %65 = vector.load %arg8[%c0_30, %c0_31, %c0_32] : memref<1x1x128xf32, #tpu.memory_space<vmem>>, vector<1x1x128xf32>
    %66 = vector.shape_cast %65 : vector<1x1x128xf32> to vector<1x128xf32>
    %67 = vector.broadcast %66 : vector<1x128xf32> to vector<2x128xf32>
    %68 = arith.addf %64, %67 : vector<2x128xf32>
    %c0_33 = arith.constant 0 : index
    %c0_34 = arith.constant 0 : index
    %c0_35 = arith.constant 0 : index
    %69 = vector.load %arg9[%c0_33, %c0_34, %c0_35] : memref<1x2x128xf32, #tpu.memory_space<vmem>>, vector<1x2x128xf32>
    %70 = vector.shape_cast %69 : vector<1x2x128xf32> to vector<2x128xf32>
    %71 = vector.shape_cast %68 : vector<2x128xf32> to vector<1x2x128xf32>
    tpu.vector_store %arg9[%c0_33, %c0_34, %c0_35], %71 {strides = array<i32>} : memref<1x2x128xf32, #tpu.memory_space<vmem>>, vector<1x2x128xf32>,
    return
  }
  func.func @transform_0(%arg0: i32) -> (i32, i32, i32) {
    %c0_i32 = arith.constant 0 : i32
    %c0_i32_0 = arith.constant 0 : i32
    %c0_i32_1 = arith.constant 0 : i32
    return %arg0, %c0_i32, %c0_i32_0 : i32, i32, i32
  }
  func.func @transform_1(%arg0: i32) -> (i32, i32, i32) {
    %c0_i32 = arith.constant 0 : i32
    %c0_i32_0 = arith.constant 0 : i32
    %c0_i32_1 = arith.constant 0 : i32
    return %arg0, %c0_i32, %c0_i32_0 : i32, i32, i32
  }
  func.func @transform_2(%arg0: i32) -> (i32, i32, i32) {
    %c0_i32 = arith.constant 0 : i32
    %c0_i32_0 = arith.constant 0 : i32
    %c0_i32_1 = arith.constant 0 : i32
    return %arg0, %c0_i32, %c0_i32_0 : i32, i32, i32
  }
  func.func @transform_3(%arg0: i32) -> (i32, i32, i32) {
    %c0_i32 = arith.constant 0 : i32
    %c0_i32_0 = arith.constant 0 : i32
    %c0_i32_1 = arith.constant 0 : i32
    return %arg0, %c0_i32, %c0_i32_0 : i32, i32, i32
  }
  func.func @transform_4(%arg0: i32) -> (i32, i32, i32) {
    %c0_i32 = arith.constant 0 : i32
    %c0_i32_0 = arith.constant 0 : i32
    %c0_i32_1 = arith.constant 0 : i32
    return %arg0, %c0_i32, %c0_i32_0 : i32, i32, i32
  }
  func.func @transform_5(%arg0: i32) -> (i32, i32, i32) {
    %c0_i32 = arith.constant 0 : i32
    %c0_i32_0 = arith.constant 0 : i32
    %c0_i32_1 = arith.constant 0 : i32
    return %arg0, %c0_i32, %c0_i32_0 : i32, i32, i32
  }
  func.func @transform_6(%arg0: i32) -> (i32, i32, i32) {
    %c0_i32 = arith.constant 0 : i32
    %c0_i32_0 = arith.constant 0 : i32
    %c0_i32_1 = arith.constant 0 : i32
    return %arg0, %c0_i32, %c0_i32_0 : i32, i32, i32
  }
  func.func @transform_7(%arg0: i32) -> (i32, i32, i32) {
    %c0_i32 = arith.constant 0 : i32
    %c0_i32_0 = arith.constant 0 : i32
    %c0_i32_1 = arith.constant 0 : i32
    return %arg0, %c0_i32, %c0_i32_0 : i32, i32, i32
  }
  func.func @transform_8(%arg0: i32) -> (i32, i32, i32) {
    %c0_i32 = arith.constant 0 : i32
    %c0_i32_0 = arith.constant 0 : i32
    %c0_i32_1 = arith.constant 0 : i32
    return %arg0, %c0_i32, %c0_i32_0 : i32, i32, i32
  }
}

</mosaic_0001>

<llo_original>
// kernel: ensemble_forward.1
$region0: #{ensemble_forward.1}
  #allocation0 [shape = 'u32[]', space=smem, size = 0x4, offset = 0x4, fixed_abs, tag = 'smem constant byte address 0x4 - core index']
  #allocation1 [shape = 'u32[144,128]{1,0:T(1,128)}', space=vmem, size = 0x12000, scoped, tag = 'internal scratch']
  %s0 = inlined_call_operand.vmem [shape: s32[3,2,16], index: 0, kind: input, shape index: {}]
  %s1 = inlined_call_operand.hbm [shape: f32[3,128,128], index: 1, kind: input, shape index: {}]
  %s2 = inlined_call_operand.hbm [shape: f32[3,384,128], index: 2, kind: input, shape index: {}]
  %s3 = inlined_call_operand.hbm [shape: f32[3,512,128], index: 3, kind: input, shape index: {}]
  %s4 = inlined_call_operand.hbm [shape: f32[3,640,128], index: 4, kind: input, shape index: {}]
  %s5 = inlined_call_operand.vmem [shape: f32[3,3,128], index: 5, kind: input, shape index: {}]
  %s6 = inlined_call_operand.hbm [shape: f32[3,384,128], index: 6, kind: input, shape index: {}]
  %s7 = inlined_call_operand.vmem [shape: f32[3,1,128], index: 7, kind: input, shape index: {}]
  %s8 = inlined_call_operand.vmem [shape: f32[3,2,128], index: 8, kind: output, shape index: {}]
  %s9 = sld [smem:[#allocation0]]
  $region85: #{ensemble_forward.1} parent=0
    _
  %s11 = ssub.s32 1, %s9
  %s12 = scalar_select 0, %s11, %s9
  $region1: #{ensemble_forward.1} parent=0
    #allocation2 [shape = 'u8[131072]{0}', space=vmem, size = 0x20000, scoped, tag = 'input window, operand 1']
    #allocation3 [shape = 's32[2]{0}', space=sflag, size = 0x8, scoped, tag = 'scoped memory for ensemble_forward.1']
    #allocation4 [shape = 'u8[393216]{0}', space=vmem, size = 0x60000, scoped, tag = 'input window, operand 2']
    #allocation5 [shape = 's32[2]{0}', space=sflag, size = 0x8, scoped, tag = 'scoped memory for ensemble_forward.1']
    #allocation6 [shape = 'u8[524288]{0}', space=vmem, size = 0x80000, scoped, tag = 'input window, operand 3']
    #allocation7 [shape = 'u8[655360]{0}', space=vmem, size = 0xa0000, scoped, tag = 'input window, operand 4']
    #allocation8 [shape = 's32[2]{0}', space=sflag, size = 0x8, scoped, tag = 'scoped memory for ensemble_forward.1']
    #allocation9 [shape = 'u8[393216]{0}', space=vmem, size = 0x60000, scoped, tag = 'input window, operand 6']
    %13 = vsyncpa [#allocation3], 0
    %s14 = scalar_lea.sflag [#allocation3], 1
    %15 = vsyncpa %s14, 0
    %16 = vsyncpa [#allocation5], 0
    %s17 = scalar_lea.sflag [#allocation5], 1
    %18 = vsyncpa %s17, 0
    %19 = vsyncpa [#allocation8], 0
    %s20 = scalar_lea.sflag [#allocation8], 1
    %21 = vsyncpa %s20, 0
    loop: start=0, step=1, limit=5
    $region2: #{ensemble_forward.1} parent=1 // loop_pre_header
      _
    $region3: #{ensemble_forward.1} parent=1 // loop_header
      %s23 = sphi 0, %s27
      %p24 = scmp.ge.s32.totalorder %s23, 5
      %s33 = sphi 0, %s35
      %s36 = sphi 0, %s33
      %s37 = sphi 0, %s36
      %s53 = sphi 0, %s37
      %s59 = sphi 0, %s61
      %s62 = sphi 0, %s59
      %s63 = sphi 0, %s62
      %s79 = sphi 0, %s63
      %s85 = sphi 0, %s87
      %s88 = sphi 0, %s85
      %s89 = sphi 0, %s88
      %s105 = sphi 0, %s89
      %s111 = sphi 0, %s113
      %s114 = sphi 0, %s111
      %s115 = sphi 0, %s114
      %s131 = sphi 0, %s115
      %s137 = sphi 0, %s139
      %s140 = sphi 0, %s137
      %s141 = sphi 0, %s140
      %s157 = sphi 0, %s141
      %s163 = sphi 0, %s165
      %s166 = sphi 0, %s163
      %s167 = sphi 0, %s166
      %s183 = sphi 0, %s167
      %s189 = sphi 0, %s191
      %s192 = sphi 0, %s189
      %s193 = sphi 0, %s192
      %s209 = sphi 0, %s193
      %s215 = sphi 0, %s217
      %s218 = sphi 0, %s215
      %s219 = sphi 0, %s218
      %s235 = sphi 0, %s219
      %s241 = sphi 0, %s243
      %s244 = sphi 0, %s241
      %s245 = sphi 0, %s244
      %s261 = sphi 0, %s245
    $region4: #{ensemble_forward.1} parent=1 // loop_header_branch
      %26 = sbr.rel (%p24) target = $region8
    $region5: #{ensemble_forward.1} parent=1 // loop_body
      %s28 = ssub.s32 %s23, 1
      %s29 = ssub.s32 %s23, 2
      %s30 = sadd.s32 %s23, 1
      %s31 = ssub.s32 %s23, %s30
      %p32 = scmp.eq.s32.totalorder %s31, 0
      %s34 = sadd.s32 %s33, 1
      %s35 = scalar_select %p32, %s33, %s34
      %p38 = pneg %p32
      %p39 = scmp.eq.s32.totalorder %s23, 2
      %p40 = por %p38, %p39
      %p41 = scmp.ne.s32.totalorder %s33, %s36
      %p42 = scmp.eq.s32.totalorder %s23, 0
      %p43 = por %p41, %p42
      %p44 = scmp.ne.s32.totalorder %s33, %s36
      %p45 = scmp.eq.s32.totalorder %s28, 2
      %p46 = por %p44, %p45
      %p47 = scmp.ne.s32.totalorder %s36, %s37
      %p48 = scmp.eq.s32.totalorder %s28, 0
      %p49 = por %p47, %p48
      %p50 = scmp.ne.s32.totalorder %s36, %s37
      %p51 = scmp.eq.s32.totalorder %s29, 2
      %p52 = por %p50, %p51
      %p54 = scmp.ne.s32.totalorder %s37, %s53
      %p55 = scmp.eq.s32.totalorder %s29, 0
      %p56 = por %p54, %p55
      %s57 = ssub.s32 %s23, %s30
      %p58 = scmp.eq.s32.totalorder %s57, 0
      %s60 = sadd.s32 %s59, 1
      %s61 = scalar_select %p58, %s59, %s60
      %p64 = pneg %p58
      %p65 = scmp.eq.s32.totalorder %s23, 2
      %p66 = por %p64, %p65
      %p67 = scmp.ne.s32.totalorder %s59, %s62
      %p68 = scmp.eq.s32.totalorder %s23, 0
      %p69 = por %p67, %p68
      %p70 = scmp.ne.s32.totalorder %s59, %s62
      %p71 = scmp.eq.s32.totalorder %s28, 2
      %p72 = por %p70, %p71
      %p73 = scmp.ne.s32.totalorder %s62, %s63
      %p74 = scmp.eq.s32.totalorder %s28, 0
      %p75 = por %p73, %p74
      %p76 = scmp.ne.s32.totalorder %s62, %s63
      %p77 = scmp.eq.s32.totalorder %s29, 2
      %p78 = por %p76, %p77
      %p80 = scmp.ne.s32.totalorder %s63, %s79
      %p81 = scmp.eq.s32.totalorder %s29, 0
      %p82 = por %p80, %p81
      %s83 = ssub.s32 %s23, %s30
      %p84 = scmp.eq.s32.totalorder %s83, 0
      %s86 = sadd.s32 %s85, 1
      %s87 = scalar_select %p84, %s85, %s86
      %p90 = pneg %p84
      %p91 = scmp.eq.s32.totalorder %s23, 2
      %p92 = por %p90, %p91
      %p93 = scmp.ne.s32.totalorder %s85, %s88
      %p94 = scmp.eq.s32.totalorder %s23, 0
      %p95 = por %p93, %p94
      %p96 = scmp.ne.s32.totalorder %s85, %s88
      %p97 = scmp.eq.s32.totalorder %s28, 2
      %p98 = por %p96, %p97
      %p99 = scmp.ne.s32.totalorder %s88, %s89
      %p100 = scmp.eq.s32.totalorder %s28, 0
      %p101 = por %p99, %p100
      %p102 = scmp.ne.s32.totalorder %s88, %s89
      %p103 = scmp.eq.s32.totalorder %s29, 2
      %p104 = por %p102, %p103
      %p106 = scmp.ne.s32.totalorder %s89, %s105
      %p107 = scmp.eq.s32.totalorder %s29, 0
      %p108 = por %p106, %p107
      %s109 = ssub.s32 %s23, %s30
      %p110 = scmp.eq.s32.totalorder %s109, 0
      %s112 = sadd.s32 %s111, 1
      %s113 = scalar_select %p110, %s111, %s112
      %p116 = pneg %p110
      %p117 = scmp.eq.s32.totalorder %s23, 2
      %p118 = por %p116, %p117
      %p119 = scmp.ne.s32.totalorder %s111, %s114
      %p120 = scmp.eq.s32.totalorder %s23, 0
      %p121 = por %p119, %p120
      %p122 = scmp.ne.s32.totalorder %s111, %s114
      %p123 = scmp.eq.s32.totalorder %s28, 2
      %p124 = por %p122, %p123
      %p125 = scmp.ne.s32.totalorder %s114, %s115
      %p126 = scmp.eq.s32.totalorder %s28, 0
      %p127 = por %p125, %p126
      %p128 = scmp.ne.s32.totalorder %s114, %s115
      %p129 = scmp.eq.s32.totalorder %s29, 2
      %p130 = por %p128, %p129
      %p132 = scmp.ne.s32.totalorder %s115, %s131
      %p133 = scmp.eq.s32.totalorder %s29, 0
      %p134 = por %p132, %p133
      %s135 = ssub.s32 %s23, %s30
      %p136 = scmp.eq.s32.totalorder %s135, 0
      %s138 = sadd.s32 %s137, 1
      %s139 = scalar_select %p136, %s137, %s138
      %p142 = pneg %p136
      %p143 = scmp.eq.s32.totalorder %s23, 2
      %p144 = por %p142, %p143
      %p145 = scmp.ne.s32.totalorder %s137, %s140
      %p146 = scmp.eq.s32.totalorder %s23, 0
      %p147 = por %p145, %p146
      %p148 = scmp.ne.s32.totalorder %s137, %s140
      %p149 = scmp.eq.s32.totalorder %s28, 2
      %p150 = por %p148, %p149
      %p151 = scmp.ne.s32.totalorder %s140, %s141
      %p152 = scmp.eq.s32.totalorder %s28, 0
      %p153 = por %p151, %p152
      %p154 = scmp.ne.s32.totalorder %s140, %s141
      %p155 = scmp.eq.s32.totalorder %s29, 2
      %p156 = por %p154, %p155
      %p158 = scmp.ne.s32.totalorder %s141, %s157
      %p159 = scmp.eq.s32.totalorder %s29, 0
      %p160 = por %p158, %p159
      %s161 = ssub.s32 %s23, %s30
      %p162 = scmp.eq.s32.totalorder %s161, 0
      %s164 = sadd.s32 %s163, 1
      %s165 = scalar_select %p162, %s163, %s164
      %p168 = pneg %p162
      %p169 = scmp.eq.s32.totalorder %s23, 2
      %p170 = por %p168, %p169
      %p171 = scmp.ne.s32.totalorder %s163, %s166
      %p172 = scmp.eq.s32.totalorder %s23, 0
      %p173 = por %p171, %p172
      %p174 = scmp.ne.s32.totalorder %s163, %s166
      %p175 = scmp.eq.s32.totalorder %s28, 2
      %p176 = por %p174, %p175
      %p177 = scmp.ne.s32.totalorder %s166, %s167
      %p178 = scmp.eq.s32.totalorder %s28, 0
      %p179 = por %p177, %p178
      %p180 = scmp.ne.s32.totalorder %s166, %s167
      %p181 = scmp.eq.s32.totalorder %s29, 2
      %p182 = por %p180, %p181
      %p184 = scmp.ne.s32.totalorder %s167, %s183
      %p185 = scmp.eq.s32.totalorder %s29, 0
      %p186 = por %p184, %p185
      %s187 = ssub.s32 %s23, %s30
      %p188 = scmp.eq.s32.totalorder %s187, 0
      %s190 = sadd.s32 %s189, 1
      %s191 = scalar_select %p188, %s189, %s190
      %p194 = pneg %p188
      %p195 = scmp.eq.s32.totalorder %s23, 2
      %p196 = por %p194, %p195
      %p197 = scmp.ne.s32.totalorder %s189, %s192
      %p198 = scmp.eq.s32.totalorder %s23, 0
      %p199 = por %p197, %p198
      %p200 = scmp.ne.s32.totalorder %s189, %s192
      %p201 = scmp.eq.s32.totalorder %s28, 2
      %p202 = por %p200, %p201
      %p203 = scmp.ne.s32.totalorder %s192, %s193
      %p204 = scmp.eq.s32.totalorder %s28, 0
      %p205 = por %p203, %p204
      %p206 = scmp.ne.s32.totalorder %s192, %s193
      %p207 = scmp.eq.s32.totalorder %s29, 2
      %p208 = por %p206, %p207
      %p210 = scmp.ne.s32.totalorder %s193, %s209
      %p211 = scmp.eq.s32.totalorder %s29, 0
      %p212 = por %p210, %p211
      %s213 = ssub.s32 %s23, %s30
      %p214 = scmp.eq.s32.totalorder %s213, 0
      %s216 = sadd.s32 %s215, 1
      %s217 = scalar_select %p214, %s215, %s216
      %p220 = pneg %p214
      %p221 = scmp.eq.s32.totalorder %s23, 2
      %p222 = por %p220, %p221
      %p223 = scmp.ne.s32.totalorder %s215, %s218
      %p224 = scmp.eq.s32.totalorder %s23, 0
      %p225 = por %p223, %p224
      %p226 = scmp.ne.s32.totalorder %s215, %s218
      %p227 = scmp.eq.s32.totalorder %s28, 2
      %p228 = por %p226, %p227
      %p229 = scmp.ne.s32.totalorder %s218, %s219
      %p230 = scmp.eq.s32.totalorder %s28, 0
      %p231 = por %p229, %p230
      %p232 = scmp.ne.s32.totalorder %s218, %s219
      %p233 = scmp.eq.s32.totalorder %s29, 2
      %p234 = por %p232, %p233
      %p236 = scmp.ne.s32.totalorder %s219, %s235
      %p237 = scmp.eq.s32.totalorder %s29, 0
      %p238 = por %p236, %p237
      %s239 = ssub.s32 %s23, %s30
      %p240 = scmp.eq.s32.totalorder %s239, 0
      %s242 = sadd.s32 %s241, 1
      %s243 = scalar_select %p240, %s241, %s242
      %p246 = pneg %p240
      %p247 = scmp.eq.s32.totalorder %s23, 2
      %p248 = por %p246, %p247
      %p249 = scmp.ne.s32.totalorder %s241, %s244
      %p250 = scmp.eq.s32.totalorder %s23, 0
      %p251 = por %p249, %p250
      %p252 = scmp.ne.s32.totalorder %s241, %s244
      %p253 = scmp.eq.s32.totalorder %s28, 2
      %p254 = por %p252, %p253
      %p255 = scmp.ne.s32.totalorder %s244, %s245
      %p256 = scmp.eq.s32.totalorder %s28, 0
      %p257 = por %p255, %p256
      %p258 = scmp.ne.s32.totalorder %s244, %s245
      %p259 = scmp.eq.s32.totalorder %s29, 2
      %p260 = por %p258, %p259
      %p262 = scmp.ne.s32.totalorder %s245, %s261
      %p263 = scmp.eq.s32.totalorder %s29, 0
      %p264 = por %p262, %p263
      %p265 = scmp.le.s32.totalorder 1, %s23
      %p266 = scmp.lt.s32.totalorder %s23, 4
      %p267 = pnand %p265, %p266
      %p268 = pneg %p267
      // Predicated region
      $region9: #{ensemble_forward.1} parent=5 // pred_check
        _
      $region10: #{ensemble_forward.1} parent=5 // pred_check_branch
        %270 = sbr.rel (%p267) target = $region12
      $region11: #{ensemble_forward.1} parent=5 // pred_region
        %s271 = ssub.s32 %s23, 1
      $region12: #{ensemble_forward.1} parent=5 // pred_fallthru
        _
      %p272 = scmp.lt.s32.totalorder %s23, 3
      // Predicated region
      $region13: #{ensemble_forward.1} parent=5 // pred_check
        %p273 = pneg %p272
      $region14: #{ensemble_forward.1} parent=5 // pred_check_branch
        %275 = sbr.rel (%p273) target = $region16
      $region15: #{ensemble_forward.1} parent=5 // pred_region
        // Predicated region
        $region17: #{ensemble_forward.1} parent=15 // pred_check
          %p276 = pneg %p43
        $region18: #{ensemble_forward.1} parent=15 // pred_check_branch
          %278 = sbr.rel (%p276) target = $region20
        $region19: #{ensemble_forward.1} parent=15 // pred_region
          %p279 = scmp.lt.s32.totalorder %s23, 2
          %s280 = scalar_select %p279, %s23, 2
          %s281 = smul.addr %s280, 2
          %s282 = scalar_lea.vmem %s0, %s281
        $region20: #{ensemble_forward.1} parent=15 // pred_fallthru
          _
        // Predicated region
        $region21: #{ensemble_forward.1} parent=15 // pred_check
          %p283 = pneg %p69
        $region22: #{ensemble_forward.1} parent=15 // pred_check_branch
          %285 = sbr.rel (%p283) target = $region24
        $region23: #{ensemble_forward.1} parent=15 // pred_region
          %s286 = sand.u32 %s59, 1
          %s287 = scalar_lea.sflag [#allocation3], %s286
          %s288 = sand.u32 %s59, 1
          %s289 = smul.addr %s288, 128
          %s290 = scalar_lea.vmem [#allocation2], %s289
          %s292 = ssub.s32 2048, 2048
          %293 = vsyncadd %s287, %s292
          %s294 = smul.addr %s23, 16
          %s295 = smul.addr %s294, 128
          %s296 = scalar_lea.hbm %s1, %s295
          %s297 = sshll.u32 %s290, 4
          %s298 = int_to_ptr.vmem [resolvable:$true] %s297
          %303 = dma.hbm_to_vmem [thread:$0]  %s296, 2048, %s298, %s287, 128, 128, 8
        $region24: #{ensemble_forward.1} parent=15 // pred_fallthru
          _
        // Predicated region
        $region25: #{ensemble_forward.1} parent=15 // pred_check
          %p304 = pneg %p95
        $region26: #{ensemble_forward.1} parent=15 // pred_check_branch
          %306 = sbr.rel (%p304) target = $region28
        $region27: #{ensemble_forward.1} parent=15 // pred_region
          %s307 = sand.u32 %s23, 1
          %s308 = scalar_lea.sflag [#allocation5], %s307
          %s309 = sand.u32 %s85, 1
          %s310 = smul.addr %s309, 384
          %s311 = scalar_lea.vmem [#allocation4], %s310
          %s313 = ssub.s32 6144, 6144
          %314 = vsyncadd %s308, %s313
          %s315 = smul.addr %s23, 48
          %s316 = smul.addr %s315, 128
          %s317 = scalar_lea.hbm %s2, %s316
          %s318 = sshll.u32 %s311, 4
          %s319 = int_to_ptr.vmem [resolvable:$true] %s318
          %324 = dma.hbm_to_vmem [thread:$0]  %s317, 6144, %s319, %s308, 128, 128, 8
        $region28: #{ensemble_forward.1} parent=15 // pred_fallthru
          _
        // Predicated region
        $region29: #{ensemble_forward.1} parent=15 // pred_check
          %p325 = pneg %p121
        $region30: #{ensemble_forward.1} parent=15 // pred_check_branch
          %327 = sbr.rel (%p325) target = $region32
        $region31: #{ensemble_forward.1} parent=15 // pred_region
          %s328 = sand.u32 %s23, 1
          %s329 = scalar_lea.sflag [#allocation5], %s328
          %s330 = sand.u32 %s111, 1
          %s331 = smul.addr %s330, 512
          %s332 = scalar_lea.vmem [#allocation6], %s331
          %s334 = ssub.s32 8192, 8192
          %335 = vsyncadd %s329, %s334
          %s336 = smul.addr %s23, 64
          %s337 = smul.addr %s336, 128
          %s338 = scalar_lea.hbm %s3, %s337
          %s339 = sshll.u32 %s332, 4
          %s340 = int_to_ptr.vmem [resolvable:$true] %s339
          %345 = dma.hbm_to_vmem [thread:$0]  %s338, 8192, %s340, %s329, 128, 128, 8
        $region32: #{ensemble_forward.1} parent=15 // pred_fallthru
          _
        // Predicated region
        $region33: #{ensemble_forward.1} parent=15 // pred_check
          %p346 = pneg %p147
        $region34: #{ensemble_forward.1} parent=15 // pred_check_branch
          %348 = sbr.rel (%p346) target = $region36
        $region35: #{ensemble_forward.1} parent=15 // pred_region
          %s349 = sand.u32 %s23, 1
          %s350 = scalar_lea.sflag [#allocation8], %s349
          %s351 = sand.u32 %s137, 1
          %s352 = smul.addr %s351, 640
          %s353 = scalar_lea.vmem [#allocation7], %s352
          %s355 = ssub.s32 10240, 10240
          %356 = vsyncadd %s350, %s355
          %s357 = smul.addr %s23, 80
          %s358 = smul.addr %s357, 128
          %s359 = scalar_lea.hbm %s4, %s358
          %s360 = sshll.u32 %s353, 4
          %s361 = int_to_ptr.vmem [resolvable:$true] %s360
          %366 = dma.hbm_to_vmem [thread:$0]  %s359, 10240, %s361, %s350, 128, 128, 8
        $region36: #{ensemble_forward.1} parent=15 // pred_fallthru
          _
        // Predicated region
        $region37: #{ensemble_forward.1} parent=15 // pred_check
          %p367 = pneg %p173
        $region38: #{ensemble_forward.1} parent=15 // pred_check_branch
          %369 = sbr.rel (%p367) target = $region40
        $region39: #{ensemble_forward.1} parent=15 // pred_region
          %p370 = scmp.lt.s32.totalorder %s23, 2
          %s371 = scalar_select %p370, %s23, 2
          %s372 = smul.addr %s371, 4
          %s373 = scalar_lea.vmem %s5, %s372
        $region40: #{ensemble_forward.1} parent=15 // pred_fallthru
          _
        // Predicated region
        $region41: #{ensemble_forward.1} parent=15 // pred_check
          %p374 = pneg %p199
        $region42: #{ensemble_forward.1} parent=15 // pred_check_branch
          %376 = sbr.rel (%p374) target = $region44
        $region43: #{ensemble_forward.1} parent=15 // pred_region
          %s377 = sand.u32 %s23, 1
          %s378 = scalar_lea.sflag [#allocation8], %s377
          %s379 = sand.u32 %s189, 1
          %s380 = smul.addr %s379, 384
          %s381 = scalar_lea.vmem [#allocation9], %s380
          %s383 = ssub.s32 6144, 6144
          %384 = vsyncadd %s378, %s383
          %s385 = smul.addr %s23, 48
          %s386 = smul.addr %s385, 128
          %s387 = scalar_lea.hbm %s6, %s386
          %s388 = sshll.u32 %s381, 4
          %s389 = int_to_ptr.vmem [resolvable:$true] %s388
          %394 = dma.hbm_to_vmem [thread:$0]  %s387, 6144, %s389, %s378, 128, 128, 8
        $region44: #{ensemble_forward.1} parent=15 // pred_fallthru
          _
        // Predicated region
        $region45: #{ensemble_forward.1} parent=15 // pred_check
          %p395 = pneg %p225
        $region46: #{ensemble_forward.1} parent=15 // pred_check_branch
          %397 = sbr.rel (%p395) target = $region48
        $region47: #{ensemble_forward.1} parent=15 // pred_region
          %p398 = scmp.lt.s32.totalorder %s23, 2
          %s399 = scalar_select %p398, %s23, 2
          %s400 = scalar_lea.vmem %s7, %s399
        $region48: #{ensemble_forward.1} parent=15 // pred_fallthru
          _
      $region16: #{ensemble_forward.1} parent=5 // pred_fallthru
        _
      %p401 = scmp.le.s32.totalorder 1, %s23
      %p402 = scmp.lt.s32.totalorder %s23, 4
      %p403 = pnand %p401, %p402
      %p404 = pneg %p403
      // Predicated region
      $region49: #{ensemble_forward.1} parent=5 // pred_check
        _
      $region50: #{ensemble_forward.1} parent=5 // pred_check_branch
        %406 = sbr.rel (%p403) target = $region52
      $region51: #{ensemble_forward.1} parent=5 // pred_region
        %s407 = ssub.s32 %s23, 1
        %s408 = sand.u32 %s62, 1
        %s409 = scalar_lea.sflag [#allocation3], %s408
        %s410 = sand.u32 %s62, 1
        %s411 = smul.addr %s410, 128
        %s412 = scalar_lea.vmem [#allocation2], %s411
        // Predicated region
        $region53: #{ensemble_forward.1} parent=51 // pred_check
          %p413 = pneg %p75
        $region54: #{ensemble_forward.1} parent=51 // pred_check_branch
          %415 = sbr.rel (%p413) target = $region56
        $region55: #{ensemble_forward.1} parent=51 // pred_region
          %416 = dma.done %s409, 2048
        $region56: #{ensemble_forward.1} parent=51 // pred_fallthru
          _
        %s417 = sand.u32 %s28, 1
        %s418 = scalar_lea.sflag [#allocation5], %s417
        %s419 = sand.u32 %s88, 1
        %s420 = smul.addr %s419, 384
        %s421 = scalar_lea.vmem [#allocation4], %s420
        // Predicated region
        $region57: #{ensemble_forward.1} parent=51 // pred_check
          %p422 = pneg %p101
        $region58: #{ensemble_forward.1} parent=51 // pred_check_branch
          %424 = sbr.rel (%p422) target = $region60
        $region59: #{ensemble_forward.1} parent=51 // pred_region
          %425 = dma.done %s418, 6144
        $region60: #{ensemble_forward.1} parent=51 // pred_fallthru
          _
        %s426 = sand.u32 %s28, 1
        %s427 = scalar_lea.sflag [#allocation5], %s426
        %s428 = sand.u32 %s114, 1
        %s429 = smul.addr %s428, 512
        %s430 = scalar_lea.vmem [#allocation6], %s429
        // Predicated region
        $region61: #{ensemble_forward.1} parent=51 // pred_check
          %p431 = pneg %p127
        $region62: #{ensemble_forward.1} parent=51 // pred_check_branch
          %433 = sbr.rel (%p431) target = $region64
        $region63: #{ensemble_forward.1} parent=51 // pred_region
          %434 = dma.done %s427, 8192
        $region64: #{ensemble_forward.1} parent=51 // pred_fallthru
          _
        %s435 = sand.u32 %s28, 1
        %s436 = scalar_lea.sflag [#allocation8], %s435
        %s437 = sand.u32 %s140, 1
        %s438 = smul.addr %s437, 640
        %s439 = scalar_lea.vmem [#allocation7], %s438
        // Predicated region
        $region65: #{ensemble_forward.1} parent=51 // pred_check
          %p440 = pneg %p153
        $region66: #{ensemble_forward.1} parent=51 // pred_check_branch
          %442 = sbr.rel (%p440) target = $region68
        $region67: #{ensemble_forward.1} parent=51 // pred_region
          %443 = dma.done %s436, 10240
        $region68: #{ensemble_forward.1} parent=51 // pred_fallthru
          _
        %s444 = sand.u32 %s28, 1
        %s445 = scalar_lea.sflag [#allocation8], %s444
        %s446 = sand.u32 %s192, 1
        %s447 = smul.addr %s446, 384
        %s448 = scalar_lea.vmem [#allocation9], %s447
        // Predicated region
        $region69: #{ensemble_forward.1} parent=51 // pred_check
          %p449 = pneg %p205
        $region70: #{ensemble_forward.1} parent=51 // pred_check_branch
          %451 = sbr.rel (%p449) target = $region72
        $region71: #{ensemble_forward.1} parent=51 // pred_region
          %452 = dma.done %s445, 6144
        $region72: #{ensemble_forward.1} parent=51 // pred_fallthru
          _
        %p453 = scmp.lt.s32.totalorder %s28, 2
        %s454 = scalar_select %p453, %s28, 2
        %s455 = smul.addr %s454, 2
        %s456 = scalar_lea.vmem %s0, %s455
        %p457 = pneg %p49
        %p458 = pneg %p46
        %s459 = sand.u32 %s62, 1
        %s460 = scalar_lea.sflag [#allocation3], %s459
        %s461 = sand.u32 %s62, 1
        %s462 = smul.addr %s461, 128
        %s463 = scalar_lea.vmem [#allocation2], %s462
        %p464 = pneg %p75
        %p465 = pneg %p72
        %s466 = sand.u32 %s28, 1
        %s467 = scalar_lea.sflag [#allocation5], %s466
        %s468 = sand.u32 %s88, 1
        %s469 = smul.addr %s468, 384
        %s470 = scalar_lea.vmem [#allocation4], %s469
        %p471 = pneg %p101
        %p472 = pneg %p98
        %s473 = sand.u32 %s28, 1
        %s474 = scalar_lea.sflag [#allocation5], %s473
        %s475 = sand.u32 %s114, 1
        %s476 = smul.addr %s475, 512
        %s477 = scalar_lea.vmem [#allocation6], %s476
        %p478 = pneg %p127
        %p479 = pneg %p124
        %s480 = sand.u32 %s28, 1
        %s481 = scalar_lea.sflag [#allocation8], %s480
        %s482 = sand.u32 %s140, 1
        %s483 = smul.addr %s482, 640
        %s484 = scalar_lea.vmem [#allocation7], %s483
        %p485 = pneg %p153
        %p486 = pneg %p150
        %p487 = scmp.lt.s32.totalorder %s28, 2
        %s488 = scalar_select %p487, %s28, 2
        %s489 = smul.addr %s488, 4
        %s490 = scalar_lea.vmem %s5, %s489
        %p491 = pneg %p179
        %p492 = pneg %p176
        %s493 = sand.u32 %s28, 1
        %s494 = scalar_lea.sflag [#allocation8], %s493
        %s495 = sand.u32 %s192, 1
        %s496 = smul.addr %s495, 384
        %s497 = scalar_lea.vmem [#allocation9], %s496
        %p498 = pneg %p205
        %p499 = pneg %p202
        %p500 = scmp.lt.s32.totalorder %s28, 2
        %s501 = scalar_select %p500, %s28, 2
        %s502 = scalar_lea.vmem %s7, %s501
        %p503 = pneg %p231
        %p504 = pneg %p228
        %p505 = pneg %p257
        %p506 = pneg %p254
        %p507 = scmp.lt.s32.totalorder %s28, 2
        %s508 = scalar_select %p507, %s28, 2
        %s509 = smul.addr %s508, 2
        %s510 = scalar_lea.vmem %s8, %s509
        %p511 = scmp.lt.s32.totalorder %s28, 2
        %s512 = scalar_select %p511, %s28, 2
        %s513 = smul.addr %s512, 2
        %s514 = scalar_lea.vmem %s0, %s513
        %p515 = scmp.lt.s32.totalorder %s28, 2
        %s516 = scalar_select %p515, %s28, 2
        %s517 = smul.addr %s516, 4
        %s518 = scalar_lea.vmem %s5, %s517
        %p519 = scmp.lt.s32.totalorder %s28, 2
        %s520 = scalar_select %p519, %s28, 2
        %s521 = scalar_lea.vmem %s7, %s520
        %p522 = scmp.lt.s32.totalorder %s28, 2
        %s523 = scalar_select %p522, %s28, 2
        %s524 = smul.addr %s523, 2
        %s525 = scalar_lea.vmem %s8, %s524
        %v526 = vld [vmem:[%s514] sm:$0x3]
        %v527 = vlaneseq
        %v528 = vand.u32 %v527, 127
        %v529 = vlaneseq
        %v530 = vshrl.u32 %v529, 7
        %v531 = vsub.s32 0, %v530
        %v532 = vrot.slane %v526, %v531
        %534 = vbcast.lane.b32.xlu0 %v532, 256
        %v535 = vpop.permute.xlu0 %534
        %s537 = sor.u32 256, 8
        %538 = vbcast.lane.b32.xlu0 %v532, %s537
        %v539 = vpop.permute.xlu0 %538
        %v540 = vlaneseq
        %v541 = vshrl.u32 %v540, 7
        %v542 = vsub.s32 1, %v541
        %v543 = vrot.slane %v526, %v542
        %545 = vbcast.lane.b32.xlu0 %v543, 256
        %v546 = vpop.permute.xlu0 %545
        %s548 = sor.u32 256, 8
        %549 = vbcast.lane.b32.xlu0 %v543, %s548
        %v550 = vpop.permute.xlu0 %549
        %vm551 = vcmp.eq.s32.totalorder %v528, %v535
        %vm552 = vcmp.eq.s32.totalorder %v528, %v539
        %vm553 = vcmp.eq.s32.totalorder %v528, %v546
        %vm554 = vcmp.eq.s32.totalorder %v528, %v550
        %v555 = vsel %vm551, 1, 0
        %v556 = vsel %vm552, 1, 0
        %v557 = vsel %vm553, 1, 0
        %v558 = vsel %vm554, 1, 0
        %v559 = vcvt.s32.f32 %v555
        %v560 = vcvt.s32.f32 %v556
        %v561 = vcvt.s32.f32 %v557
        %v562 = vcvt.s32.f32 %v558
        %v563 = vld [vmem:[%s412] sm:$0xff]
        %v564 = vld [vmem:[%s412 + $0x8] sm:$0xff]
        %v565 = vld [vmem:[%s412 + $0x10] sm:$0xff]
        %v566 = vld [vmem:[%s412 + $0x18] sm:$0xff]
        %v567 = vld [vmem:[%s412 + $0x20] sm:$0xff]
        %v568 = vld [vmem:[%s412 + $0x28] sm:$0xff]
        %v569 = vld [vmem:[%s412 + $0x30] sm:$0xff]
        %v570 = vld [vmem:[%s412 + $0x38] sm:$0xff]
        %v571 = vld [vmem:[%s412 + $0x40] sm:$0xff]
        %v572 = vld [vmem:[%s412 + $0x48] sm:$0xff]
        %v573 = vld [vmem:[%s412 + $0x50] sm:$0xff]
        %v574 = vld [vmem:[%s412 + $0x58] sm:$0xff]
        %v575 = vld [vmem:[%s412 + $0x60] sm:$0xff]
        %v576 = vld [vmem:[%s412 + $0x68] sm:$0xff]
        %v577 = vld [vmem:[%s412 + $0x70] sm:$0xff]
        %v578 = vld [vmem:[%s412 + $0x78] sm:$0xff]
        %579 = vmatprep.subr.mxu0 0.0
        %580 = vmatpush1.msra.mxu0 %v563
        %581 = vmatprep.subr.mxu0 0.0
        %582 = vmatpush1.msra.mxu0 %v564
        %583 = vmatprep.subr.mxu0 0.0
        %584 = vmatpush1.msra.mxu0 %v565
        %585 = vmatprep.subr.mxu0 0.0
        %586 = vmatpush1.msra.mxu0 %v566
        %587 = vmatprep.subr.mxu0 0.0
        %588 = vmatpush1.msra.mxu0 %v567
        %589 = vmatprep.subr.mxu0 0.0
        %590 = vmatpush1.msra.mxu0 %v568
        %591 = vmatprep.subr.mxu0 0.0
        %592 = vmatpush1.msra.mxu0 %v569
        %593 = vmatprep.subr.mxu0 0.0
        %594 = vmatpush1.msra.mxu0 %v570
        %595 = vmatprep.subr.mxu0 0.0
        %596 = vmatpush1.msra.mxu0 %v571
        %597 = vmatprep.subr.mxu0 0.0
        %598 = vmatpush1.msra.mxu0 %v572
        %599 = vmatprep.subr.mxu0 0.0
        %600 = vmatpush1.msra.mxu0 %v573
        %601 = vmatprep.subr.mxu0 0.0
        %602 = vmatpush1.msra.mxu0 %v574
        %603 = vmatprep.subr.mxu0 0.0
        %604 = vmatpush1.msra.mxu0 %v575
        %605 = vmatprep.subr.mxu0 0.0
        %606 = vmatpush1.msra.mxu0 %v576
        %607 = vmatprep.subr.mxu0 0.0
        %608 = vmatpush1.msra.mxu0 %v577
        %609 = vmatprep.subr.mxu0 0.0
        %610 = vmatpush1.msra.mxu0 %v578
        %611 = vmatprep.subr.mxu0 0.0
        %612 = vmatpush1.msra.mxu0 0.0
        %613 = vmatprep.subr.mxu0 0.0
        %614 = vmatpush1.msra.mxu0 0.0
        %615 = vmatprep.subr.mxu0 0.0
        %616 = vmatpush1.msra.mxu0 0.0
        %617 = vmatprep.subr.mxu0 0.0
        %618 = vmatpush1.msra.mxu0 0.0
        %619 = vmatprep.subr.mxu0 0.0
        %620 = vmatpush1.msra.mxu0 0.0
        %621 = vmatprep.subr.mxu0 0.0
        %622 = vmatpush1.msra.mxu0 0.0
        %623 = vmatprep.subr.mxu0 0.0
        %624 = vmatpush1.msra.mxu0 0.0
        %625 = vmatprep.subr.mxu0 0.0
        %626 = vmatpush1.msra.mxu0 0.0
        %627 = vmatprep.subr.mxu0 0.0
        %628 = vmatpush1.msra.mxu0 0.0
        %629 = vmatprep.subr.mxu0 0.0
        %630 = vmatpush1.msra.mxu0 0.0
        %631 = vmatprep.subr.mxu0 0.0
        %632 = vmatpush1.msra.mxu0 0.0
        %633 = vmatprep.subr.mxu0 0.0
        %634 = vmatpush1.msra.mxu0 0.0
        %635 = vmatprep.subr.mxu0 0.0
        %636 = vmatpush1.msra.mxu0 0.0
        %637 = vmatprep.subr.mxu0 0.0
        %638 = vmatpush1.msra.mxu0 0.0
        %639 = vmatprep.subr.mxu0 0.0
        %640 = vmatpush1.msra.mxu0 0.0
        %641 = vmatprep.subr.mxu0 0.0
        %642 = vmatpush1.msra.mxu0 0.0
        %643 = vmatprep.mubr.f32.mxu0 0.0
        %644 = vmatmul.mubr.f32.gmra.mrb[0].mxu0 %v559
        %v645 = vpop.f32.mrb[0].mxu0
        %v646 = vadd.f32 0.0, %v645
        %v647 = vpop.f32.mrb[0].mxu0
        %648 = vmatprep.mubr.f32.mxu0 0.0
        %649 = vmatmul.mubr.f32.gmra.mrb[0].mxu0 %v560
        %v650 = vpop.f32.mrb[0].mxu0
        %v651 = vadd.f32 0.0, %v650
        %v652 = vpop.f32.mrb[0].mxu0
        %653 = vmatprep.mubr.f32.mxu0 0.0
        %654 = vmatmul.mubr.f32.gmra.mrb[0].mxu0 %v561
        %v655 = vpop.f32.mrb[0].mxu0
        %v656 = vadd.f32 0.0, %v655
        %v657 = vpop.f32.mrb[0].mxu0
        %658 = vmatprep.mubr.f32.mxu0 0.0
        %659 = vmatmul.mubr.f32.gmra.mrb[0].mxu0 %v562
        %v660 = vpop.f32.mrb[0].mxu0
        %v661 = vadd.f32 0.0, %v660
        %v662 = vpop.f32.mrb[0].mxu0
        %663 = vdwg.mxu0
        %v664 = vld [vmem:[%s518] sm:$0x7]
        %vm669 = vcmask 1046528
        %v670 = vrot.slane %v646, 1
        %v671 = vrot.slane %v651, 1
        %v672 = vsel %vm669, %v670, %v671
        %v673 = vrot.slane %v656, 1
        %v674 = vrot.slane %v661, 1
        %v675 = vsel %vm669, %v673, %v674
        %vm676 = vcmask 1045504
        %v677 = vrot.slane %v646, 2
        %v678 = vrot.slane %v651, 2
        %v679 = vsel %vm676, %v677, %v678
        %v680 = vrot.slane %v656, 2
        %v681 = vrot.slane %v661, 2
        %v682 = vsel %vm676, %v680, %v681
        %v683 = vld [vmem:[%s421] sm:$0xff]
        %v684 = vld [vmem:[%s421 + $0x8] sm:$0xff]
        %v685 = vld [vmem:[%s421 + $0x10] sm:$0xff]
        %v686 = vld [vmem:[%s421 + $0x18] sm:$0xff]
        %v687 = vld [vmem:[%s421 + $0x20] sm:$0xff]
        %v688 = vld [vmem:[%s421 + $0x28] sm:$0xff]
        %v689 = vld [vmem:[%s421 + $0x30] sm:$0xff]
        %v690 = vld [vmem:[%s421 + $0x38] sm:$0xff]
        %v691 = vld [vmem:[%s421 + $0x40] sm:$0xff]
        %v692 = vld [vmem:[%s421 + $0x48] sm:$0xff]
        %v693 = vld [vmem:[%s421 + $0x50] sm:$0xff]
        %v694 = vld [vmem:[%s421 + $0x58] sm:$0xff]
        %v695 = vld [vmem:[%s421 + $0x60] sm:$0xff]
        %v696 = vld [vmem:[%s421 + $0x68] sm:$0xff]
        %v697 = vld [vmem:[%s421 + $0x70] sm:$0xff]
        %v698 = vld [vmem:[%s421 + $0x78] sm:$0xff]
        %v699 = vld [vmem:[%s421 + $0x80] sm:$0xff]
        %v700 = vld [vmem:[%s421 + $0x88] sm:$0xff]
        %v701 = vld [vmem:[%s421 + $0x90] sm:$0xff]
        %v702 = vld [vmem:[%s421 + $0x98] sm:$0xff]
        %v703 = vld [vmem:[%s421 + $0xa0] sm:$0xff]
        %v704 = vld [vmem:[%s421 + $0xa8] sm:$0xff]
        %v705 = vld [vmem:[%s421 + $0xb0] sm:$0xff]
        %v706 = vld [vmem:[%s421 + $0xb8] sm:$0xff]
        %v707 = vld [vmem:[%s421 + $0xc0] sm:$0xff]
        %v708 = vld [vmem:[%s421 + $0xc8] sm:$0xff]
        %v709 = vld [vmem:[%s421 + $0xd0] sm:$0xff]
        %v710 = vld [vmem:[%s421 + $0xd8] sm:$0xff]
        %v711 = vld [vmem:[%s421 + $0xe0] sm:$0xff]
        %v712 = vld [vmem:[%s421 + $0xe8] sm:$0xff]
        %v713 = vld [vmem:[%s421 + $0xf0] sm:$0xff]
        %v714 = vld [vmem:[%s421 + $0xf8] sm:$0xff]
        %v715 = vld [vmem:[%s421 + $0x100] sm:$0xff]
        %v716 = vld [vmem:[%s421 + $0x108] sm:$0xff]
        %v717 = vld [vmem:[%s421 + $0x110] sm:$0xff]
        %v718 = vld [vmem:[%s421 + $0x118] sm:$0xff]
        %v719 = vld [vmem:[%s421 + $0x120] sm:$0xff]
        %v720 = vld [vmem:[%s421 + $0x128] sm:$0xff]
        %v721 = vld [vmem:[%s421 + $0x130] sm:$0xff]
        %v722 = vld [vmem:[%s421 + $0x138] sm:$0xff]
        %v723 = vld [vmem:[%s421 + $0x140] sm:$0xff]
        %v724 = vld [vmem:[%s421 + $0x148] sm:$0xff]
        %v725 = vld [vmem:[%s421 + $0x150] sm:$0xff]
        %v726 = vld [vmem:[%s421 + $0x158] sm:$0xff]
        %v727 = vld [vmem:[%s421 + $0x160] sm:$0xff]
        %v728 = vld [vmem:[%s421 + $0x168] sm:$0xff]
        %v729 = vld [vmem:[%s421 + $0x170] sm:$0xff]
        %v730 = vld [vmem:[%s421 + $0x178] sm:$0xff]
        %v731 = vlaneseq
        %v732 = vshrl.u32 %v731, 7
        %v733 = vsub.s32 0, %v732
        %v734 = vrot.slane %v664, %v733
        %v735 = vcombine.low %v646, %v672
        %v736 = vcombine.high %v646, %v672
        %v737 = vcombine.high %v679, %v679
        %v739 = vunpack.c.l.s4 1983009808
        %v740 = vunpack.c.0.s8 %v739
        %v741 = vlaneseq
        %v742 = vshrl.u32 %v741, 7
        %v743 = vsub.s32 %v740, %v742
        %v744 = vrot.slane %v735, %v743
        %v746 = vunpack.c.l.s4 1983009808
        %v747 = vunpack.c.0.s8 %v746
        %v748 = vlaneseq
        %v749 = vshrl.u32 %v748, 7
        %v750 = vsub.s32 %v747, %v749
        %v751 = vrot.slane %v736, %v750
        %v753 = vunpack.c.l.s4 1983009808
        %v754 = vunpack.c.0.s8 %v753
        %v755 = vlaneseq
        %v756 = vshrl.u32 %v755, 7
        %v757 = vsub.s32 %v754, %v756
        %v758 = vrot.slane %v679, %v757
        %v760 = vunpack.c.l.s4 1983009808
        %v761 = vunpack.c.0.s8 %v760
        %v762 = vlaneseq
        %v763 = vshrl.u32 %v762, 7
        %v764 = vsub.s32 %v761, %v763
        %v765 = vrot.slane %v737, %v764
        %v766 = vcombine.low %v744, %v758
        %v767 = vcombine.high %v744, %v758
        %v768 = vcombine.low %v751, %v765
        %v769 = vcombine.high %v751, %v765
        %v770 = vcombine.low %v651, %v671
        %v771 = vcombine.high %v651, %v671
        %v772 = vcombine.high %v678, %v678
        %v774 = vunpack.c.l.s4 1983009808
        %v775 = vunpack.c.0.s8 %v774
        %v776 = vlaneseq
        %v777 = vshrl.u32 %v776, 7
        %v778 = vsub.s32 %v775, %v777
        %v779 = vrot.slane %v770, %v778
        %v781 = vunpack.c.l.s4 1983009808
        %v782 = vunpack.c.0.s8 %v781
        %v783 = vlaneseq
        %v784 = vshrl.u32 %v783, 7
        %v785 = vsub.s32 %v782, %v784
        %v786 = vrot.slane %v771, %v785
        %v788 = vunpack.c.l.s4 1983009808
        %v789 = vunpack.c.0.s8 %v788
        %v790 = vlaneseq
        %v791 = vshrl.u32 %v790, 7
        %v792 = vsub.s32 %v789, %v791
        %v793 = vrot.slane %v678, %v792
        %v795 = vunpack.c.l.s4 1983009808
        %v796 = vunpack.c.0.s8 %v795
        %v797 = vlaneseq
        %v798 = vshrl.u32 %v797, 7
        %v799 = vsub.s32 %v796, %v798
        %v800 = vrot.slane %v772, %v799
        %v801 = vcombine.low %v779, %v793
        %v802 = vcombine.high %v779, %v793
        %v803 = vcombine.low %v786, %v800
        %v804 = vcombine.low %v656, %v675
        %v805 = vcombine.high %v656, %v675
        %v806 = vcombine.high %v682, %v682
        %v808 = vunpack.c.l.s4 1983009808
        %v809 = vunpack.c.0.s8 %v808
        %v810 = vlaneseq
        %v811 = vshrl.u32 %v810, 7
        %v812 = vsub.s32 %v809, %v811
        %v813 = vrot.slane %v804, %v812
        %v815 = vunpack.c.l.s4 1983009808
        %v816 = vunpack.c.0.s8 %v815
        %v817 = vlaneseq
        %v818 = vshrl.u32 %v817, 7
        %v819 = vsub.s32 %v816, %v818
        %v820 = vrot.slane %v805, %v819
        %v822 = vunpack.c.l.s4 1983009808
        %v823 = vunpack.c.0.s8 %v822
        %v824 = vlaneseq
        %v825 = vshrl.u32 %v824, 7
        %v826 = vsub.s32 %v823, %v825
        %v827 = vrot.slane %v682, %v826
        %v829 = vunpack.c.l.s4 1983009808
        %v830 = vunpack.c.0.s8 %v829
        %v831 = vlaneseq
        %v832 = vshrl.u32 %v831, 7
        %v833 = vsub.s32 %v830, %v832
        %v834 = vrot.slane %v806, %v833
        %v835 = vcombine.low %v813, %v827
        %v836 = vcombine.high %v813, %v827
        %v837 = vcombine.low %v820, %v834
        %v838 = vcombine.high %v820, %v834
        %v839 = vcombine.low %v661, %v674
        %v840 = vcombine.high %v661, %v674
        %v841 = vcombine.high %v681, %v681
        %v843 = vunpack.c.l.s4 1983009808
        %v844 = vunpack.c.0.s8 %v843
        %v845 = vlaneseq
        %v846 = vshrl.u32 %v845, 7
        %v847 = vsub.s32 %v844, %v846
        %v848 = vrot.slane %v839, %v847
        %v850 = vunpack.c.l.s4 1983009808
        %v851 = vunpack.c.0.s8 %v850
        %v852 = vlaneseq
        %v853 = vshrl.u32 %v852, 7
        %v854 = vsub.s32 %v851, %v853
        %v855 = vrot.slane %v840, %v854
        %v857 = vunpack.c.l.s4 1983009808
        %v858 = vunpack.c.0.s8 %v857
        %v859 = vlaneseq
        %v860 = vshrl.u32 %v859, 7
        %v861 = vsub.s32 %v858, %v860
        %v862 = vrot.slane %v681, %v861
        %v864 = vunpack.c.l.s4 1983009808
        %v865 = vunpack.c.0.s8 %v864
        %v866 = vlaneseq
        %v867 = vshrl.u32 %v866, 7
        %v868 = vsub.s32 %v865, %v867
        %v869 = vrot.slane %v841, %v868
        %v870 = vcombine.low %v848, %v862
        %v871 = vcombine.high %v848, %v862
        %v872 = vcombine.low %v855, %v869
        %v874 = vcombine.high %v734, %v734
        %v876 = vunpack.c.l.s4 1983009808
        %v877 = vunpack.c.0.s8 %v876
        %v878 = vlaneseq
        %v879 = vshrl.u32 %v878, 7
        %v880 = vsub.s32 %v877, %v879
        %v881 = vrot.slane %v734, %v880
        %v883 = vunpack.c.l.s4 1983009808
        %v884 = vunpack.c.0.s8 %v883
        %v885 = vlaneseq
        %v886 = vshrl.u32 %v885, 7
        %v887 = vsub.s32 %v884, %v886
        %v888 = vrot.slane %v874, %v887
        %v889 = vcombine.high %v881, %v881
        %v890 = vcombine.high %v888, %v888
        %v891 = vcombine.low %v766, %v767
        %v892 = vcombine.high %v766, %v767
        %v893 = vcombine.low %v768, %v769
        %v894 = vcombine.high %v768, %v769
        %v896 = vunpack.c.l.s4 1983009808
        %v897 = vunpack.c.0.s8 %v896
        %v898 = vlaneseq
        %v899 = vshrl.u32 %v898, 7
        %v900 = vsub.s32 %v897, %v899
        %v901 = vrot.slane %v891, %v900
        %v903 = vunpack.c.l.s4 1983009808
        %v904 = vunpack.c.0.s8 %v903
        %v905 = vlaneseq
        %v906 = vshrl.u32 %v905, 7
        %v907 = vsub.s32 %v904, %v906
        %v908 = vrot.slane %v892, %v907
        %v910 = vunpack.c.l.s4 1983009808
        %v911 = vunpack.c.0.s8 %v910
        %v912 = vlaneseq
        %v913 = vshrl.u32 %v912, 7
        %v914 = vsub.s32 %v911, %v913
        %v915 = vrot.slane %v893, %v914
        %v917 = vunpack.c.l.s4 1983009808
        %v918 = vunpack.c.0.s8 %v917
        %v919 = vlaneseq
        %v920 = vshrl.u32 %v919, 7
        %v921 = vsub.s32 %v918, %v920
        %v922 = vrot.slane %v894, %v921
        %v923 = vcombine.low %v901, %v915
        %v924 = vcombine.high %v901, %v915
        %v925 = vcombine.low %v908, %v922
        %v926 = vcombine.low %v801, %v802
        %v927 = vcombine.high %v801, %v802
        %v928 = vcombine.low %v803, %v835
        %v929 = vcombine.high %v803, %v835
        %v931 = vunpack.c.l.s4 1983009808
        %v932 = vunpack.c.0.s8 %v931
        %v933 = vlaneseq
        %v934 = vshrl.u32 %v933, 7
        %v935 = vsub.s32 %v932, %v934
        %v936 = vrot.slane %v926, %v935
        %v938 = vunpack.c.l.s4 1983009808
        %v939 = vunpack.c.0.s8 %v938
        %v940 = vlaneseq
        %v941 = vshrl.u32 %v940, 7
        %v942 = vsub.s32 %v939, %v941
        %v943 = vrot.slane %v927, %v942
        %v945 = vunpack.c.l.s4 1983009808
        %v946 = vunpack.c.0.s8 %v945
        %v947 = vlaneseq
        %v948 = vshrl.u32 %v947, 7
        %v949 = vsub.s32 %v946, %v948
        %v950 = vrot.slane %v928, %v949
        %v952 = vunpack.c.l.s4 1983009808
        %v953 = vunpack.c.0.s8 %v952
        %v954 = vlaneseq
        %v955 = vshrl.u32 %v954, 7
        %v956 = vsub.s32 %v953, %v955
        %v957 = vrot.slane %v929, %v956
        %v958 = vcombine.low %v936, %v950
        %v959 = vcombine.high %v936, %v950
        %v960 = vcombine.low %v943, %v957
        %v961 = vcombine.low %v836, %v837
        %v962 = vcombine.high %v836, %v837
        %v963 = vcombine.low %v838, %v870
        %v964 = vcombine.high %v838, %v870
        %v966 = vunpack.c.l.s4 1983009808
        %v967 = vunpack.c.0.s8 %v966
        %v968 = vlaneseq
        %v969 = vshrl.u32 %v968, 7
        %v970 = vsub.s32 %v967, %v969
        %v971 = vrot.slane %v961, %v970
        %v973 = vunpack.c.l.s4 1983009808
        %v974 = vunpack.c.0.s8 %v973
        %v975 = vlaneseq
        %v976 = vshrl.u32 %v975, 7
        %v977 = vsub.s32 %v974, %v976
        %v978 = vrot.slane %v962, %v977
        %v980 = vunpack.c.l.s4 1983009808
        %v981 = vunpack.c.0.s8 %v980
        %v982 = vlaneseq
        %v983 = vshrl.u32 %v982, 7
        %v984 = vsub.s32 %v981, %v983
        %v985 = vrot.slane %v963, %v984
        %v987 = vunpack.c.l.s4 1983009808
        %v988 = vunpack.c.0.s8 %v987
        %v989 = vlaneseq
        %v990 = vshrl.u32 %v989, 7
        %v991 = vsub.s32 %v988, %v990
        %v992 = vrot.slane %v964, %v991
        %v993 = vcombine.low %v971, %v985
        %v994 = vcombine.high %v971, %v985
        %v995 = vcombine.low %v978, %v992
        %v996 = vcombine.low %v871, %v872
        %v997 = vcombine.high %v871, %v872
        %v999 = vunpack.c.l.s4 1983009808
        %v1000 = vunpack.c.0.s8 %v999
        %v1001 = vlaneseq
        %v1002 = vshrl.u32 %v1001, 7
        %v1003 = vsub.s32 %v1000, %v1002
        %v1004 = vrot.slane %v996, %v1003
        %v1006 = vunpack.c.l.s4 1983009808
        %v1007 = vunpack.c.0.s8 %v1006
        %v1008 = vlaneseq
        %v1009 = vshrl.u32 %v1008, 7
        %v1010 = vsub.s32 %v1007, %v1009
        %v1011 = vrot.slane %v997, %v1010
        %v1012 = vcombine.high %v1004, %v1004
        %v1025 = vcombine.low %v881, %v889
        %v1026 = vcombine.low %v888, %v890
        %v1028 = vunpack.c.l.s4 1983009808
        %v1029 = vunpack.c.0.s8 %v1028
        %v1030 = vlaneseq
        %v1031 = vshrl.u32 %v1030, 7
        %v1032 = vsub.s32 %v1029, %v1031
        %v1033 = vrot.slane %v1025, %v1032
        %v1035 = vunpack.c.l.s4 1983009808
        %v1036 = vunpack.c.0.s8 %v1035
        %v1037 = vlaneseq
        %v1038 = vshrl.u32 %v1037, 7
        %v1039 = vsub.s32 %v1036, %v1038
        %v1040 = vrot.slane %v1026, %v1039
        %v1041 = vcombine.low %v1033, %v1040
        %v1042 = vcombine.low %v888, %v881
        %v1044 = vunpack.c.l.s4 1983009808
        %v1045 = vunpack.c.0.s8 %v1044
        %v1046 = vlaneseq
        %v1047 = vshrl.u32 %v1046, 7
        %v1048 = vsub.s32 %v1045, %v1047
        %v1049 = vrot.slane %v1042, %v1048
        %v1050 = vcombine.low %v1033, %v1049
        %v1051 = vcombine.low %v889, %v888
        %v1052 = vcombine.low %v890, %v881
        %v1054 = vunpack.c.l.s4 1983009808
        %v1055 = vunpack.c.0.s8 %v1054
        %v1056 = vlaneseq
        %v1057 = vshrl.u32 %v1056, 7
        %v1058 = vsub.s32 %v1055, %v1057
        %v1059 = vrot.slane %v1051, %v1058
        %v1061 = vunpack.c.l.s4 1983009808
        %v1062 = vunpack.c.0.s8 %v1061
        %v1063 = vlaneseq
        %v1064 = vshrl.u32 %v1063, 7
        %v1065 = vsub.s32 %v1062, %v1064
        %v1066 = vrot.slane %v1052, %v1065
        %v1067 = vcombine.low %v1059, %v1066
        %1072 = vmatprep.subr.mxu0 0.0
        %1073 = vmatpush1.msra.mxu0 %v683
        %1074 = vmatprep.subr.mxu0 0.0
        %1075 = vmatpush1.msra.mxu0 %v684
        %1076 = vmatprep.subr.mxu0 0.0
        %1077 = vmatpush1.msra.mxu0 %v685
        %1078 = vmatprep.subr.mxu0 0.0
        %1079 = vmatpush1.msra.mxu0 %v686
        %1080 = vmatprep.subr.mxu0 0.0
        %1081 = vmatpush1.msra.mxu0 %v687
        %1082 = vmatprep.subr.mxu0 0.0
        %1083 = vmatpush1.msra.mxu0 %v688
        %1084 = vmatprep.subr.mxu0 0.0
        %1085 = vmatpush1.msra.mxu0 %v689
        %1086 = vmatprep.subr.mxu0 0.0
        %1087 = vmatpush1.msra.mxu0 %v690
        %1088 = vmatprep.subr.mxu0 0.0
        %1089 = vmatpush1.msra.mxu0 %v691
        %1090 = vmatprep.subr.mxu0 0.0
        %1091 = vmatpush1.msra.mxu0 %v692
        %1092 = vmatprep.subr.mxu0 0.0
        %1093 = vmatpush1.msra.mxu0 %v693
        %1094 = vmatprep.subr.mxu0 0.0
        %1095 = vmatpush1.msra.mxu0 %v694
        %1096 = vmatprep.subr.mxu0 0.0
        %1097 = vmatpush1.msra.mxu0 %v695
        %1098 = vmatprep.subr.mxu0 0.0
        %1099 = vmatpush1.msra.mxu0 %v696
        %1100 = vmatprep.subr.mxu0 0.0
        %1101 = vmatpush1.msra.mxu0 %v697
        %1102 = vmatprep.subr.mxu0 0.0
        %1103 = vmatpush1.msra.mxu0 %v698
        %1104 = vmatprep.subr.mxu0 0.0
        %1105 = vmatpush1.msra.mxu0 %v699
        %1106 = vmatprep.subr.mxu0 0.0
        %1107 = vmatpush1.msra.mxu0 %v700
        %1108 = vmatprep.subr.mxu0 0.0
        %1109 = vmatpush1.msra.mxu0 %v701
        %1110 = vmatprep.subr.mxu0 0.0
        %1111 = vmatpush1.msra.mxu0 %v702
        %1112 = vmatprep.subr.mxu0 0.0
        %1113 = vmatpush1.msra.mxu0 %v703
        %1114 = vmatprep.subr.mxu0 0.0
        %1115 = vmatpush1.msra.mxu0 %v704
        %1116 = vmatprep.subr.mxu0 0.0
        %1117 = vmatpush1.msra.mxu0 %v705
        %1118 = vmatprep.subr.mxu0 0.0
        %1119 = vmatpush1.msra.mxu0 %v706
        %1120 = vmatprep.subr.mxu0 0.0
        %1121 = vmatpush1.msra.mxu0 %v707
        %1122 = vmatprep.subr.mxu0 0.0
        %1123 = vmatpush1.msra.mxu0 %v708
        %1124 = vmatprep.subr.mxu0 0.0
        %1125 = vmatpush1.msra.mxu0 %v709
        %1126 = vmatprep.subr.mxu0 0.0
        %1127 = vmatpush1.msra.mxu0 %v710
        %1128 = vmatprep.subr.mxu0 0.0
        %1129 = vmatpush1.msra.mxu0 %v711
        %1130 = vmatprep.subr.mxu0 0.0
        %1131 = vmatpush1.msra.mxu0 %v712
        %1132 = vmatprep.subr.mxu0 0.0
        %1133 = vmatpush1.msra.mxu0 %v713
        %1134 = vmatprep.subr.mxu0 0.0
        %1135 = vmatpush1.msra.mxu0 %v714
        %1136 = vmatprep.mubr.f32.mxu0 %v924
        %1137 = vmatmul.mubr.f32.gmra.mrb[0].mxu0 %v923
        %v1138 = vpop.f32.mrb[0].mxu0
        %v1139 = vadd.f32 %v1041, %v1138
        %v1140 = vpop.f32.mrb[0].mxu0
        %1141 = vmatprep.mubr.f32.mxu0 %v959
        %1142 = vmatmul.mubr.f32.gmra.mrb[0].mxu0 %v958
        %v1143 = vpop.f32.mrb[0].mxu0
        %v1144 = vadd.f32 %v1050, %v1143
        %v1145 = vpop.f32.mrb[0].mxu0
        %1146 = vmatprep.mubr.f32.mxu0 %v994
        %1147 = vmatmul.mubr.f32.gmra.mrb[0].mxu0 %v993
        %v1148 = vpop.f32.mrb[0].mxu0
        %v1149 = vadd.f32 %v1067, %v1148
        %v1150 = vpop.f32.mrb[0].mxu0
        %1151 = vmatprep.mubr.f32.mxu0 %v1012
        %1152 = vmatmul.mubr.f32.gmra.mrb[0].mxu0 %v1004
        %v1153 = vpop.f32.mrb[0].mxu0
        %v1154 = vadd.f32 %v1059, %v1153
        %v1155 = vpop.f32.mrb[0].mxu0
        %1156 = vdwg.mxu0
        %1157 = vmatprep.subr.mxu0 0.0
        %1158 = vmatpush1.msra.mxu0 %v715
        %1159 = vmatprep.subr.mxu0 0.0
        %1160 = vmatpush1.msra.mxu0 %v716
        %1161 = vmatprep.subr.mxu0 0.0
        %1162 = vmatpush1.msra.mxu0 %v717
        %1163 = vmatprep.subr.mxu0 0.0
        %1164 = vmatpush1.msra.mxu0 %v718
        %1165 = vmatprep.subr.mxu0 0.0
        %1166 = vmatpush1.msra.mxu0 %v719
        %1167 = vmatprep.subr.mxu0 0.0
        %1168 = vmatpush1.msra.mxu0 %v720
        %1169 = vmatprep.subr.mxu0 0.0
        %1170 = vmatpush1.msra.mxu0 %v721
        %1171 = vmatprep.subr.mxu0 0.0
        %1172 = vmatpush1.msra.mxu0 %v722
        %1173 = vmatprep.subr.mxu0 0.0
        %1174 = vmatpush1.msra.mxu0 %v723
        %1175 = vmatprep.subr.mxu0 0.0
        %1176 = vmatpush1.msra.mxu0 %v724
        %1177 = vmatprep.subr.mxu0 0.0
        %1178 = vmatpush1.msra.mxu0 %v725
        %1179 = vmatprep.subr.mxu0 0.0
        %1180 = vmatpush1.msra.mxu0 %v726
        %1181 = vmatprep.subr.mxu0 0.0
        %1182 = vmatpush1.msra.mxu0 %v727
        %1183 = vmatprep.subr.mxu0 0.0
        %1184 = vmatpush1.msra.mxu0 %v728
        %1185 = vmatprep.subr.mxu0 0.0
        %1186 = vmatpush1.msra.mxu0 %v729
        %1187 = vmatprep.subr.mxu0 0.0
        %1188 = vmatpush1.msra.mxu0 %v730
        %1189 = vmatprep.subr.mxu0 0.0
        %1190 = vmatpush1.msra.mxu0 0.0
        %1191 = vmatprep.subr.mxu0 0.0
        %1192 = vmatpush1.msra.mxu0 0.0
        %1193 = vmatprep.subr.mxu0 0.0
        %1194 = vmatpush1.msra.mxu0 0.0
        %1195 = vmatprep.subr.mxu0 0.0
        %1196 = vmatpush1.msra.mxu0 0.0
        %1197 = vmatprep.subr.mxu0 0.0
        %1198 = vmatpush1.msra.mxu0 0.0
        %1199 = vmatprep.subr.mxu0 0.0
        %1200 = vmatpush1.msra.mxu0 0.0
        %1201 = vmatprep.subr.mxu0 0.0
        %1202 = vmatpush1.msra.mxu0 0.0
        %1203 = vmatprep.subr.mxu0 0.0
        %1204 = vmatpush1.msra.mxu0 0.0
        %1205 = vmatprep.subr.mxu0 0.0
        %1206 = vmatpush1.msra.mxu0 0.0
        %1207 = vmatprep.subr.mxu0 0.0
        %1208 = vmatpush1.msra.mxu0 0.0
        %1209 = vmatprep.subr.mxu0 0.0
        %1210 = vmatpush1.msra.mxu0 0.0
        %1211 = vmatprep.subr.mxu0 0.0
        %1212 = vmatpush1.msra.mxu0 0.0
        %1213 = vmatprep.subr.mxu0 0.0
        %1214 = vmatpush1.msra.mxu0 0.0
        %1215 = vmatprep.subr.mxu0 0.0
        %1216 = vmatpush1.msra.mxu0 0.0
        %1217 = vmatprep.subr.mxu0 0.0
        %1218 = vmatpush1.msra.mxu0 0.0
        %1219 = vmatprep.subr.mxu0 0.0
        %1220 = vmatpush1.msra.mxu0 0.0
        %1221 = vmatprep.mubr.f32.mxu0 0.0
        %1222 = vmatmul.mubr.f32.gmra.mrb[0].mxu0 %v925
        %v1223 = vpop.f32.mrb[0].mxu0
        %v1224 = vadd.f32 %v1139, %v1223
        %v1225 = vpop.f32.mrb[0].mxu0
        %1226 = vmatprep.mubr.f32.mxu0 0.0
        %1227 = vmatmul.mubr.f32.gmra.mrb[0].mxu0 %v960
        %v1228 = vpop.f32.mrb[0].mxu0
        %v1229 = vadd.f32 %v1144, %v1228
        %v1230 = vpop.f32.mrb[0].mxu0
        %1231 = vmatprep.mubr.f32.mxu0 0.0
        %1232 = vmatmul.mubr.f32.gmra.mrb[0].mxu0 %v995
        %v1233 = vpop.f32.mrb[0].mxu0
        %v1234 = vadd.f32 %v1149, %v1233
        %v1235 = vpop.f32.mrb[0].mxu0
        %1236 = vmatprep.mubr.f32.mxu0 0.0
        %1237 = vmatmul.mubr.f32.gmra.mrb[0].mxu0 %v1011
        %v1238 = vpop.f32.mrb[0].mxu0
        %v1239 = vadd.f32 %v1154, %v1238
        %v1240 = vpop.f32.mrb[0].mxu0
        %1241 = vdwg.mxu0
        %v1246 = vcombine.high %v1224, %v1224
        %v1248 = vunpack.c.l.s4 1983009808
        %v1249 = vunpack.c.0.s8 %v1248
        %v1250 = vlaneseq
        %v1251 = vshrl.u32 %v1250, 7
        %v1252 = vsub.s32 %v1249, %v1251
        %v1253 = vrot.slane %v1224, %v1252
        %v1255 = vunpack.c.l.s4 1983009808
        %v1256 = vunpack.c.0.s8 %v1255
        %v1257 = vlaneseq
        %v1258 = vshrl.u32 %v1257, 7
        %v1259 = vsub.s32 %v1256, %v1258
        %v1260 = vrot.slane %v1246, %v1259
        %v1261 = vcombine.high %v1253, %v1253
        %v1262 = vcombine.high %v1260, %v1260
        %v1263 = vcombine.high %v1229, %v1229
        %v1265 = vunpack.c.l.s4 1983009808
        %v1266 = vunpack.c.0.s8 %v1265
        %v1267 = vlaneseq
        %v1268 = vshrl.u32 %v1267, 7
        %v1269 = vsub.s32 %v1266, %v1268
        %v1270 = vrot.slane %v1229, %v1269
        %v1272 = vunpack.c.l.s4 1983009808
        %v1273 = vunpack.c.0.s8 %v1272
        %v1274 = vlaneseq
        %v1275 = vshrl.u32 %v1274, 7
        %v1276 = vsub.s32 %v1273, %v1275
        %v1277 = vrot.slane %v1263, %v1276
        %v1278 = vcombine.high %v1270, %v1270
        %v1279 = vcombine.high %v1277, %v1277
        %v1280 = vcombine.high %v1234, %v1234
        %v1282 = vunpack.c.l.s4 1983009808
        %v1283 = vunpack.c.0.s8 %v1282
        %v1284 = vlaneseq
        %v1285 = vshrl.u32 %v1284, 7
        %v1286 = vsub.s32 %v1283, %v1285
        %v1287 = vrot.slane %v1234, %v1286
        %v1289 = vunpack.c.l.s4 1983009808
        %v1290 = vunpack.c.0.s8 %v1289
        %v1291 = vlaneseq
        %v1292 = vshrl.u32 %v1291, 7
        %v1293 = vsub.s32 %v1290, %v1292
        %v1294 = vrot.slane %v1280, %v1293
        %v1295 = vcombine.high %v1287, %v1287
        %v1296 = vcombine.high %v1294, %v1294
        %v1298 = vunpack.c.l.s4 1983009808
        %v1299 = vunpack.c.0.s8 %v1298
        %v1300 = vlaneseq
        %v1301 = vshrl.u32 %v1300, 7
        %v1302 = vsub.s32 %v1299, %v1301
        %v1303 = vrot.slane %v1239, %v1302
        %v1304 = vcombine.high %v1303, %v1303
        %v1319 = vmax.f32 %v1253, 0.0
        %v1320 = vmax.f32 %v1261, 0.0
        %v1321 = vmax.f32 %v1260, 0.0
        %v1322 = vmax.f32 %v1262, 0.0
        %v1323 = vmax.f32 %v1270, 0.0
        %v1324 = vmax.f32 %v1278, 0.0
        %v1325 = vmax.f32 %v1277, 0.0
        %v1326 = vmax.f32 %v1279, 0.0
        %v1327 = vmax.f32 %v1287, 0.0
        %v1328 = vmax.f32 %v1295, 0.0
        %v1329 = vmax.f32 %v1294, 0.0
        %v1330 = vmax.f32 %v1296, 0.0
        %v1331 = vmax.f32 %v1303, 0.0
        %v1332 = vmax.f32 %v1304, 0.0
        %v1347 = vcombine.low %v1319, %v1320
        %v1348 = vcombine.low %v1321, %v1322
        %v1350 = vunpack.c.l.s4 1983009808
        %v1351 = vunpack.c.0.s8 %v1350
        %v1352 = vlaneseq
        %v1353 = vshrl.u32 %v1352, 7
        %v1354 = vsub.s32 %v1351, %v1353
        %v1355 = vrot.slane %v1347, %v1354
        %v1357 = vunpack.c.l.s4 1983009808
        %v1358 = vunpack.c.0.s8 %v1357
        %v1359 = vlaneseq
        %v1360 = vshrl.u32 %v1359, 7
        %v1361 = vsub.s32 %v1358, %v1360
        %v1362 = vrot.slane %v1348, %v1361
        %v1363 = vcombine.low %v1355, %v1362
        %v1364 = vcombine.low %v1323, %v1324
        %v1366 = vunpack.c.l.s4 1983009808
        %v1367 = vunpack.c.0.s8 %v1366
        %v1368 = vlaneseq
        %v1369 = vshrl.u32 %v1368, 7
        %v1370 = vsub.s32 %v1367, %v1369
        %v1371 = vrot.slane %v1364, %v1370
        %v1373 = vunpack.c.l.s4 1983009808
        %v1374 = vunpack.c.0.s8 %v1373
        %v1375 = vlaneseq
        %v1376 = vshrl.u32 %v1375, 7
        %v1377 = vsub.s32 %v1374, %v1376
        %v1378 = vrot.slane %v1325, %v1377
        %v1379 = vcombine.low %v1371, %v1378
        %v1380 = vcombine.low %v1326, %v1327
        %v1381 = vcombine.low %v1328, %v1329
        %v1383 = vunpack.c.l.s4 1983009808
        %v1384 = vunpack.c.0.s8 %v1383
        %v1385 = vlaneseq
        %v1386 = vshrl.u32 %v1385, 7
        %v1387 = vsub.s32 %v1384, %v1386
        %v1388 = vrot.slane %v1380, %v1387
        %v1390 = vunpack.c.l.s4 1983009808
        %v1391 = vunpack.c.0.s8 %v1390
        %v1392 = vlaneseq
        %v1393 = vshrl.u32 %v1392, 7
        %v1394 = vsub.s32 %v1391, %v1393
        %v1395 = vrot.slane %v1381, %v1394
        %v1396 = vcombine.low %v1388, %v1395
        %v1397 = vcombine.low %v1330, %v1331
        %v1399 = vunpack.c.l.s4 1983009808
        %v1400 = vunpack.c.0.s8 %v1399
        %v1401 = vlaneseq
        %v1402 = vshrl.u32 %v1401, 7
        %v1403 = vsub.s32 %v1400, %v1402
        %v1404 = vrot.slane %v1397, %v1403
        %v1406 = vunpack.c.l.s4 1983009808
        %v1407 = vunpack.c.0.s8 %v1406
        %v1408 = vlaneseq
        %v1409 = vshrl.u32 %v1408, 7
        %v1410 = vsub.s32 %v1407, %v1409
        %v1411 = vrot.slane %v1332, %v1410
        %v1412 = vcombine.low %v1404, %v1411
        %v1417 = vsel %vm676, %v1379, -inf
        %v1418 = vmax.f32 %v1363, %v1417
        %v1419 = vrot.slane %v1418, 4
        %v1420 = vmax.f32 %v1418, %v1419
        %v1421 = vrot.slane %v1420, 2
        %v1422 = vmax.f32 %v1420, %v1421
        %v1423 = vrot.slane %v1422, 1
        %v1424 = vmax.f32 %v1422, %v1423
        %v1425 = vsel %vm676, %v1412, -inf
        %v1426 = vmax.f32 %v1396, %v1425
        %v1427 = vrot.slane %v1426, 4
        %v1428 = vmax.f32 %v1426, %v1427
        %v1429 = vrot.slane %v1428, 2
        %v1430 = vmax.f32 %v1428, %v1429
        %v1431 = vrot.slane %v1430, 1
        %v1432 = vmax.f32 %v1430, %v1431
        %vm1433 = vcmask 1044480
        %v1434 = vrot.slane %v646, 3
        %v1435 = vrot.slane %v651, 3
        %v1436 = vsel %vm1433, %v1434, %v1435
        %v1437 = vrot.slane %v656, 3
        %v1438 = vrot.slane %v661, 3
        %v1439 = vsel %vm1433, %v1437, %v1438
        %v1440 = vld [vmem:[%s430] sm:$0xff]
        %v1441 = vld [vmem:[%s430 + $0x8] sm:$0xff]
        %v1442 = vld [vmem:[%s430 + $0x10] sm:$0xff]
        %v1443 = vld [vmem:[%s430 + $0x18] sm:$0xff]
        %v1444 = vld [vmem:[%s430 + $0x20] sm:$0xff]
        %v1445 = vld [vmem:[%s430 + $0x28] sm:$0xff]
        %v1446 = vld [vmem:[%s430 + $0x30] sm:$0xff]
        %v1447 = vld [vmem:[%s430 + $0x38] sm:$0xff]
        %v1448 = vld [vmem:[%s430 + $0x40] sm:$0xff]
        %v1449 = vld [vmem:[%s430 + $0x48] sm:$0xff]
        %v1450 = vld [vmem:[%s430 + $0x50] sm:$0xff]
        %v1451 = vld [vmem:[%s430 + $0x58] sm:$0xff]
        %v1452 = vld [vmem:[%s430 + $0x60] sm:$0xff]
        %v1453 = vld [vmem:[%s430 + $0x68] sm:$0xff]
        %v1454 = vld [vmem:[%s430 + $0x70] sm:$0xff]
        %v1455 = vld [vmem:[%s430 + $0x78] sm:$0xff]
        %v1456 = vld [vmem:[%s430 + $0x80] sm:$0xff]
        %v1457 = vld [vmem:[%s430 + $0x88] sm:$0xff]
        %v1458 = vld [vmem:[%s430 + $0x90] sm:$0xff]
        %v1459 = vld [vmem:[%s430 + $0x98] sm:$0xff]
        %v1460 = vld [vmem:[%s430 + $0xa0] sm:$0xff]
        %v1461 = vld [vmem:[%s430 + $0xa8] sm:$0xff]
        %v1462 = vld [vmem:[%s430 + $0xb0] sm:$0xff]
        %v1463 = vld [vmem:[%s430 + $0xb8] sm:$0xff]
        %v1464 = vld [vmem:[%s430 + $0xc0] sm:$0xff]
        %v1465 = vld [vmem:[%s430 + $0xc8] sm:$0xff]
        %v1466 = vld [vmem:[%s430 + $0xd0] sm:$0xff]
        %v1467 = vld [vmem:[%s430 + $0xd8] sm:$0xff]
        %v1468 = vld [vmem:[%s430 + $0xe0] sm:$0xff]
        %v1469 = vld [vmem:[%s430 + $0xe8] sm:$0xff]
        %v1470 = vld [vmem:[%s430 + $0xf0] sm:$0xff]
        %v1471 = vld [vmem:[%s430 + $0xf8] sm:$0xff]
        %v1472 = vld [vmem:[%s430 + $0x100] sm:$0xff]
        %v1473 = vld [vmem:[%s430 + $0x108] sm:$0xff]
        %v1474 = vld [vmem:[%s430 + $0x110] sm:$0xff]
        %v1475 = vld [vmem:[%s430 + $0x118] sm:$0xff]
        %v1476 = vld [vmem:[%s430 + $0x120] sm:$0xff]
        %v1477 = vld [vmem:[%s430 + $0x128] sm:$0xff]
        %v1478 = vld [vmem:[%s430 + $0x130] sm:$0xff]
        %v1479 = vld [vmem:[%s430 + $0x138] sm:$0xff]
        %v1480 = vld [vmem:[%s430 + $0x140] sm:$0xff]
        %v1481 = vld [vmem:[%s430 + $0x148] sm:$0xff]
        %v1482 = vld [vmem:[%s430 + $0x150] sm:$0xff]
        %v1483 = vld [vmem:[%s430 + $0x158] sm:$0xff]
        %v1484 = vld [vmem:[%s430 + $0x160] sm:$0xff]
        %v1485 = vld [vmem:[%s430 + $0x168] sm:$0xff]
        %v1486 = vld [vmem:[%s430 + $0x170] sm:$0xff]
        %v1487 = vld [vmem:[%s430 + $0x178] sm:$0xff]
        %v1488 = vld [vmem:[%s430 + $0x180] sm:$0xff]
        %v1489 = vld [vmem:[%s430 + $0x188] sm:$0xff]
        %v1490 = vld [vmem:[%s430 + $0x190] sm:$0xff]
        %v1491 = vld [vmem:[%s430 + $0x198] sm:$0xff]
        %v1492 = vld [vmem:[%s430 + $0x1a0] sm:$0xff]
        %v1493 = vld [vmem:[%s430 + $0x1a8] sm:$0xff]
        %v1494 = vld [vmem:[%s430 + $0x1b0] sm:$0xff]
        %v1495 = vld [vmem:[%s430 + $0x1b8] sm:$0xff]
        %v1496 = vld [vmem:[%s430 + $0x1c0] sm:$0xff]
        %v1497 = vld [vmem:[%s430 + $0x1c8] sm:$0xff]
        %v1498 = vld [vmem:[%s430 + $0x1d0] sm:$0xff]
        %v1499 = vld [vmem:[%s430 + $0x1d8] sm:$0xff]
        %v1500 = vld [vmem:[%s430 + $0x1e0] sm:$0xff]
        %v1501 = vld [vmem:[%s430 + $0x1e8] sm:$0xff]
        %v1502 = vld [vmem:[%s430 + $0x1f0] sm:$0xff]
        %v1503 = vld [vmem:[%s430 + $0x1f8] sm:$0xff]
        %v1504 = vlaneseq
        %v1505 = vshrl.u32 %v1504, 7
        %v1506 = vsub.s32 1, %v1505
        %v1507 = vrot.slane %v664, %v1506
        %v1508 = vcombine.low %v679, %v1436
        %v1509 = vcombine.high %v679, %v1436
        %v1511 = vunpack.c.l.s4 1966171168
        %v1512 = vunpack.c.0.s8 %v1511
        %v1513 = vlaneseq
        %v1514 = vshrl.u32 %v1513, 7
        %v1515 = vsub.s32 %v1512, %v1514
        %v1516 = vrot.slane %v735, %v1515
        %v1518 = vunpack.c.l.s4 1966171168
        %v1519 = vunpack.c.0.s8 %v1518
        %v1520 = vlaneseq
        %v1521 = vshrl.u32 %v1520, 7
        %v1522 = vsub.s32 %v1519, %v1521
        %v1523 = vrot.slane %v736, %v1522
        %v1525 = vunpack.c.l.s4 1966171168
        %v1526 = vunpack.c.0.s8 %v1525
        %v1527 = vlaneseq
        %v1528 = vshrl.u32 %v1527, 7
        %v1529 = vsub.s32 %v1526, %v1528
        %v1530 = vrot.slane %v1508, %v1529
        %v1532 = vunpack.c.l.s4 1966171168
        %v1533 = vunpack.c.0.s8 %v1532
        %v1534 = vlaneseq
        %v1535 = vshrl.u32 %v1534, 7
        %v1536 = vsub.s32 %v1533, %v1535
        %v1537 = vrot.slane %v1509, %v1536
        %v1538 = vcombine.low %v1516, %v1530
        %v1539 = vcombine.high %v1516, %v1530
        %v1540 = vcombine.low %v1523, %v1537
        %v1541 = vcombine.high %v1523, %v1537
        %v1543 = vunpack.c.l.s4 1966171168
        %v1544 = vunpack.c.0.s8 %v1543
        %v1545 = vlaneseq
        %v1546 = vshrl.u32 %v1545, 7
        %v1547 = vsub.s32 %v1544, %v1546
        %v1548 = vrot.slane %v1538, %v1547
        %v1550 = vunpack.c.l.s4 1966171168
        %v1551 = vunpack.c.0.s8 %v1550
        %v1552 = vlaneseq
        %v1553 = vshrl.u32 %v1552, 7
        %v1554 = vsub.s32 %v1551, %v1553
        %v1555 = vrot.slane %v1540, %v1554
        %v1557 = vunpack.c.l.s4 1966171168
        %v1558 = vunpack.c.0.s8 %v1557
        %v1559 = vlaneseq
        %v1560 = vshrl.u32 %v1559, 7
        %v1561 = vsub.s32 %v1558, %v1560
        %v1562 = vrot.slane %v1539, %v1561
        %v1564 = vunpack.c.l.s4 1966171168
        %v1565 = vunpack.c.0.s8 %v1564
        %v1566 = vlaneseq
        %v1567 = vshrl.u32 %v1566, 7
        %v1568 = vsub.s32 %v1565, %v1567
        %v1569 = vrot.slane %v1541, %v1568
        %v1570 = vcombine.high %v1548, %v1548
        %v1571 = vcombine.high %v1555, %v1555
        %v1572 = vcombine.high %v1562, %v1562
        %v1573 = vcombine.high %v1569, %v1569
        %v1574 = vcombine.low %v678, %v1435
        %v1575 = vcombine.high %v678, %v1435
        %v1577 = vunpack.c.l.s4 1966171168
        %v1578 = vunpack.c.0.s8 %v1577
        %v1579 = vlaneseq
        %v1580 = vshrl.u32 %v1579, 7
        %v1581 = vsub.s32 %v1578, %v1580
        %v1582 = vrot.slane %v770, %v1581
        %v1584 = vunpack.c.l.s4 1966171168
        %v1585 = vunpack.c.0.s8 %v1584
        %v1586 = vlaneseq
        %v1587 = vshrl.u32 %v1586, 7
        %v1588 = vsub.s32 %v1585, %v1587
        %v1589 = vrot.slane %v771, %v1588
        %v1591 = vunpack.c.l.s4 1966171168
        %v1592 = vunpack.c.0.s8 %v1591
        %v1593 = vlaneseq
        %v1594 = vshrl.u32 %v1593, 7
        %v1595 = vsub.s32 %v1592, %v1594
        %v1596 = vrot.slane %v1574, %v1595
        %v1598 = vunpack.c.l.s4 1966171168
        %v1599 = vunpack.c.0.s8 %v1598
        %v1600 = vlaneseq
        %v1601 = vshrl.u32 %v1600, 7
        %v1602 = vsub.s32 %v1599, %v1601
        %v1603 = vrot.slane %v1575, %v1602
        %v1604 = vcombine.low %v1582, %v1596
        %v1605 = vcombine.high %v1582, %v1596
        %v1606 = vcombine.low %v1589, %v1603
        %v1608 = vunpack.c.l.s4 1966171168
        %v1609 = vunpack.c.0.s8 %v1608
        %v1610 = vlaneseq
        %v1611 = vshrl.u32 %v1610, 7
        %v1612 = vsub.s32 %v1609, %v1611
        %v1613 = vrot.slane %v1604, %v1612
        %v1615 = vunpack.c.l.s4 1966171168
        %v1616 = vunpack.c.0.s8 %v1615
        %v1617 = vlaneseq
        %v1618 = vshrl.u32 %v1617, 7
        %v1619 = vsub.s32 %v1616, %v1618
        %v1620 = vrot.slane %v1606, %v1619
        %v1622 = vunpack.c.l.s4 1966171168
        %v1623 = vunpack.c.0.s8 %v1622
        %v1624 = vlaneseq
        %v1625 = vshrl.u32 %v1624, 7
        %v1626 = vsub.s32 %v1623, %v1625
        %v1627 = vrot.slane %v1605, %v1626
        %v1628 = vcombine.high %v1613, %v1613
        %v1629 = vcombine.high %v1627, %v1627
        %v1630 = vcombine.low %v682, %v1439
        %v1631 = vcombine.high %v682, %v1439
        %v1633 = vunpack.c.l.s4 1966171168
        %v1634 = vunpack.c.0.s8 %v1633
        %v1635 = vlaneseq
        %v1636 = vshrl.u32 %v1635, 7
        %v1637 = vsub.s32 %v1634, %v1636
        %v1638 = vrot.slane %v804, %v1637
        %v1640 = vunpack.c.l.s4 1966171168
        %v1641 = vunpack.c.0.s8 %v1640
        %v1642 = vlaneseq
        %v1643 = vshrl.u32 %v1642, 7
        %v1644 = vsub.s32 %v1641, %v1643
        %v1645 = vrot.slane %v805, %v1644
        %v1647 = vunpack.c.l.s4 1966171168
        %v1648 = vunpack.c.0.s8 %v1647
        %v1649 = vlaneseq
        %v1650 = vshrl.u32 %v1649, 7
        %v1651 = vsub.s32 %v1648, %v1650
        %v1652 = vrot.slane %v1630, %v1651
        %v1654 = vunpack.c.l.s4 1966171168
        %v1655 = vunpack.c.0.s8 %v1654
        %v1656 = vlaneseq
        %v1657 = vshrl.u32 %v1656, 7
        %v1658 = vsub.s32 %v1655, %v1657
        %v1659 = vrot.slane %v1631, %v1658
        %v1660 = vcombine.low %v1638, %v1652
        %v1661 = vcombine.high %v1638, %v1652
        %v1662 = vcombine.low %v1645, %v1659
        %v1663 = vcombine.high %v1645, %v1659
        %v1665 = vunpack.c.l.s4 1966171168
        %v1666 = vunpack.c.0.s8 %v1665
        %v1667 = vlaneseq
        %v1668 = vshrl.u32 %v1667, 7
        %v1669 = vsub.s32 %v1666, %v1668
        %v1670 = vrot.slane %v1660, %v1669
        %v1672 = vunpack.c.l.s4 1966171168
        %v1673 = vunpack.c.0.s8 %v1672
        %v1674 = vlaneseq
        %v1675 = vshrl.u32 %v1674, 7
        %v1676 = vsub.s32 %v1673, %v1675
        %v1677 = vrot.slane %v1662, %v1676
        %v1679 = vunpack.c.l.s4 1966171168
        %v1680 = vunpack.c.0.s8 %v1679
        %v1681 = vlaneseq
        %v1682 = vshrl.u32 %v1681, 7
        %v1683 = vsub.s32 %v1680, %v1682
        %v1684 = vrot.slane %v1661, %v1683
        %v1686 = vunpack.c.l.s4 1966171168
        %v1687 = vunpack.c.0.s8 %v1686
        %v1688 = vlaneseq
        %v1689 = vshrl.u32 %v1688, 7
        %v1690 = vsub.s32 %v1687, %v1689
        %v1691 = vrot.slane %v1663, %v1690
        %v1692 = vcombine.high %v1670, %v1670
        %v1693 = vcombine.high %v1677, %v1677
        %v1694 = vcombine.high %v1684, %v1684
        %v1695 = vcombine.high %v1691, %v1691
        %v1696 = vcombine.low %v681, %v1438
        %v1697 = vcombine.high %v681, %v1438
        %v1699 = vunpack.c.l.s4 1966171168
        %v1700 = vunpack.c.0.s8 %v1699
        %v1701 = vlaneseq
        %v1702 = vshrl.u32 %v1701, 7
        %v1703 = vsub.s32 %v1700, %v1702
        %v1704 = vrot.slane %v839, %v1703
        %v1706 = vunpack.c.l.s4 1966171168
        %v1707 = vunpack.c.0.s8 %v1706
        %v1708 = vlaneseq
        %v1709 = vshrl.u32 %v1708, 7
        %v1710 = vsub.s32 %v1707, %v1709
        %v1711 = vrot.slane %v840, %v1710
        %v1713 = vunpack.c.l.s4 1966171168
        %v1714 = vunpack.c.0.s8 %v1713
        %v1715 = vlaneseq
        %v1716 = vshrl.u32 %v1715, 7
        %v1717 = vsub.s32 %v1714, %v1716
        %v1718 = vrot.slane %v1696, %v1717
        %v1720 = vunpack.c.l.s4 1966171168
        %v1721 = vunpack.c.0.s8 %v1720
        %v1722 = vlaneseq
        %v1723 = vshrl.u32 %v1722, 7
        %v1724 = vsub.s32 %v1721, %v1723
        %v1725 = vrot.slane %v1697, %v1724
        %v1726 = vcombine.low %v1704, %v1718
        %v1727 = vcombine.high %v1704, %v1718
        %v1728 = vcombine.low %v1711, %v1725
        %v1730 = vunpack.c.l.s4 1966171168
        %v1731 = vunpack.c.0.s8 %v1730
        %v1732 = vlaneseq
        %v1733 = vshrl.u32 %v1732, 7
        %v1734 = vsub.s32 %v1731, %v1733
        %v1735 = vrot.slane %v1726, %v1734
        %v1737 = vunpack.c.l.s4 1966171168
        %v1738 = vunpack.c.0.s8 %v1737
        %v1739 = vlaneseq
        %v1740 = vshrl.u32 %v1739, 7
        %v1741 = vsub.s32 %v1738, %v1740
        %v1742 = vrot.slane %v1728, %v1741
        %v1744 = vunpack.c.l.s4 1966171168
        %v1745 = vunpack.c.0.s8 %v1744
        %v1746 = vlaneseq
        %v1747 = vshrl.u32 %v1746, 7
        %v1748 = vsub.s32 %v1745, %v1747
        %v1749 = vrot.slane %v1727, %v1748
        %v1750 = vcombine.high %v1735, %v1735
        %v1751 = vcombine.high %v1749, %v1749
        %v1753 = vcombine.high %v1507, %v1507
        %v1755 = vunpack.c.l.s4 1966171168
        %v1756 = vunpack.c.0.s8 %v1755
        %v1757 = vlaneseq
        %v1758 = vshrl.u32 %v1757, 7
        %v1759 = vsub.s32 %v1756, %v1758
        %v1760 = vrot.slane %v1507, %v1759
        %v1762 = vunpack.c.l.s4 1966171168
        %v1763 = vunpack.c.0.s8 %v1762
        %v1764 = vlaneseq
        %v1765 = vshrl.u32 %v1764, 7
        %v1766 = vsub.s32 %v1763, %v1765
        %v1767 = vrot.slane %v1753, %v1766
        %v1768 = vcombine.high %v1760, %v1760
        %v1769 = vcombine.high %v1767, %v1767
        %v1771 = vunpack.c.l.s4 1966171168
        %v1772 = vunpack.c.0.s8 %v1771
        %v1773 = vlaneseq
        %v1774 = vshrl.u32 %v1773, 7
        %v1775 = vsub.s32 %v1772, %v1774
        %v1776 = vrot.slane %v1760, %v1775
        %v1778 = vunpack.c.l.s4 1966171168
        %v1779 = vunpack.c.0.s8 %v1778
        %v1780 = vlaneseq
        %v1781 = vshrl.u32 %v1780, 7
        %v1782 = vsub.s32 %v1779, %v1781
        %v1783 = vrot.slane %v1767, %v1782
        %v1785 = vunpack.c.l.s4 1966171168
        %v1786 = vunpack.c.0.s8 %v1785
        %v1787 = vlaneseq
        %v1788 = vshrl.u32 %v1787, 7
        %v1789 = vsub.s32 %v1786, %v1788
        %v1790 = vrot.slane %v1768, %v1789
        %v1792 = vunpack.c.l.s4 1966171168
        %v1793 = vunpack.c.0.s8 %v1792
        %v1794 = vlaneseq
        %v1795 = vshrl.u32 %v1794, 7
        %v1796 = vsub.s32 %v1793, %v1795
        %v1797 = vrot.slane %v1769, %v1796
        %v1798 = vcombine.high %v1776, %v1776
        %v1799 = vcombine.high %v1783, %v1783
        %v1800 = vcombine.high %v1790, %v1790
        %v1801 = vcombine.high %v1797, %v1797
        %v1802 = vcombine.low %v1548, %v1562
        %v1803 = vcombine.low %v1570, %v1572
        %v1804 = vcombine.low %v1555, %v1569
        %v1805 = vcombine.low %v1571, %v1573
        %v1807 = vunpack.c.l.s4 1966171168
        %v1808 = vunpack.c.0.s8 %v1807
        %v1809 = vlaneseq
        %v1810 = vshrl.u32 %v1809, 7
        %v1811 = vsub.s32 %v1808, %v1810
        %v1812 = vrot.slane %v1802, %v1811
        %v1814 = vunpack.c.l.s4 1966171168
        %v1815 = vunpack.c.0.s8 %v1814
        %v1816 = vlaneseq
        %v1817 = vshrl.u32 %v1816, 7
        %v1818 = vsub.s32 %v1815, %v1817
        %v1819 = vrot.slane %v1803, %v1818
        %v1821 = vunpack.c.l.s4 1966171168
        %v1822 = vunpack.c.0.s8 %v1821
        %v1823 = vlaneseq
        %v1824 = vshrl.u32 %v1823, 7
        %v1825 = vsub.s32 %v1822, %v1824
        %v1826 = vrot.slane %v1804, %v1825
        %v1828 = vunpack.c.l.s4 1966171168
        %v1829 = vunpack.c.0.s8 %v1828
        %v1830 = vlaneseq
        %v1831 = vshrl.u32 %v1830, 7
        %v1832 = vsub.s32 %v1829, %v1831
        %v1833 = vrot.slane %v1805, %v1832
        %v1834 = vcombine.low %v1812, %v1819
        %v1835 = vcombine.high %v1812, %v1819
        %v1836 = vcombine.low %v1826, %v1833
        %v1837 = vcombine.high %v1826, %v1833
        %v1839 = vunpack.c.l.s4 1966171168
        %v1840 = vunpack.c.0.s8 %v1839
        %v1841 = vlaneseq
        %v1842 = vshrl.u32 %v1841, 7
        %v1843 = vsub.s32 %v1840, %v1842
        %v1844 = vrot.slane %v1834, %v1843
        %v1846 = vunpack.c.l.s4 1966171168
        %v1847 = vunpack.c.0.s8 %v1846
        %v1848 = vlaneseq
        %v1849 = vshrl.u32 %v1848, 7
        %v1850 = vsub.s32 %v1847, %v1849
        %v1851 = vrot.slane %v1835, %v1850
        %v1853 = vunpack.c.l.s4 1966171168
        %v1854 = vunpack.c.0.s8 %v1853
        %v1855 = vlaneseq
        %v1856 = vshrl.u32 %v1855, 7
        %v1857 = vsub.s32 %v1854, %v1856
        %v1858 = vrot.slane %v1836, %v1857
        %v1860 = vunpack.c.l.s4 1966171168
        %v1861 = vunpack.c.0.s8 %v1860
        %v1862 = vlaneseq
        %v1863 = vshrl.u32 %v1862, 7
        %v1864 = vsub.s32 %v1861, %v1863
        %v1865 = vrot.slane %v1837, %v1864
        %v1866 = vcombine.low %v1844, %v1858
        %v1867 = vcombine.high %v1844, %v1858
        %v1868 = vcombine.low %v1851, %v1865
        %v1869 = vcombine.high %v1851, %v1865
        %v1870 = vcombine.low %v1613, %v1627
        %v1871 = vcombine.low %v1628, %v1629
        %v1872 = vcombine.low %v1620, %v1670
        %v1873 = vcombine.low %v1684, %v1692
        %v1875 = vunpack.c.l.s4 1966171168
        %v1876 = vunpack.c.0.s8 %v1875
        %v1877 = vlaneseq
        %v1878 = vshrl.u32 %v1877, 7
        %v1879 = vsub.s32 %v1876, %v1878
        %v1880 = vrot.slane %v1870, %v1879
        %v1882 = vunpack.c.l.s4 1966171168
        %v1883 = vunpack.c.0.s8 %v1882
        %v1884 = vlaneseq
        %v1885 = vshrl.u32 %v1884, 7
        %v1886 = vsub.s32 %v1883, %v1885
        %v1887 = vrot.slane %v1871, %v1886
        %v1889 = vunpack.c.l.s4 1966171168
        %v1890 = vunpack.c.0.s8 %v1889
        %v1891 = vlaneseq
        %v1892 = vshrl.u32 %v1891, 7
        %v1893 = vsub.s32 %v1890, %v1892
        %v1894 = vrot.slane %v1872, %v1893
        %v1896 = vunpack.c.l.s4 1966171168
        %v1897 = vunpack.c.0.s8 %v1896
        %v1898 = vlaneseq
        %v1899 = vshrl.u32 %v1898, 7
        %v1900 = vsub.s32 %v1897, %v1899
        %v1901 = vrot.slane %v1873, %v1900
        %v1902 = vcombine.low %v1880, %v1887
        %v1903 = vcombine.high %v1880, %v1887
        %v1904 = vcombine.low %v1894, %v1901
        %v1905 = vcombine.high %v1894, %v1901
        %v1907 = vunpack.c.l.s4 1966171168
        %v1908 = vunpack.c.0.s8 %v1907
        %v1909 = vlaneseq
        %v1910 = vshrl.u32 %v1909, 7
        %v1911 = vsub.s32 %v1908, %v1910
        %v1912 = vrot.slane %v1902, %v1911
        %v1914 = vunpack.c.l.s4 1966171168
        %v1915 = vunpack.c.0.s8 %v1914
        %v1916 = vlaneseq
        %v1917 = vshrl.u32 %v1916, 7
        %v1918 = vsub.s32 %v1915, %v1917
        %v1919 = vrot.slane %v1903, %v1918
        %v1921 = vunpack.c.l.s4 1966171168
        %v1922 = vunpack.c.0.s8 %v1921
        %v1923 = vlaneseq
        %v1924 = vshrl.u32 %v1923, 7
        %v1925 = vsub.s32 %v1922, %v1924
        %v1926 = vrot.slane %v1904, %v1925
        %v1928 = vunpack.c.l.s4 1966171168
        %v1929 = vunpack.c.0.s8 %v1928
        %v1930 = vlaneseq
        %v1931 = vshrl.u32 %v1930, 7
        %v1932 = vsub.s32 %v1929, %v1931
        %v1933 = vrot.slane %v1905, %v1932
        %v1934 = vcombine.low %v1912, %v1926
        %v1935 = vcombine.high %v1912, %v1926
        %v1936 = vcombine.low %v1919, %v1933
        %v1937 = vcombine.high %v1919, %v1933
        %v1938 = vcombine.low %v1694, %v1677
        %v1939 = vcombine.low %v1691, %v1693
        %v1940 = vcombine.low %v1695, %v1735
        %v1941 = vcombine.low %v1749, %v1750
        %v1943 = vunpack.c.l.s4 1966171168
        %v1944 = vunpack.c.0.s8 %v1943
        %v1945 = vlaneseq
        %v1946 = vshrl.u32 %v1945, 7
        %v1947 = vsub.s32 %v1944, %v1946
        %v1948 = vrot.slane %v1938, %v1947
        %v1950 = vunpack.c.l.s4 1966171168
        %v1951 = vunpack.c.0.s8 %v1950
        %v1952 = vlaneseq
        %v1953 = vshrl.u32 %v1952, 7
        %v1954 = vsub.s32 %v1951, %v1953
        %v1955 = vrot.slane %v1939, %v1954
        %v1957 = vunpack.c.l.s4 1966171168
        %v1958 = vunpack.c.0.s8 %v1957
        %v1959 = vlaneseq
        %v1960 = vshrl.u32 %v1959, 7
        %v1961 = vsub.s32 %v1958, %v1960
        %v1962 = vrot.slane %v1940, %v1961
        %v1964 = vunpack.c.l.s4 1966171168
        %v1965 = vunpack.c.0.s8 %v1964
        %v1966 = vlaneseq
        %v1967 = vshrl.u32 %v1966, 7
        %v1968 = vsub.s32 %v1965, %v1967
        %v1969 = vrot.slane %v1941, %v1968
        %v1970 = vcombine.low %v1948, %v1955
        %v1971 = vcombine.high %v1948, %v1955
        %v1972 = vcombine.low %v1962, %v1969
        %v1973 = vcombine.high %v1962, %v1969
        %v1975 = vunpack.c.l.s4 1966171168
        %v1976 = vunpack.c.0.s8 %v1975
        %v1977 = vlaneseq
        %v1978 = vshrl.u32 %v1977, 7
        %v1979 = vsub.s32 %v1976, %v1978
        %v1980 = vrot.slane %v1970, %v1979
        %v1982 = vunpack.c.l.s4 1966171168
        %v1983 = vunpack.c.0.s8 %v1982
        %v1984 = vlaneseq
        %v1985 = vshrl.u32 %v1984, 7
        %v1986 = vsub.s32 %v1983, %v1985
        %v1987 = vrot.slane %v1971, %v1986
        %v1989 = vunpack.c.l.s4 1966171168
        %v1990 = vunpack.c.0.s8 %v1989
        %v1991 = vlaneseq
        %v1992 = vshrl.u32 %v1991, 7
        %v1993 = vsub.s32 %v1990, %v1992
        %v1994 = vrot.slane %v1972, %v1993
        %v1996 = vunpack.c.l.s4 1966171168
        %v1997 = vunpack.c.0.s8 %v1996
        %v1998 = vlaneseq
        %v1999 = vshrl.u32 %v1998, 7
        %v2000 = vsub.s32 %v1997, %v1999
        %v2001 = vrot.slane %v1973, %v2000
        %v2002 = vcombine.low %v1980, %v1994
        %v2003 = vcombine.high %v1980, %v1994
        %v2004 = vcombine.low %v1987, %v2001
        %v2005 = vcombine.high %v1987, %v2001
        %v2006 = vcombine.low %v1751, %v1742
        %v2008 = vunpack.c.l.s4 1966171168
        %v2009 = vunpack.c.0.s8 %v2008
        %v2010 = vlaneseq
        %v2011 = vshrl.u32 %v2010, 7
        %v2012 = vsub.s32 %v2009, %v2011
        %v2013 = vrot.slane %v2006, %v2012
        %v2014 = vcombine.high %v2013, %v2013
        %v2016 = vunpack.c.l.s4 1966171168
        %v2017 = vunpack.c.0.s8 %v2016
        %v2018 = vlaneseq
        %v2019 = vshrl.u32 %v2018, 7
        %v2020 = vsub.s32 %v2017, %v2019
        %v2021 = vrot.slane %v2013, %v2020
        %v2023 = vunpack.c.l.s4 1966171168
        %v2024 = vunpack.c.0.s8 %v2023
        %v2025 = vlaneseq
        %v2026 = vshrl.u32 %v2025, 7
        %v2027 = vsub.s32 %v2024, %v2026
        %v2028 = vrot.slane %v2014, %v2027
        %v2029 = vcombine.high %v2021, %v2021
        %v2030 = vcombine.high %v2028, %v2028
        %v2047 = vcombine.low %v1776, %v1790
        %v2048 = vcombine.low %v1798, %v1800
        %v2049 = vcombine.low %v1783, %v1797
        %v2050 = vcombine.low %v1799, %v1801
        %v2052 = vunpack.c.l.s4 1966171168
        %v2053 = vunpack.c.0.s8 %v2052
        %v2054 = vlaneseq
        %v2055 = vshrl.u32 %v2054, 7
        %v2056 = vsub.s32 %v2053, %v2055
        %v2057 = vrot.slane %v2047, %v2056
        %v2059 = vunpack.c.l.s4 1966171168
        %v2060 = vunpack.c.0.s8 %v2059
        %v2061 = vlaneseq
        %v2062 = vshrl.u32 %v2061, 7
        %v2063 = vsub.s32 %v2060, %v2062
        %v2064 = vrot.slane %v2048, %v2063
        %v2066 = vunpack.c.l.s4 1966171168
        %v2067 = vunpack.c.0.s8 %v2066
        %v2068 = vlaneseq
        %v2069 = vshrl.u32 %v2068, 7
        %v2070 = vsub.s32 %v2067, %v2069
        %v2071 = vrot.slane %v2049, %v2070
        %v2073 = vunpack.c.l.s4 1966171168
        %v2074 = vunpack.c.0.s8 %v2073
        %v2075 = vlaneseq
        %v2076 = vshrl.u32 %v2075, 7
        %v2077 = vsub.s32 %v2074, %v2076
        %v2078 = vrot.slane %v2050, %v2077
        %v2079 = vcombine.low %v2057, %v2064
        %v2080 = vcombine.low %v2071, %v2078
        %v2082 = vunpack.c.l.s4 1966171168
        %v2083 = vunpack.c.0.s8 %v2082
        %v2084 = vlaneseq
        %v2085 = vshrl.u32 %v2084, 7
        %v2086 = vsub.s32 %v2083, %v2085
        %v2087 = vrot.slane %v2079, %v2086
        %v2089 = vunpack.c.l.s4 1966171168
        %v2090 = vunpack.c.0.s8 %v2089
        %v2091 = vlaneseq
        %v2092 = vshrl.u32 %v2091, 7
        %v2093 = vsub.s32 %v2090, %v2092
        %v2094 = vrot.slane %v2080, %v2093
        %v2095 = vcombine.low %v2087, %v2094
        %v2096 = vcombine.low %v1783, %v1776
        %v2097 = vcombine.low %v1790, %v1798
        %v2099 = vunpack.c.l.s4 1966171168
        %v2100 = vunpack.c.0.s8 %v2099
        %v2101 = vlaneseq
        %v2102 = vshrl.u32 %v2101, 7
        %v2103 = vsub.s32 %v2100, %v2102
        %v2104 = vrot.slane %v2096, %v2103
        %v2106 = vunpack.c.l.s4 1966171168
        %v2107 = vunpack.c.0.s8 %v2106
        %v2108 = vlaneseq
        %v2109 = vshrl.u32 %v2108, 7
        %v2110 = vsub.s32 %v2107, %v2109
        %v2111 = vrot.slane %v2097, %v2110
        %v2112 = vcombine.low %v2104, %v2111
        %v2114 = vunpack.c.l.s4 1966171168
        %v2115 = vunpack.c.0.s8 %v2114
        %v2116 = vlaneseq
        %v2117 = vshrl.u32 %v2116, 7
        %v2118 = vsub.s32 %v2115, %v2117
        %v2119 = vrot.slane %v2112, %v2118
        %v2120 = vcombine.low %v2087, %v2119
        %v2121 = vcombine.low %v1800, %v1783
        %v2122 = vcombine.low %v1797, %v1799
        %v2123 = vcombine.low %v1801, %v1776
        %v2125 = vunpack.c.l.s4 1966171168
        %v2126 = vunpack.c.0.s8 %v2125
        %v2127 = vlaneseq
        %v2128 = vshrl.u32 %v2127, 7
        %v2129 = vsub.s32 %v2126, %v2128
        %v2130 = vrot.slane %v2121, %v2129
        %v2132 = vunpack.c.l.s4 1966171168
        %v2133 = vunpack.c.0.s8 %v2132
        %v2134 = vlaneseq
        %v2135 = vshrl.u32 %v2134, 7
        %v2136 = vsub.s32 %v2133, %v2135
        %v2137 = vrot.slane %v2122, %v2136
        %v2139 = vunpack.c.l.s4 1966171168
        %v2140 = vunpack.c.0.s8 %v2139
        %v2141 = vlaneseq
        %v2142 = vshrl.u32 %v2141, 7
        %v2143 = vsub.s32 %v2140, %v2142
        %v2144 = vrot.slane %v2123, %v2143
        %v2145 = vcombine.low %v2130, %v2137
        %v2146 = vcombine.low %v2144, %v2111
        %v2148 = vunpack.c.l.s4 1966171168
        %v2149 = vunpack.c.0.s8 %v2148
        %v2150 = vlaneseq
        %v2151 = vshrl.u32 %v2150, 7
        %v2152 = vsub.s32 %v2149, %v2151
        %v2153 = vrot.slane %v2145, %v2152
        %v2155 = vunpack.c.l.s4 1966171168
        %v2156 = vunpack.c.0.s8 %v2155
        %v2157 = vlaneseq
        %v2158 = vshrl.u32 %v2157, 7
        %v2159 = vsub.s32 %v2156, %v2158
        %v2160 = vrot.slane %v2146, %v2159
        %v2161 = vcombine.low %v2153, %v2160
        %v2163 = vunpack.c.l.s4 1966171168
        %v2164 = vunpack.c.0.s8 %v2163
        %v2165 = vlaneseq
        %v2166 = vshrl.u32 %v2165, 7
        %v2167 = vsub.s32 %v2164, %v2166
        %v2168 = vrot.slane %v2130, %v2167
        %2173 = vmatprep.subr.mxu0 0.0
        %2174 = vmatpush1.msra.mxu0 %v1440
        %2175 = vmatprep.subr.mxu0 0.0
        %2176 = vmatpush1.msra.mxu0 %v1441
        %2177 = vmatprep.subr.mxu0 0.0
        %2178 = vmatpush1.msra.mxu0 %v1442
        %2179 = vmatprep.subr.mxu0 0.0
        %2180 = vmatpush1.msra.mxu0 %v1443
        %2181 = vmatprep.subr.mxu0 0.0
        %2182 = vmatpush1.msra.mxu0 %v1444
        %2183 = vmatprep.subr.mxu0 0.0
        %2184 = vmatpush1.msra.mxu0 %v1445
        %2185 = vmatprep.subr.mxu0 0.0
        %2186 = vmatpush1.msra.mxu0 %v1446
        %2187 = vmatprep.subr.mxu0 0.0
        %2188 = vmatpush1.msra.mxu0 %v1447
        %2189 = vmatprep.subr.mxu0 0.0
        %2190 = vmatpush1.msra.mxu0 %v1448
        %2191 = vmatprep.subr.mxu0 0.0
        %2192 = vmatpush1.msra.mxu0 %v1449
        %2193 = vmatprep.subr.mxu0 0.0
        %2194 = vmatpush1.msra.mxu0 %v1450
        %2195 = vmatprep.subr.mxu0 0.0
        %2196 = vmatpush1.msra.mxu0 %v1451
        %2197 = vmatprep.subr.mxu0 0.0
        %2198 = vmatpush1.msra.mxu0 %v1452
        %2199 = vmatprep.subr.mxu0 0.0
        %2200 = vmatpush1.msra.mxu0 %v1453
        %2201 = vmatprep.subr.mxu0 0.0
        %2202 = vmatpush1.msra.mxu0 %v1454
        %2203 = vmatprep.subr.mxu0 0.0
        %2204 = vmatpush1.msra.mxu0 %v1455
        %2205 = vmatprep.subr.mxu0 0.0
        %2206 = vmatpush1.msra.mxu0 %v1456
        %2207 = vmatprep.subr.mxu0 0.0
        %2208 = vmatpush1.msra.mxu0 %v1457
        %2209 = vmatprep.subr.mxu0 0.0
        %2210 = vmatpush1.msra.mxu0 %v1458
        %2211 = vmatprep.subr.mxu0 0.0
        %2212 = vmatpush1.msra.mxu0 %v1459
        %2213 = vmatprep.subr.mxu0 0.0
        %2214 = vmatpush1.msra.mxu0 %v1460
        %2215 = vmatprep.subr.mxu0 0.0
        %2216 = vmatpush1.msra.mxu0 %v1461
        %2217 = vmatprep.subr.mxu0 0.0
        %2218 = vmatpush1.msra.mxu0 %v1462
        %2219 = vmatprep.subr.mxu0 0.0
        %2220 = vmatpush1.msra.mxu0 %v1463
        %2221 = vmatprep.subr.mxu0 0.0
        %2222 = vmatpush1.msra.mxu0 %v1464
        %2223 = vmatprep.subr.mxu0 0.0
        %2224 = vmatpush1.msra.mxu0 %v1465
        %2225 = vmatprep.subr.mxu0 0.0
        %2226 = vmatpush1.msra.mxu0 %v1466
        %2227 = vmatprep.subr.mxu0 0.0
        %2228 = vmatpush1.msra.mxu0 %v1467
        %2229 = vmatprep.subr.mxu0 0.0
        %2230 = vmatpush1.msra.mxu0 %v1468
        %2231 = vmatprep.subr.mxu0 0.0
        %2232 = vmatpush1.msra.mxu0 %v1469
        %2233 = vmatprep.subr.mxu0 0.0
        %2234 = vmatpush1.msra.mxu0 %v1470
        %2235 = vmatprep.subr.mxu0 0.0
        %2236 = vmatpush1.msra.mxu0 %v1471
        %2237 = vmatprep.mubr.f32.mxu0 %v1868
        %2238 = vmatmul.mubr.f32.gmra.mrb[0].mxu0 %v1866
        %v2239 = vpop.f32.mrb[0].mxu0
        %v2240 = vadd.f32 %v2095, %v2239
        %v2241 = vpop.f32.mrb[0].mxu0
        %2242 = vmatprep.mubr.f32.mxu0 %v1936
        %2243 = vmatmul.mubr.f32.gmra.mrb[0].mxu0 %v1934
        %v2244 = vpop.f32.mrb[0].mxu0
        %v2245 = vadd.f32 %v2120, %v2244
        %v2246 = vpop.f32.mrb[0].mxu0
        %2247 = vmatprep.mubr.f32.mxu0 %v2004
        %2248 = vmatmul.mubr.f32.gmra.mrb[0].mxu0 %v2002
        %v2249 = vpop.f32.mrb[0].mxu0
        %v2250 = vadd.f32 %v2161, %v2249
        %v2251 = vpop.f32.mrb[0].mxu0
        %2252 = vmatprep.mubr.f32.mxu0 %v2028
        %2253 = vmatmul.mubr.f32.gmra.mrb[0].mxu0 %v2021
        %v2254 = vpop.f32.mrb[0].mxu0
        %v2255 = vadd.f32 %v2168, %v2254
        %v2256 = vpop.f32.mrb[0].mxu0
        %2257 = vdwg.mxu0
        %2258 = vmatprep.subr.mxu0 0.0
        %2259 = vmatpush1.msra.mxu0 %v1472
        %2260 = vmatprep.subr.mxu0 0.0
        %2261 = vmatpush1.msra.mxu0 %v1473
        %2262 = vmatprep.subr.mxu0 0.0
        %2263 = vmatpush1.msra.mxu0 %v1474
        %2264 = vmatprep.subr.mxu0 0.0
        %2265 = vmatpush1.msra.mxu0 %v1475
        %2266 = vmatprep.subr.mxu0 0.0
        %2267 = vmatpush1.msra.mxu0 %v1476
        %2268 = vmatprep.subr.mxu0 0.0
        %2269 = vmatpush1.msra.mxu0 %v1477
        %2270 = vmatprep.subr.mxu0 0.0
        %2271 = vmatpush1.msra.mxu0 %v1478
        %2272 = vmatprep.subr.mxu0 0.0
        %2273 = vmatpush1.msra.mxu0 %v1479
        %2274 = vmatprep.subr.mxu0 0.0
        %2275 = vmatpush1.msra.mxu0 %v1480
        %2276 = vmatprep.subr.mxu0 0.0
        %2277 = vmatpush1.msra.mxu0 %v1481
        %2278 = vmatprep.subr.mxu0 0.0
        %2279 = vmatpush1.msra.mxu0 %v1482
        %2280 = vmatprep.subr.mxu0 0.0
        %2281 = vmatpush1.msra.mxu0 %v1483
        %2282 = vmatprep.subr.mxu0 0.0
        %2283 = vmatpush1.msra.mxu0 %v1484
        %2284 = vmatprep.subr.mxu0 0.0
        %2285 = vmatpush1.msra.mxu0 %v1485
        %2286 = vmatprep.subr.mxu0 0.0
        %2287 = vmatpush1.msra.mxu0 %v1486
        %2288 = vmatprep.subr.mxu0 0.0
        %2289 = vmatpush1.msra.mxu0 %v1487
        %2290 = vmatprep.subr.mxu0 0.0
        %2291 = vmatpush1.msra.mxu0 %v1488
        %2292 = vmatprep.subr.mxu0 0.0
        %2293 = vmatpush1.msra.mxu0 %v1489
        %2294 = vmatprep.subr.mxu0 0.0
        %2295 = vmatpush1.msra.mxu0 %v1490
        %2296 = vmatprep.subr.mxu0 0.0
        %2297 = vmatpush1.msra.mxu0 %v1491
        %2298 = vmatprep.subr.mxu0 0.0
        %2299 = vmatpush1.msra.mxu0 %v1492
        %2300 = vmatprep.subr.mxu0 0.0
        %2301 = vmatpush1.msra.mxu0 %v1493
        %2302 = vmatprep.subr.mxu0 0.0
        %2303 = vmatpush1.msra.mxu0 %v1494
        %2304 = vmatprep.subr.mxu0 0.0
        %2305 = vmatpush1.msra.mxu0 %v1495
        %2306 = vmatprep.subr.mxu0 0.0
        %2307 = vmatpush1.msra.mxu0 %v1496
        %2308 = vmatprep.subr.mxu0 0.0
        %2309 = vmatpush1.msra.mxu0 %v1497
        %2310 = vmatprep.subr.mxu0 0.0
        %2311 = vmatpush1.msra.mxu0 %v1498
        %2312 = vmatprep.subr.mxu0 0.0
        %2313 = vmatpush1.msra.mxu0 %v1499
        %2314 = vmatprep.subr.mxu0 0.0
        %2315 = vmatpush1.msra.mxu0 %v1500
        %2316 = vmatprep.subr.mxu0 0.0
        %2317 = vmatpush1.msra.mxu0 %v1501
        %2318 = vmatprep.subr.mxu0 0.0
        %2319 = vmatpush1.msra.mxu0 %v1502
        %2320 = vmatprep.subr.mxu0 0.0
        %2321 = vmatpush1.msra.mxu0 %v1503
        %2322 = vmatprep.mubr.f32.mxu0 %v1869
        %2323 = vmatmul.mubr.f32.gmra.mrb[0].mxu0 %v1867
        %v2324 = vpop.f32.mrb[0].mxu0
        %v2325 = vadd.f32 %v2240, %v2324
        %v2326 = vpop.f32.mrb[0].mxu0
        %2327 = vmatprep.mubr.f32.mxu0 %v1937
        %2328 = vmatmul.mubr.f32.gmra.mrb[0].mxu0 %v1935
        %v2329 = vpop.f32.mrb[0].mxu0
        %v2330 = vadd.f32 %v2245, %v2329
        %v2331 = vpop.f32.mrb[0].mxu0
        %2332 = vmatprep.mubr.f32.mxu0 %v2005
        %2333 = vmatmul.mubr.f32.gmra.mrb[0].mxu0 %v2003
        %v2334 = vpop.f32.mrb[0].mxu0
        %v2335 = vadd.f32 %v2250, %v2334
        %v2336 = vpop.f32.mrb[0].mxu0
        %2337 = vmatprep.mubr.f32.mxu0 %v2030
        %2338 = vmatmul.mubr.f32.gmra.mrb[0].mxu0 %v2029
        %v2339 = vpop.f32.mrb[0].mxu0
        %v2340 = vadd.f32 %v2255, %v2339
        %v2341 = vpop.f32.mrb[0].mxu0
        %2342 = vdwg.mxu0
        %v2347 = vcombine.high %v2325, %v2325
        %v2349 = vunpack.c.l.s4 1966171168
        %v2350 = vunpack.c.0.s8 %v2349
        %v2351 = vlaneseq
        %v2352 = vshrl.u32 %v2351, 7
        %v2353 = vsub.s32 %v2350, %v2352
        %v2354 = vrot.slane %v2325, %v2353
        %v2356 = vunpack.c.l.s4 1966171168
        %v2357 = vunpack.c.0.s8 %v2356
        %v2358 = vlaneseq
        %v2359 = vshrl.u32 %v2358, 7
        %v2360 = vsub.s32 %v2357, %v2359
        %v2361 = vrot.slane %v2347, %v2360
        %v2362 = vcombine.high %v2354, %v2354
        %v2363 = vcombine.high %v2361, %v2361
        %v2365 = vunpack.c.l.s4 1966171168
        %v2366 = vunpack.c.0.s8 %v2365
        %v2367 = vlaneseq
        %v2368 = vshrl.u32 %v2367, 7
        %v2369 = vsub.s32 %v2366, %v2368
        %v2370 = vrot.slane %v2354, %v2369
        %v2372 = vunpack.c.l.s4 1966171168
        %v2373 = vunpack.c.0.s8 %v2372
        %v2374 = vlaneseq
        %v2375 = vshrl.u32 %v2374, 7
        %v2376 = vsub.s32 %v2373, %v2375
        %v2377 = vrot.slane %v2361, %v2376
        %v2379 = vunpack.c.l.s4 1966171168
        %v2380 = vunpack.c.0.s8 %v2379
        %v2381 = vlaneseq
        %v2382 = vshrl.u32 %v2381, 7
        %v2383 = vsub.s32 %v2380, %v2382
        %v2384 = vrot.slane %v2362, %v2383
        %v2386 = vunpack.c.l.s4 1966171168
        %v2387 = vunpack.c.0.s8 %v2386
        %v2388 = vlaneseq
        %v2389 = vshrl.u32 %v2388, 7
        %v2390 = vsub.s32 %v2387, %v2389
        %v2391 = vrot.slane %v2363, %v2390
        %v2392 = vcombine.high %v2370, %v2370
        %v2393 = vcombine.high %v2377, %v2377
        %v2394 = vcombine.high %v2384, %v2384
        %v2395 = vcombine.high %v2391, %v2391
        %v2396 = vcombine.high %v2330, %v2330
        %v2398 = vunpack.c.l.s4 1966171168
        %v2399 = vunpack.c.0.s8 %v2398
        %v2400 = vlaneseq
        %v2401 = vshrl.u32 %v2400, 7
        %v2402 = vsub.s32 %v2399, %v2401
        %v2403 = vrot.slane %v2330, %v2402
        %v2405 = vunpack.c.l.s4 1966171168
        %v2406 = vunpack.c.0.s8 %v2405
        %v2407 = vlaneseq
        %v2408 = vshrl.u32 %v2407, 7
        %v2409 = vsub.s32 %v2406, %v2408
        %v2410 = vrot.slane %v2396, %v2409
        %v2411 = vcombine.high %v2403, %v2403
        %v2412 = vcombine.high %v2410, %v2410
        %v2414 = vunpack.c.l.s4 1966171168
        %v2415 = vunpack.c.0.s8 %v2414
        %v2416 = vlaneseq
        %v2417 = vshrl.u32 %v2416, 7
        %v2418 = vsub.s32 %v2415, %v2417
        %v2419 = vrot.slane %v2403, %v2418
        %v2421 = vunpack.c.l.s4 1966171168
        %v2422 = vunpack.c.0.s8 %v2421
        %v2423 = vlaneseq
        %v2424 = vshrl.u32 %v2423, 7
        %v2425 = vsub.s32 %v2422, %v2424
        %v2426 = vrot.slane %v2410, %v2425
        %v2428 = vunpack.c.l.s4 1966171168
        %v2429 = vunpack.c.0.s8 %v2428
        %v2430 = vlaneseq
        %v2431 = vshrl.u32 %v2430, 7
        %v2432 = vsub.s32 %v2429, %v2431
        %v2433 = vrot.slane %v2411, %v2432
        %v2435 = vunpack.c.l.s4 1966171168
        %v2436 = vunpack.c.0.s8 %v2435
        %v2437 = vlaneseq
        %v2438 = vshrl.u32 %v2437, 7
        %v2439 = vsub.s32 %v2436, %v2438
        %v2440 = vrot.slane %v2412, %v2439
        %v2441 = vcombine.high %v2419, %v2419
        %v2442 = vcombine.high %v2426, %v2426
        %v2443 = vcombine.high %v2433, %v2433
        %v2444 = vcombine.high %v2440, %v2440
        %v2445 = vcombine.high %v2335, %v2335
        %v2447 = vunpack.c.l.s4 1966171168
        %v2448 = vunpack.c.0.s8 %v2447
        %v2449 = vlaneseq
        %v2450 = vshrl.u32 %v2449, 7
        %v2451 = vsub.s32 %v2448, %v2450
        %v2452 = vrot.slane %v2335, %v2451
        %v2454 = vunpack.c.l.s4 1966171168
        %v2455 = vunpack.c.0.s8 %v2454
        %v2456 = vlaneseq
        %v2457 = vshrl.u32 %v2456, 7
        %v2458 = vsub.s32 %v2455, %v2457
        %v2459 = vrot.slane %v2445, %v2458
        %v2460 = vcombine.high %v2452, %v2452
        %v2461 = vcombine.high %v2459, %v2459
        %v2463 = vunpack.c.l.s4 1966171168
        %v2464 = vunpack.c.0.s8 %v2463
        %v2465 = vlaneseq
        %v2466 = vshrl.u32 %v2465, 7
        %v2467 = vsub.s32 %v2464, %v2466
        %v2468 = vrot.slane %v2452, %v2467
        %v2470 = vunpack.c.l.s4 1966171168
        %v2471 = vunpack.c.0.s8 %v2470
        %v2472 = vlaneseq
        %v2473 = vshrl.u32 %v2472, 7
        %v2474 = vsub.s32 %v2471, %v2473
        %v2475 = vrot.slane %v2459, %v2474
        %v2477 = vunpack.c.l.s4 1966171168
        %v2478 = vunpack.c.0.s8 %v2477
        %v2479 = vlaneseq
        %v2480 = vshrl.u32 %v2479, 7
        %v2481 = vsub.s32 %v2478, %v2480
        %v2482 = vrot.slane %v2460, %v2481
        %v2484 = vunpack.c.l.s4 1966171168
        %v2485 = vunpack.c.0.s8 %v2484
        %v2486 = vlaneseq
        %v2487 = vshrl.u32 %v2486, 7
        %v2488 = vsub.s32 %v2485, %v2487
        %v2489 = vrot.slane %v2461, %v2488
        %v2490 = vcombine.high %v2468, %v2468
        %v2491 = vcombine.high %v2475, %v2475
        %v2492 = vcombine.high %v2482, %v2482
        %v2493 = vcombine.high %v2489, %v2489
        %v2495 = vunpack.c.l.s4 1966171168
        %v2496 = vunpack.c.0.s8 %v2495
        %v2497 = vlaneseq
        %v2498 = vshrl.u32 %v2497, 7
        %v2499 = vsub.s32 %v2496, %v2498
        %v2500 = vrot.slane %v2340, %v2499
        %v2501 = vcombine.high %v2500, %v2500
        %v2503 = vunpack.c.l.s4 1966171168
        %v2504 = vunpack.c.0.s8 %v2503
        %v2505 = vlaneseq
        %v2506 = vshrl.u32 %v2505, 7
        %v2507 = vsub.s32 %v2504, %v2506
        %v2508 = vrot.slane %v2500, %v2507
        %v2510 = vunpack.c.l.s4 1966171168
        %v2511 = vunpack.c.0.s8 %v2510
        %v2512 = vlaneseq
        %v2513 = vshrl.u32 %v2512, 7
        %v2514 = vsub.s32 %v2511, %v2513
        %v2515 = vrot.slane %v2501, %v2514
        %v2542 = vmax.f32 %v2370, 0.0
        %v2543 = vmax.f32 %v2384, 0.0
        %v2544 = vmax.f32 %v2392, 0.0
        %v2545 = vmax.f32 %v2394, 0.0
        %v2546 = vmax.f32 %v2377, 0.0
        %v2547 = vmax.f32 %v2391, 0.0
        %v2548 = vmax.f32 %v2393, 0.0
        %v2549 = vmax.f32 %v2395, 0.0
        %v2550 = vmax.f32 %v2419, 0.0
        %v2551 = vmax.f32 %v2433, 0.0
        %v2552 = vmax.f32 %v2441, 0.0
        %v2553 = vmax.f32 %v2443, 0.0
        %v2554 = vmax.f32 %v2426, 0.0
        %v2555 = vmax.f32 %v2440, 0.0
        %v2556 = vmax.f32 %v2442, 0.0
        %v2557 = vmax.f32 %v2444, 0.0
        %v2558 = vmax.f32 %v2468, 0.0
        %v2559 = vmax.f32 %v2482, 0.0
        %v2560 = vmax.f32 %v2490, 0.0
        %v2561 = vmax.f32 %v2492, 0.0
        %v2562 = vmax.f32 %v2475, 0.0
        %v2563 = vmax.f32 %v2489, 0.0
        %v2564 = vmax.f32 %v2491, 0.0
        %v2565 = vmax.f32 %v2493, 0.0
        %v2566 = vmax.f32 %v2508, 0.0
        %v2567 = vmax.f32 %v2515, 0.0
        %v2594 = vcombine.low %v2542, %v2543
        %v2595 = vcombine.low %v2544, %v2545
        %v2596 = vcombine.low %v2546, %v2547
        %v2597 = vcombine.low %v2548, %v2549
        %v2599 = vunpack.c.l.s4 1966171168
        %v2600 = vunpack.c.0.s8 %v2599
        %v2601 = vlaneseq
        %v2602 = vshrl.u32 %v2601, 7
        %v2603 = vsub.s32 %v2600, %v2602
        %v2604 = vrot.slane %v2594, %v2603
        %v2606 = vunpack.c.l.s4 1966171168
        %v2607 = vunpack.c.0.s8 %v2606
        %v2608 = vlaneseq
        %v2609 = vshrl.u32 %v2608, 7
        %v2610 = vsub.s32 %v2607, %v2609
        %v2611 = vrot.slane %v2595, %v2610
        %v2613 = vunpack.c.l.s4 1966171168
        %v2614 = vunpack.c.0.s8 %v2613
        %v2615 = vlaneseq
        %v2616 = vshrl.u32 %v2615, 7
        %v2617 = vsub.s32 %v2614, %v2616
        %v2618 = vrot.slane %v2596, %v2617
        %v2620 = vunpack.c.l.s4 1966171168
        %v2621 = vunpack.c.0.s8 %v2620
        %v2622 = vlaneseq
        %v2623 = vshrl.u32 %v2622, 7
        %v2624 = vsub.s32 %v2621, %v2623
        %v2625 = vrot.slane %v2597, %v2624
        %v2626 = vcombine.low %v2604, %v2611
        %v2627 = vcombine.low %v2618, %v2625
        %v2629 = vunpack.c.l.s4 1966171168
        %v2630 = vunpack.c.0.s8 %v2629
        %v2631 = vlaneseq
        %v2632 = vshrl.u32 %v2631, 7
        %v2633 = vsub.s32 %v2630, %v2632
        %v2634 = vrot.slane %v2626, %v2633
        %v2636 = vunpack.c.l.s4 1966171168
        %v2637 = vunpack.c.0.s8 %v2636
        %v2638 = vlaneseq
        %v2639 = vshrl.u32 %v2638, 7
        %v2640 = vsub.s32 %v2637, %v2639
        %v2641 = vrot.slane %v2627, %v2640
        %v2642 = vcombine.low %v2634, %v2641
        %v2643 = vcombine.low %v2550, %v2551
        %v2644 = vcombine.low %v2552, %v2553
        %v2646 = vunpack.c.l.s4 1966171168
        %v2647 = vunpack.c.0.s8 %v2646
        %v2648 = vlaneseq
        %v2649 = vshrl.u32 %v2648, 7
        %v2650 = vsub.s32 %v2647, %v2649
        %v2651 = vrot.slane %v2643, %v2650
        %v2653 = vunpack.c.l.s4 1966171168
        %v2654 = vunpack.c.0.s8 %v2653
        %v2655 = vlaneseq
        %v2656 = vshrl.u32 %v2655, 7
        %v2657 = vsub.s32 %v2654, %v2656
        %v2658 = vrot.slane %v2644, %v2657
        %v2660 = vunpack.c.l.s4 1966171168
        %v2661 = vunpack.c.0.s8 %v2660
        %v2662 = vlaneseq
        %v2663 = vshrl.u32 %v2662, 7
        %v2664 = vsub.s32 %v2661, %v2663
        %v2665 = vrot.slane %v2554, %v2664
        %v2666 = vcombine.low %v2651, %v2658
        %v2668 = vunpack.c.l.s4 1966171168
        %v2669 = vunpack.c.0.s8 %v2668
        %v2670 = vlaneseq
        %v2671 = vshrl.u32 %v2670, 7
        %v2672 = vsub.s32 %v2669, %v2671
        %v2673 = vrot.slane %v2666, %v2672
        %v2675 = vunpack.c.l.s4 1966171168
        %v2676 = vunpack.c.0.s8 %v2675
        %v2677 = vlaneseq
        %v2678 = vshrl.u32 %v2677, 7
        %v2679 = vsub.s32 %v2676, %v2678
        %v2680 = vrot.slane %v2665, %v2679
        %v2681 = vcombine.low %v2673, %v2680
        %v2682 = vcombine.low %v2555, %v2556
        %v2683 = vcombine.low %v2557, %v2558
        %v2684 = vcombine.low %v2559, %v2560
        %v2685 = vcombine.low %v2561, %v2562
        %v2687 = vunpack.c.l.s4 1966171168
        %v2688 = vunpack.c.0.s8 %v2687
        %v2689 = vlaneseq
        %v2690 = vshrl.u32 %v2689, 7
        %v2691 = vsub.s32 %v2688, %v2690
        %v2692 = vrot.slane %v2682, %v2691
        %v2694 = vunpack.c.l.s4 1966171168
        %v2695 = vunpack.c.0.s8 %v2694
        %v2696 = vlaneseq
        %v2697 = vshrl.u32 %v2696, 7
        %v2698 = vsub.s32 %v2695, %v2697
        %v2699 = vrot.slane %v2683, %v2698
        %v2701 = vunpack.c.l.s4 1966171168
        %v2702 = vunpack.c.0.s8 %v2701
        %v2703 = vlaneseq
        %v2704 = vshrl.u32 %v2703, 7
        %v2705 = vsub.s32 %v2702, %v2704
        %v2706 = vrot.slane %v2684, %v2705
        %v2708 = vunpack.c.l.s4 1966171168
        %v2709 = vunpack.c.0.s8 %v2708
        %v2710 = vlaneseq
        %v2711 = vshrl.u32 %v2710, 7
        %v2712 = vsub.s32 %v2709, %v2711
        %v2713 = vrot.slane %v2685, %v2712
        %v2714 = vcombine.low %v2692, %v2699
        %v2715 = vcombine.low %v2706, %v2713
        %v2717 = vunpack.c.l.s4 1966171168
        %v2718 = vunpack.c.0.s8 %v2717
        %v2719 = vlaneseq
        %v2720 = vshrl.u32 %v2719, 7
        %v2721 = vsub.s32 %v2718, %v2720
        %v2722 = vrot.slane %v2714, %v2721
        %v2724 = vunpack.c.l.s4 1966171168
        %v2725 = vunpack.c.0.s8 %v2724
        %v2726 = vlaneseq
        %v2727 = vshrl.u32 %v2726, 7
        %v2728 = vsub.s32 %v2725, %v2727
        %v2729 = vrot.slane %v2715, %v2728
        %v2730 = vcombine.low %v2722, %v2729
        %v2731 = vcombine.low %v2563, %v2564
        %v2732 = vcombine.low %v2565, %v2566
        %v2734 = vunpack.c.l.s4 1966171168
        %v2735 = vunpack.c.0.s8 %v2734
        %v2736 = vlaneseq
        %v2737 = vshrl.u32 %v2736, 7
        %v2738 = vsub.s32 %v2735, %v2737
        %v2739 = vrot.slane %v2731, %v2738
        %v2741 = vunpack.c.l.s4 1966171168
        %v2742 = vunpack.c.0.s8 %v2741
        %v2743 = vlaneseq
        %v2744 = vshrl.u32 %v2743, 7
        %v2745 = vsub.s32 %v2742, %v2744
        %v2746 = vrot.slane %v2732, %v2745
        %v2748 = vunpack.c.l.s4 1966171168
        %v2749 = vunpack.c.0.s8 %v2748
        %v2750 = vlaneseq
        %v2751 = vshrl.u32 %v2750, 7
        %v2752 = vsub.s32 %v2749, %v2751
        %v2753 = vrot.slane %v2567, %v2752
        %v2754 = vcombine.low %v2739, %v2746
        %v2756 = vunpack.c.l.s4 1966171168
        %v2757 = vunpack.c.0.s8 %v2756
        %v2758 = vlaneseq
        %v2759 = vshrl.u32 %v2758, 7
        %v2760 = vsub.s32 %v2757, %v2759
        %v2761 = vrot.slane %v2754, %v2760
        %v2763 = vunpack.c.l.s4 1966171168
        %v2764 = vunpack.c.0.s8 %v2763
        %v2765 = vlaneseq
        %v2766 = vshrl.u32 %v2765, 7
        %v2767 = vsub.s32 %v2764, %v2766
        %v2768 = vrot.slane %v2753, %v2767
        %v2769 = vcombine.low %v2761, %v2768
        %v2774 = vsel %vm1433, %v2681, -inf
        %v2775 = vmax.f32 %v2642, %v2774
        %v2776 = vrot.slane %v2775, 4
        %v2777 = vmax.f32 %v2775, %v2776
        %v2778 = vrot.slane %v2777, 2
        %v2779 = vmax.f32 %v2777, %v2778
        %v2780 = vrot.slane %v2779, 1
        %v2781 = vmax.f32 %v2779, %v2780
        %v2782 = vsel %vm1433, %v2769, -inf
        %v2783 = vmax.f32 %v2730, %v2782
        %v2784 = vrot.slane %v2783, 4
        %v2785 = vmax.f32 %v2783, %v2784
        %v2786 = vrot.slane %v2785, 2
        %v2787 = vmax.f32 %v2785, %v2786
        %v2788 = vrot.slane %v2787, 1
        %v2789 = vmax.f32 %v2787, %v2788
        %vm2790 = vcmask 1043456
        %v2791 = vrot.slane %v646, 4
        %v2792 = vrot.slane %v651, 4
        %v2793 = vsel %vm2790, %v2791, %v2792
        %v2794 = vrot.slane %v656, 4
        %v2795 = vrot.slane %v661, 4
        %v2796 = vsel %vm2790, %v2794, %v2795
        %v2797 = vld [vmem:[%s439] sm:$0xff]
        %v2798 = vld [vmem:[%s439 + $0x8] sm:$0xff]
        %v2799 = vld [vmem:[%s439 + $0x10] sm:$0xff]
        %v2800 = vld [vmem:[%s439 + $0x18] sm:$0xff]
        %v2801 = vld [vmem:[%s439 + $0x20] sm:$0xff]
        %v2802 = vld [vmem:[%s439 + $0x28] sm:$0xff]
        %v2803 = vld [vmem:[%s439 + $0x30] sm:$0xff]
        %v2804 = vld [vmem:[%s439 + $0x38] sm:$0xff]
        %v2805 = vld [vmem:[%s439 + $0x40] sm:$0xff]
        %v2806 = vld [vmem:[%s439 + $0x48] sm:$0xff]
        %v2807 = vld [vmem:[%s439 + $0x50] sm:$0xff]
        %v2808 = vld [vmem:[%s439 + $0x58] sm:$0xff]
        %v2809 = vld [vmem:[%s439 + $0x60] sm:$0xff]
        %v2810 = vld [vmem:[%s439 + $0x68] sm:$0xff]
        %v2811 = vld [vmem:[%s439 + $0x70] sm:$0xff]
        %v2812 = vld [vmem:[%s439 + $0x78] sm:$0xff]
        %v2813 = vld [vmem:[%s439 + $0x80] sm:$0xff]
        %v2814 = vld [vmem:[%s439 + $0x88] sm:$0xff]
        %v2815 = vld [vmem:[%s439 + $0x90] sm:$0xff]
        %v2816 = vld [vmem:[%s439 + $0x98] sm:$0xff]
        %v2817 = vld [vmem:[%s439 + $0xa0] sm:$0xff]
        %v2818 = vld [vmem:[%s439 + $0xa8] sm:$0xff]
        %v2819 = vld [vmem:[%s439 + $0xb0] sm:$0xff]
        %v2820 = vld [vmem:[%s439 + $0xb8] sm:$0xff]
        %v2821 = vld [vmem:[%s439 + $0xc0] sm:$0xff]
        %v2822 = vld [vmem:[%s439 + $0xc8] sm:$0xff]
        %v2823 = vld [vmem:[%s439 + $0xd0] sm:$0xff]
        %v2824 = vld [vmem:[%s439 + $0xd8] sm:$0xff]
        %v2825 = vld [vmem:[%s439 + $0xe0] sm:$0xff]
        %v2826 = vld [vmem:[%s439 + $0xe8] sm:$0xff]
        %v2827 = vld [vmem:[%s439 + $0xf0] sm:$0xff]
        %v2828 = vld [vmem:[%s439 + $0xf8] sm:$0xff]
        %v2829 = vld [vmem:[%s439 + $0x100] sm:$0xff]
        %v2830 = vld [vmem:[%s439 + $0x108] sm:$0xff]
        %v2831 = vld [vmem:[%s439 + $0x110] sm:$0xff]
        %v2832 = vld [vmem:[%s439 + $0x118] sm:$0xff]
        %v2833 = vld [vmem:[%s439 + $0x120] sm:$0xff]
        %v2834 = vld [vmem:[%s439 + $0x128] sm:$0xff]
        %v2835 = vld [vmem:[%s439 + $0x130] sm:$0xff]
        %v2836 = vld [vmem:[%s439 + $0x138] sm:$0xff]
        %v2837 = vld [vmem:[%s439 + $0x140] sm:$0xff]
        %v2838 = vld [vmem:[%s439 + $0x148] sm:$0xff]
        %v2839 = vld [vmem:[%s439 + $0x150] sm:$0xff]
        %v2840 = vld [vmem:[%s439 + $0x158] sm:$0xff]
        %v2841 = vld [vmem:[%s439 + $0x160] sm:$0xff]
        %v2842 = vld [vmem:[%s439 + $0x168] sm:$0xff]
        %v2843 = vld [vmem:[%s439 + $0x170] sm:$0xff]
        %v2844 = vld [vmem:[%s439 + $0x178] sm:$0xff]
        %v2845 = vld [vmem:[%s439 + $0x180] sm:$0xff]
        %v2846 = vld [vmem:[%s439 + $0x188] sm:$0xff]
        %v2847 = vld [vmem:[%s439 + $0x190] sm:$0xff]
        %v2848 = vld [vmem:[%s439 + $0x198] sm:$0xff]
        %v2849 = vld [vmem:[%s439 + $0x1a0] sm:$0xff]
        %v2850 = vld [vmem:[%s439 + $0x1a8] sm:$0xff]
        %v2851 = vld [vmem:[%s439 + $0x1b0] sm:$0xff]
        %v2852 = vld [vmem:[%s439 + $0x1b8] sm:$0xff]
        %v2853 = vld [vmem:[%s439 + $0x1c0] sm:$0xff]
        %v2854 = vld [vmem:[%s439 + $0x1c8] sm:$0xff]
        %v2855 = vld [vmem:[%s439 + $0x1d0] sm:$0xff]
        %v2856 = vld [vmem:[%s439 + $0x1d8] sm:$0xff]
        %v2857 = vld [vmem:[%s439 + $0x1e0] sm:$0xff]
        %v2858 = vld [vmem:[%s439 + $0x1e8] sm:$0xff]
        %v2859 = vld [vmem:[%s439 + $0x1f0] sm:$0xff]
        %v2860 = vld [vmem:[%s439 + $0x1f8] sm:$0xff]
        %v2861 = vld [vmem:[%s439 + $0x200] sm:$0xff]
        %v2862 = vld [vmem:[%s439 + $0x208] sm:$0xff]
        %v2863 = vld [vmem:[%s439 + $0x210] sm:$0xff]
        %v2864 = vld [vmem:[%s439 + $0x218] sm:$0xff]
        %v2865 = vld [vmem:[%s439 + $0x220] sm:$0xff]
        %v2866 = vld [vmem:[%s439 + $0x228] sm:$0xff]
        %v2867 = vld [vmem:[%s439 + $0x230] sm:$0xff]
        %v2868 = vld [vmem:[%s439 + $0x238] sm:$0xff]
        %v2869 = vld [vmem:[%s439 + $0x240] sm:$0xff]
        %v2870 = vld [vmem:[%s439 + $0x248] sm:$0xff]
        %v2871 = vld [vmem:[%s439 + $0x250] sm:$0xff]
        %v2872 = vld [vmem:[%s439 + $0x258] sm:$0xff]
        %v2873 = vld [vmem:[%s439 + $0x260] sm:$0xff]
        %v2874 = vld [vmem:[%s439 + $0x268] sm:$0xff]
        %v2875 = vld [vmem:[%s439 + $0x270] sm:$0xff]
        %v2876 = vld [vmem:[%s439 + $0x278] sm:$0xff]
        %v2877 = vlaneseq
        %v2878 = vshrl.u32 %v2877, 7
        %v2879 = vsub.s32 2, %v2878
        %v2880 = vrot.slane %v664, %v2879
        %v2881 = vcombine.high %v2793, %v2793
        %v2882 = vcombine.high %v2796, %v2796
        %v2884 = vcombine.high %v2880, %v2880
        %v2885 = vcombine.low %v735, %v736
        %v2886 = vcombine.high %v735, %v736
        %v2887 = vcombine.low %v1508, %v1509
        %v2888 = vcombine.high %v1508, %v1509
        %v2889 = vcombine.low %v2793, %v2881
        %v2890 = vcombine.low %v770, %v804
        %v2891 = vcombine.high %v770, %v804
        %v2892 = vcombine.low %v1574, %v1630
        %v2893 = vcombine.high %v1574, %v1630
        %v2894 = vcombine.low %v2792, %v2796
        %v2895 = vcombine.low %v805, %v839
        %v2896 = vcombine.high %v805, %v839
        %v2897 = vcombine.low %v1631, %v1696
        %v2898 = vcombine.high %v1631, %v1696
        %v2899 = vcombine.low %v2882, %v2795
        %v2915 = vcombine.low %v2880, %v2884
        %v2916 = vcombine.low %v2880, %v2880
        %v2917 = vcombine.low %v2884, %v2880
        %2921 = vmatprep.subr.mxu0 0.0
        %2922 = vmatpush1.msra.mxu0 %v2797
        %2923 = vmatprep.subr.mxu0 0.0
        %2924 = vmatpush1.msra.mxu0 %v2798
        %2925 = vmatprep.subr.mxu0 0.0
        %2926 = vmatpush1.msra.mxu0 %v2799
        %2927 = vmatprep.subr.mxu0 0.0
        %2928 = vmatpush1.msra.mxu0 %v2800
        %2929 = vmatprep.subr.mxu0 0.0
        %2930 = vmatpush1.msra.mxu0 %v2801
        %2931 = vmatprep.subr.mxu0 0.0
        %2932 = vmatpush1.msra.mxu0 %v2802
        %2933 = vmatprep.subr.mxu0 0.0
        %2934 = vmatpush1.msra.mxu0 %v2803
        %2935 = vmatprep.subr.mxu0 0.0
        %2936 = vmatpush1.msra.mxu0 %v2804
        %2937 = vmatprep.subr.mxu0 0.0
        %2938 = vmatpush1.msra.mxu0 %v2805
        %2939 = vmatprep.subr.mxu0 0.0
        %2940 = vmatpush1.msra.mxu0 %v2806
        %2941 = vmatprep.subr.mxu0 0.0
        %2942 = vmatpush1.msra.mxu0 %v2807
        %2943 = vmatprep.subr.mxu0 0.0
        %2944 = vmatpush1.msra.mxu0 %v2808
        %2945 = vmatprep.subr.mxu0 0.0
        %2946 = vmatpush1.msra.mxu0 %v2809
        %2947 = vmatprep.subr.mxu0 0.0
        %2948 = vmatpush1.msra.mxu0 %v2810
        %2949 = vmatprep.subr.mxu0 0.0
        %2950 = vmatpush1.msra.mxu0 %v2811
        %2951 = vmatprep.subr.mxu0 0.0
        %2952 = vmatpush1.msra.mxu0 %v2812
        %2953 = vmatprep.subr.mxu0 0.0
        %2954 = vmatpush1.msra.mxu0 %v2813
        %2955 = vmatprep.subr.mxu0 0.0
        %2956 = vmatpush1.msra.mxu0 %v2814
        %2957 = vmatprep.subr.mxu0 0.0
        %2958 = vmatpush1.msra.mxu0 %v2815
        %2959 = vmatprep.subr.mxu0 0.0
        %2960 = vmatpush1.msra.mxu0 %v2816
        %2961 = vmatprep.subr.mxu0 0.0
        %2962 = vmatpush1.msra.mxu0 %v2817
        %2963 = vmatprep.subr.mxu0 0.0
        %2964 = vmatpush1.msra.mxu0 %v2818
        %2965 = vmatprep.subr.mxu0 0.0
        %2966 = vmatpush1.msra.mxu0 %v2819
        %2967 = vmatprep.subr.mxu0 0.0
        %2968 = vmatpush1.msra.mxu0 %v2820
        %2969 = vmatprep.subr.mxu0 0.0
        %2970 = vmatpush1.msra.mxu0 %v2821
        %2971 = vmatprep.subr.mxu0 0.0
        %2972 = vmatpush1.msra.mxu0 %v2822
        %2973 = vmatprep.subr.mxu0 0.0
        %2974 = vmatpush1.msra.mxu0 %v2823
        %2975 = vmatprep.subr.mxu0 0.0
        %2976 = vmatpush1.msra.mxu0 %v2824
        %2977 = vmatprep.subr.mxu0 0.0
        %2978 = vmatpush1.msra.mxu0 %v2825
        %2979 = vmatprep.subr.mxu0 0.0
        %2980 = vmatpush1.msra.mxu0 %v2826
        %2981 = vmatprep.subr.mxu0 0.0
        %2982 = vmatpush1.msra.mxu0 %v2827
        %2983 = vmatprep.subr.mxu0 0.0
        %2984 = vmatpush1.msra.mxu0 %v2828
        %2985 = vmatprep.mubr.f32.mxu0 %v2886
        %2986 = vmatmul.mubr.f32.gmra.mrb[0].mxu0 %v2885
        %v2987 = vpop.f32.mrb[0].mxu0
        %v2988 = vadd.f32 %v2915, %v2987
        %v2989 = vpop.f32.mrb[0].mxu0
        %2990 = vmatprep.mubr.f32.mxu0 %v2891
        %2991 = vmatmul.mubr.f32.gmra.mrb[0].mxu0 %v2890
        %v2992 = vpop.f32.mrb[0].mxu0
        %v2993 = vadd.f32 %v2916, %v2992
        %v2994 = vpop.f32.mrb[0].mxu0
        %2995 = vmatprep.mubr.f32.mxu0 %v2896
        %2996 = vmatmul.mubr.f32.gmra.mrb[0].mxu0 %v2895
        %v2997 = vpop.f32.mrb[0].mxu0
        %v2998 = vadd.f32 %v2917, %v2997
        %v2999 = vpop.f32.mrb[0].mxu0
        %3000 = vdwg.mxu0
        %3001 = vmatprep.subr.mxu0 0.0
        %3002 = vmatpush1.msra.mxu0 %v2829
        %3003 = vmatprep.subr.mxu0 0.0
        %3004 = vmatpush1.msra.mxu0 %v2830
        %3005 = vmatprep.subr.mxu0 0.0
        %3006 = vmatpush1.msra.mxu0 %v2831
        %3007 = vmatprep.subr.mxu0 0.0
        %3008 = vmatpush1.msra.mxu0 %v2832
        %3009 = vmatprep.subr.mxu0 0.0
        %3010 = vmatpush1.msra.mxu0 %v2833
        %3011 = vmatprep.subr.mxu0 0.0
        %3012 = vmatpush1.msra.mxu0 %v2834
        %3013 = vmatprep.subr.mxu0 0.0
        %3014 = vmatpush1.msra.mxu0 %v2835
        %3015 = vmatprep.subr.mxu0 0.0
        %3016 = vmatpush1.msra.mxu0 %v2836
        %3017 = vmatprep.subr.mxu0 0.0
        %3018 = vmatpush1.msra.mxu0 %v2837
        %3019 = vmatprep.subr.mxu0 0.0
        %3020 = vmatpush1.msra.mxu0 %v2838
        %3021 = vmatprep.subr.mxu0 0.0
        %3022 = vmatpush1.msra.mxu0 %v2839
        %3023 = vmatprep.subr.mxu0 0.0
        %3024 = vmatpush1.msra.mxu0 %v2840
        %3025 = vmatprep.subr.mxu0 0.0
        %3026 = vmatpush1.msra.mxu0 %v2841
        %3027 = vmatprep.subr.mxu0 0.0
        %3028 = vmatpush1.msra.mxu0 %v2842
        %3029 = vmatprep.subr.mxu0 0.0
        %3030 = vmatpush1.msra.mxu0 %v2843
        %3031 = vmatprep.subr.mxu0 0.0
        %3032 = vmatpush1.msra.mxu0 %v2844
        %3033 = vmatprep.subr.mxu0 0.0
        %3034 = vmatpush1.msra.mxu0 %v2845
        %3035 = vmatprep.subr.mxu0 0.0
        %3036 = vmatpush1.msra.mxu0 %v2846
        %3037 = vmatprep.subr.mxu0 0.0
        %3038 = vmatpush1.msra.mxu0 %v2847
        %3039 = vmatprep.subr.mxu0 0.0
        %3040 = vmatpush1.msra.mxu0 %v2848
        %3041 = vmatprep.subr.mxu0 0.0
        %3042 = vmatpush1.msra.mxu0 %v2849
        %3043 = vmatprep.subr.mxu0 0.0
        %3044 = vmatpush1.msra.mxu0 %v2850
        %3045 = vmatprep.subr.mxu0 0.0
        %3046 = vmatpush1.msra.mxu0 %v2851
        %3047 = vmatprep.subr.mxu0 0.0
        %3048 = vmatpush1.msra.mxu0 %v2852
        %3049 = vmatprep.subr.mxu0 0.0
        %3050 = vmatpush1.msra.mxu0 %v2853
        %3051 = vmatprep.subr.mxu0 0.0
        %3052 = vmatpush1.msra.mxu0 %v2854
        %3053 = vmatprep.subr.mxu0 0.0
        %3054 = vmatpush1.msra.mxu0 %v2855
        %3055 = vmatprep.subr.mxu0 0.0
        %3056 = vmatpush1.msra.mxu0 %v2856
        %3057 = vmatprep.subr.mxu0 0.0
        %3058 = vmatpush1.msra.mxu0 %v2857
        %3059 = vmatprep.subr.mxu0 0.0
        %3060 = vmatpush1.msra.mxu0 %v2858
        %3061 = vmatprep.subr.mxu0 0.0
        %3062 = vmatpush1.msra.mxu0 %v2859
        %3063 = vmatprep.subr.mxu0 0.0
        %3064 = vmatpush1.msra.mxu0 %v2860
        %3065 = vmatprep.mubr.f32.mxu0 %v2888
        %3066 = vmatmul.mubr.f32.gmra.mrb[0].mxu0 %v2887
        %v3067 = vpop.f32.mrb[0].mxu0
        %v3068 = vadd.f32 %v2988, %v3067
        %v3069 = vpop.f32.mrb[0].mxu0
        %3070 = vmatprep.mubr.f32.mxu0 %v2893
        %3071 = vmatmul.mubr.f32.gmra.mrb[0].mxu0 %v2892
        %v3072 = vpop.f32.mrb[0].mxu0
        %v3073 = vadd.f32 %v2993, %v3072
        %v3074 = vpop.f32.mrb[0].mxu0
        %3075 = vmatprep.mubr.f32.mxu0 %v2898
        %3076 = vmatmul.mubr.f32.gmra.mrb[0].mxu0 %v2897
        %v3077 = vpop.f32.mrb[0].mxu0
        %v3078 = vadd.f32 %v2998, %v3077
        %v3079 = vpop.f32.mrb[0].mxu0
        %3080 = vdwg.mxu0
        %3081 = vmatprep.subr.mxu0 0.0
        %3082 = vmatpush1.msra.mxu0 %v2861
        %3083 = vmatprep.subr.mxu0 0.0
        %3084 = vmatpush1.msra.mxu0 %v2862
        %3085 = vmatprep.subr.mxu0 0.0
        %3086 = vmatpush1.msra.mxu0 %v2863
        %3087 = vmatprep.subr.mxu0 0.0
        %3088 = vmatpush1.msra.mxu0 %v2864
        %3089 = vmatprep.subr.mxu0 0.0
        %3090 = vmatpush1.msra.mxu0 %v2865
        %3091 = vmatprep.subr.mxu0 0.0
        %3092 = vmatpush1.msra.mxu0 %v2866
        %3093 = vmatprep.subr.mxu0 0.0
        %3094 = vmatpush1.msra.mxu0 %v2867
        %3095 = vmatprep.subr.mxu0 0.0
        %3096 = vmatpush1.msra.mxu0 %v2868
        %3097 = vmatprep.subr.mxu0 0.0
        %3098 = vmatpush1.msra.mxu0 %v2869
        %3099 = vmatprep.subr.mxu0 0.0
        %3100 = vmatpush1.msra.mxu0 %v2870
        %3101 = vmatprep.subr.mxu0 0.0
        %3102 = vmatpush1.msra.mxu0 %v2871
        %3103 = vmatprep.subr.mxu0 0.0
        %3104 = vmatpush1.msra.mxu0 %v2872
        %3105 = vmatprep.subr.mxu0 0.0
        %3106 = vmatpush1.msra.mxu0 %v2873
        %3107 = vmatprep.subr.mxu0 0.0
        %3108 = vmatpush1.msra.mxu0 %v2874
        %3109 = vmatprep.subr.mxu0 0.0
        %3110 = vmatpush1.msra.mxu0 %v2875
        %3111 = vmatprep.subr.mxu0 0.0
        %3112 = vmatpush1.msra.mxu0 %v2876
        %3113 = vmatprep.subr.mxu0 0.0
        %3114 = vmatpush1.msra.mxu0 0.0
        %3115 = vmatprep.subr.mxu0 0.0
        %3116 = vmatpush1.msra.mxu0 0.0
        %3117 = vmatprep.subr.mxu0 0.0
        %3118 = vmatpush1.msra.mxu0 0.0
        %3119 = vmatprep.subr.mxu0 0.0
        %3120 = vmatpush1.msra.mxu0 0.0
        %3121 = vmatprep.subr.mxu0 0.0
        %3122 = vmatpush1.msra.mxu0 0.0
        %3123 = vmatprep.subr.mxu0 0.0
        %3124 = vmatpush1.msra.mxu0 0.0
        %3125 = vmatprep.subr.mxu0 0.0
        %3126 = vmatpush1.msra.mxu0 0.0
        %3127 = vmatprep.subr.mxu0 0.0
        %3128 = vmatpush1.msra.mxu0 0.0
        %3129 = vmatprep.subr.mxu0 0.0
        %3130 = vmatpush1.msra.mxu0 0.0
        %3131 = vmatprep.subr.mxu0 0.0
        %3132 = vmatpush1.msra.mxu0 0.0
        %3133 = vmatprep.subr.mxu0 0.0
        %3134 = vmatpush1.msra.mxu0 0.0
        %3135 = vmatprep.subr.mxu0 0.0
        %3136 = vmatpush1.msra.mxu0 0.0
        %3137 = vmatprep.subr.mxu0 0.0
        %3138 = vmatpush1.msra.mxu0 0.0
        %3139 = vmatprep.subr.mxu0 0.0
        %3140 = vmatpush1.msra.mxu0 0.0
        %3141 = vmatprep.subr.mxu0 0.0
        %3142 = vmatpush1.msra.mxu0 0.0
        %3143 = vmatprep.subr.mxu0 0.0
        %3144 = vmatpush1.msra.mxu0 0.0
        %3145 = vmatprep.mubr.f32.mxu0 0.0
        %3146 = vmatmul.mubr.f32.gmra.mrb[0].mxu0 %v2889
        %v3147 = vpop.f32.mrb[0].mxu0
        %v3148 = vadd.f32 %v3068, %v3147
        %v3149 = vpop.f32.mrb[0].mxu0
        %3150 = vmatprep.mubr.f32.mxu0 0.0
        %3151 = vmatmul.mubr.f32.gmra.mrb[0].mxu0 %v2894
        %v3152 = vpop.f32.mrb[0].mxu0
        %v3153 = vadd.f32 %v3073, %v3152
        %v3154 = vpop.f32.mrb[0].mxu0
        %3155 = vmatprep.mubr.f32.mxu0 0.0
        %3156 = vmatmul.mubr.f32.gmra.mrb[0].mxu0 %v2899
        %v3157 = vpop.f32.mrb[0].mxu0
        %v3158 = vadd.f32 %v3078, %v3157
        %v3159 = vpop.f32.mrb[0].mxu0
        %3160 = vdwg.mxu0
        %v3164 = vcombine.high %v3148, %v3148
        %v3165 = vcombine.high %v3153, %v3153
        %v3166 = vcombine.high %v3158, %v3158
        %v3170 = vmax.f32 %v3148, 0.0
        %v3171 = vmax.f32 %v3164, 0.0
        %v3172 = vmax.f32 %v3153, 0.0
        %v3173 = vmax.f32 %v3165, 0.0
        %v3174 = vmax.f32 %v3158, 0.0
        %v3175 = vmax.f32 %v3166, 0.0
        %v3180 = vcombine.low %v3170, %v3171
        %v3181 = vcombine.low %v3173, %v3174
        %v3184 = vsel %vm2790, %v3172, -inf
        %v3185 = vmax.f32 %v3180, %v3184
        %v3186 = vrot.slane %v3185, 4
        %v3187 = vmax.f32 %v3185, %v3186
        %v3188 = vrot.slane %v3187, 2
        %v3189 = vmax.f32 %v3187, %v3188
        %v3190 = vrot.slane %v3189, 1
        %v3191 = vmax.f32 %v3189, %v3190
        %v3192 = vsel %vm2790, %v3175, -inf
        %v3193 = vmax.f32 %v3181, %v3192
        %v3194 = vrot.slane %v3193, 4
        %v3195 = vmax.f32 %v3193, %v3194
        %v3196 = vrot.slane %v3195, 2
        %v3197 = vmax.f32 %v3195, %v3196
        %v3198 = vrot.slane %v3197, 1
        %v3199 = vmax.f32 %v3197, %v3198
        %vm3202 = vcmask 1041409
        %v3203 = vsel %vm3202, %v1432, %v1424
        %v3207 = vsel %vm3202, %v2789, %v2781
        %v3211 = vsel %vm3202, %v3199, %v3191
        %v3213 = vld [vmem:[%s448] sm:$0xff]
        %v3214 = vld [vmem:[%s448 + $0x8] sm:$0xff]
        %v3215 = vld [vmem:[%s448 + $0x10] sm:$0xff]
        %v3216 = vld [vmem:[%s448 + $0x18] sm:$0xff]
        %v3217 = vld [vmem:[%s448 + $0x20] sm:$0xff]
        %v3218 = vld [vmem:[%s448 + $0x28] sm:$0xff]
        %v3219 = vld [vmem:[%s448 + $0x30] sm:$0xff]
        %v3220 = vld [vmem:[%s448 + $0x38] sm:$0xff]
        %v3221 = vld [vmem:[%s448 + $0x40] sm:$0xff]
        %v3222 = vld [vmem:[%s448 + $0x48] sm:$0xff]
        %v3223 = vld [vmem:[%s448 + $0x50] sm:$0xff]
        %v3224 = vld [vmem:[%s448 + $0x58] sm:$0xff]
        %v3225 = vld [vmem:[%s448 + $0x60] sm:$0xff]
        %v3226 = vld [vmem:[%s448 + $0x68] sm:$0xff]
        %v3227 = vld [vmem:[%s448 + $0x70] sm:$0xff]
        %v3228 = vld [vmem:[%s448 + $0x78] sm:$0xff]
        %v3229 = vld [vmem:[%s448 + $0x80] sm:$0xff]
        %v3230 = vld [vmem:[%s448 + $0x88] sm:$0xff]
        %v3231 = vld [vmem:[%s448 + $0x90] sm:$0xff]
        %v3232 = vld [vmem:[%s448 + $0x98] sm:$0xff]
        %v3233 = vld [vmem:[%s448 + $0xa0] sm:$0xff]
        %v3234 = vld [vmem:[%s448 + $0xa8] sm:$0xff]
        %v3235 = vld [vmem:[%s448 + $0xb0] sm:$0xff]
        %v3236 = vld [vmem:[%s448 + $0xb8] sm:$0xff]
        %v3237 = vld [vmem:[%s448 + $0xc0] sm:$0xff]
        %v3238 = vld [vmem:[%s448 + $0xc8] sm:$0xff]
        %v3239 = vld [vmem:[%s448 + $0xd0] sm:$0xff]
        %v3240 = vld [vmem:[%s448 + $0xd8] sm:$0xff]
        %v3241 = vld [vmem:[%s448 + $0xe0] sm:$0xff]
        %v3242 = vld [vmem:[%s448 + $0xe8] sm:$0xff]
        %v3243 = vld [vmem:[%s448 + $0xf0] sm:$0xff]
        %v3244 = vld [vmem:[%s448 + $0xf8] sm:$0xff]
        %v3245 = vld [vmem:[%s448 + $0x100] sm:$0xff]
        %v3246 = vld [vmem:[%s448 + $0x108] sm:$0xff]
        %v3247 = vld [vmem:[%s448 + $0x110] sm:$0xff]
        %v3248 = vld [vmem:[%s448 + $0x118] sm:$0xff]
        %v3249 = vld [vmem:[%s448 + $0x120] sm:$0xff]
        %v3250 = vld [vmem:[%s448 + $0x128] sm:$0xff]
        %v3251 = vld [vmem:[%s448 + $0x130] sm:$0xff]
        %v3252 = vld [vmem:[%s448 + $0x138] sm:$0xff]
        %v3253 = vld [vmem:[%s448 + $0x140] sm:$0xff]
        %v3254 = vld [vmem:[%s448 + $0x148] sm:$0xff]
        %v3255 = vld [vmem:[%s448 + $0x150] sm:$0xff]
        %v3256 = vld [vmem:[%s448 + $0x158] sm:$0xff]
        %v3257 = vld [vmem:[%s448 + $0x160] sm:$0xff]
        %v3258 = vld [vmem:[%s448 + $0x168] sm:$0xff]
        %v3259 = vld [vmem:[%s448 + $0x170] sm:$0xff]
        %v3260 = vld [vmem:[%s448 + $0x178] sm:$0xff]
        %v3261 = vld [vmem:[%s521] sm:$0x1]
        %v3263 = vlaneseq
        %v3264 = vshrl.u32 %v3263, 7
        %v3265 = vsub.s32 0, %v3264
        %v3266 = vrot.slane %v3261, %v3265
        %3268 = vmatprep.subr.mxu0 0.0
        %3269 = vmatpush1.msra.mxu0 %v3213
        %3270 = vmatprep.subr.mxu0 0.0
        %3271 = vmatpush1.msra.mxu0 %v3214
        %3272 = vmatprep.subr.mxu0 0.0
        %3273 = vmatpush1.msra.mxu0 %v3215
        %3274 = vmatprep.subr.mxu0 0.0
        %3275 = vmatpush1.msra.mxu0 %v3216
        %3276 = vmatprep.subr.mxu0 0.0
        %3277 = vmatpush1.msra.mxu0 %v3217
        %3278 = vmatprep.subr.mxu0 0.0
        %3279 = vmatpush1.msra.mxu0 %v3218
        %3280 = vmatprep.subr.mxu0 0.0
        %3281 = vmatpush1.msra.mxu0 %v3219
        %3282 = vmatprep.subr.mxu0 0.0
        %3283 = vmatpush1.msra.mxu0 %v3220
        %3284 = vmatprep.subr.mxu0 0.0
        %3285 = vmatpush1.msra.mxu0 %v3221
        %3286 = vmatprep.subr.mxu0 0.0
        %3287 = vmatpush1.msra.mxu0 %v3222
        %3288 = vmatprep.subr.mxu0 0.0
        %3289 = vmatpush1.msra.mxu0 %v3223
        %3290 = vmatprep.subr.mxu0 0.0
        %3291 = vmatpush1.msra.mxu0 %v3224
        %3292 = vmatprep.subr.mxu0 0.0
        %3293 = vmatpush1.msra.mxu0 %v3225
        %3294 = vmatprep.subr.mxu0 0.0
        %3295 = vmatpush1.msra.mxu0 %v3226
        %3296 = vmatprep.subr.mxu0 0.0
        %3297 = vmatpush1.msra.mxu0 %v3227
        %3298 = vmatprep.subr.mxu0 0.0
        %3299 = vmatpush1.msra.mxu0 %v3228
        %3300 = vmatprep.subr.mxu0 0.0
        %3301 = vmatpush1.msra.mxu0 %v3229
        %3302 = vmatprep.subr.mxu0 0.0
        %3303 = vmatpush1.msra.mxu0 %v3230
        %3304 = vmatprep.subr.mxu0 0.0
        %3305 = vmatpush1.msra.mxu0 %v3231
        %3306 = vmatprep.subr.mxu0 0.0
        %3307 = vmatpush1.msra.mxu0 %v3232
        %3308 = vmatprep.subr.mxu0 0.0
        %3309 = vmatpush1.msra.mxu0 %v3233
        %3310 = vmatprep.subr.mxu0 0.0
        %3311 = vmatpush1.msra.mxu0 %v3234
        %3312 = vmatprep.subr.mxu0 0.0
        %3313 = vmatpush1.msra.mxu0 %v3235
        %3314 = vmatprep.subr.mxu0 0.0
        %3315 = vmatpush1.msra.mxu0 %v3236
        %3316 = vmatprep.subr.mxu0 0.0
        %3317 = vmatpush1.msra.mxu0 %v3237
        %3318 = vmatprep.subr.mxu0 0.0
        %3319 = vmatpush1.msra.mxu0 %v3238
        %3320 = vmatprep.subr.mxu0 0.0
        %3321 = vmatpush1.msra.mxu0 %v3239
        %3322 = vmatprep.subr.mxu0 0.0
        %3323 = vmatpush1.msra.mxu0 %v3240
        %3324 = vmatprep.subr.mxu0 0.0
        %3325 = vmatpush1.msra.mxu0 %v3241
        %3326 = vmatprep.subr.mxu0 0.0
        %3327 = vmatpush1.msra.mxu0 %v3242
        %3328 = vmatprep.subr.mxu0 0.0
        %3329 = vmatpush1.msra.mxu0 %v3243
        %3330 = vmatprep.subr.mxu0 0.0
        %3331 = vmatpush1.msra.mxu0 %v3244
        %3332 = vmatprep.mubr.f32.mxu0 %v3207
        %3333 = vmatmul.mubr.f32.gmra.mrb[0].mxu0 %v3203
        %v3334 = vpop.f32.mrb[0].mxu0
        %v3335 = vadd.f32 %v3266, %v3334
        %v3336 = vpop.f32.mrb[0].mxu0
        %3337 = vdwg.mxu0
        %3338 = vmatprep.subr.mxu0 0.0
        %3339 = vmatpush1.msra.mxu0 %v3245
        %3340 = vmatprep.subr.mxu0 0.0
        %3341 = vmatpush1.msra.mxu0 %v3246
        %3342 = vmatprep.subr.mxu0 0.0
        %3343 = vmatpush1.msra.mxu0 %v3247
        %3344 = vmatprep.subr.mxu0 0.0
        %3345 = vmatpush1.msra.mxu0 %v3248
        %3346 = vmatprep.subr.mxu0 0.0
        %3347 = vmatpush1.msra.mxu0 %v3249
        %3348 = vmatprep.subr.mxu0 0.0
        %3349 = vmatpush1.msra.mxu0 %v3250
        %3350 = vmatprep.subr.mxu0 0.0
        %3351 = vmatpush1.msra.mxu0 %v3251
        %3352 = vmatprep.subr.mxu0 0.0
        %3353 = vmatpush1.msra.mxu0 %v3252
        %3354 = vmatprep.subr.mxu0 0.0
        %3355 = vmatpush1.msra.mxu0 %v3253
        %3356 = vmatprep.subr.mxu0 0.0
        %3357 = vmatpush1.msra.mxu0 %v3254
        %3358 = vmatprep.subr.mxu0 0.0
        %3359 = vmatpush1.msra.mxu0 %v3255
        %3360 = vmatprep.subr.mxu0 0.0
        %3361 = vmatpush1.msra.mxu0 %v3256
        %3362 = vmatprep.subr.mxu0 0.0
        %3363 = vmatpush1.msra.mxu0 %v3257
        %3364 = vmatprep.subr.mxu0 0.0
        %3365 = vmatpush1.msra.mxu0 %v3258
        %3366 = vmatprep.subr.mxu0 0.0
        %3367 = vmatpush1.msra.mxu0 %v3259
        %3368 = vmatprep.subr.mxu0 0.0
        %3369 = vmatpush1.msra.mxu0 %v3260
        %3370 = vmatprep.subr.mxu0 0.0
        %3371 = vmatpush1.msra.mxu0 0.0
        %3372 = vmatprep.subr.mxu0 0.0
        %3373 = vmatpush1.msra.mxu0 0.0
        %3374 = vmatprep.subr.mxu0 0.0
        %3375 = vmatpush1.msra.mxu0 0.0
        %3376 = vmatprep.subr.mxu0 0.0
        %3377 = vmatpush1.msra.mxu0 0.0
        %3378 = vmatprep.subr.mxu0 0.0
        %3379 = vmatpush1.msra.mxu0 0.0
        %3380 = vmatprep.subr.mxu0 0.0
        %3381 = vmatpush1.msra.mxu0 0.0
        %3382 = vmatprep.subr.mxu0 0.0
        %3383 = vmatpush1.msra.mxu0 0.0
        %3384 = vmatprep.subr.mxu0 0.0
        %3385 = vmatpush1.msra.mxu0 0.0
        %3386 = vmatprep.subr.mxu0 0.0
        %3387 = vmatpush1.msra.mxu0 0.0
        %3388 = vmatprep.subr.mxu0 0.0
        %3389 = vmatpush1.msra.mxu0 0.0
        %3390 = vmatprep.subr.mxu0 0.0
        %3391 = vmatpush1.msra.mxu0 0.0
        %3392 = vmatprep.subr.mxu0 0.0
        %3393 = vmatpush1.msra.mxu0 0.0
        %3394 = vmatprep.subr.mxu0 0.0
        %3395 = vmatpush1.msra.mxu0 0.0
        %3396 = vmatprep.subr.mxu0 0.0
        %3397 = vmatpush1.msra.mxu0 0.0
        %3398 = vmatprep.subr.mxu0 0.0
        %3399 = vmatpush1.msra.mxu0 0.0
        %3400 = vmatprep.subr.mxu0 0.0
        %3401 = vmatpush1.msra.mxu0 0.0
        %3402 = vmatprep.mubr.f32.mxu0 0.0
        %3403 = vmatmul.mubr.f32.gmra.mrb[0].mxu0 %v3211
        %v3404 = vpop.f32.mrb[0].mxu0
        %v3405 = vadd.f32 %v3335, %v3404
        %v3406 = vpop.f32.mrb[0].mxu0
        %3407 = vdwg.mxu0
        %3408 = vst [vmem:[%s525] sm:$0x3] %v3405
        %p3409 = scmp.lt.s32.totalorder %s28, 2
        %s3410 = scalar_select %p3409, %s28, 2
        %s3411 = smul.addr %s3410, 2
        %s3412 = scalar_lea.vmem %s8, %s3411
        // Predicated region
        $region73: #{ensemble_forward.1} parent=51 // pred_check
          %p3413 = pneg %p254
        $region74: #{ensemble_forward.1} parent=51 // pred_check_branch
          %3415 = sbr.rel (%p3413) target = $region76
        $region75: #{ensemble_forward.1} parent=51 // pred_region
          _
        $region76: #{ensemble_forward.1} parent=51 // pred_fallthru
          _
      $region52: #{ensemble_forward.1} parent=5 // pred_fallthru
        _
      %p3416 = scmp.le.s32.totalorder 2, %s23
      // Predicated region
      $region77: #{ensemble_forward.1} parent=5 // pred_check
        %p3417 = pneg %p3416
      $region78: #{ensemble_forward.1} parent=5 // pred_check_branch
        %3419 = sbr.rel (%p3417) target = $region80
      $region79: #{ensemble_forward.1} parent=5 // pred_region
        %s3420 = ssub.s32 %s23, 2
        // Predicated region
        $region81: #{ensemble_forward.1} parent=79 // pred_check
          %p3421 = pneg %p260
        $region82: #{ensemble_forward.1} parent=79 // pred_check_branch
          %3423 = sbr.rel (%p3421) target = $region84
        $region83: #{ensemble_forward.1} parent=79 // pred_region
          %p3424 = scmp.lt.s32.totalorder %s29, 2
          %s3425 = scalar_select %p3424, %s29, 2
          %s3426 = smul.addr %s3425, 2
          %s3427 = scalar_lea.vmem %s8, %s3426
        $region84: #{ensemble_forward.1} parent=79 // pred_fallthru
          _
      $region80: #{ensemble_forward.1} parent=5 // pred_fallthru
        _
    $region6: #{ensemble_forward.1} parent=1 // loop_footer
      %s27 = sadd.s32 1, %s23
    $region7: #{ensemble_forward.1} parent=1 // loop_footer_branch
      %22 = sbr.rel target = $region3
    $region8: #{ensemble_forward.1} parent=1 // loop_exit
      _
    %3428 = vsyncpa [#allocation3], 1
    %s3429 = scalar_lea.sflag [#allocation3], 1
    %3430 = vsyncpa %s3429, 1
    %3431 = vsyncpa [#allocation5], 1
    %s3432 = scalar_lea.sflag [#allocation5], 1
    %3433 = vsyncpa %s3432, 1
    %3434 = vsyncpa [#allocation8], 1
    %s3435 = scalar_lea.sflag [#allocation8], 1
    %3436 = vsyncpa %s3435, 1

</llo_original>
